<compile_context>
chip_gen: v5e
topology: v5e:2x2
jax: 0.10.0
libtpu: 0.0.40
codegen_flags: <defaults>
</compile_context>

<pallas_src>
import functools

import jax
import jax.numpy as jnp
import numpy as np
from jax import lax
from jax.experimental import pallas as pl
from jax.experimental.pallas import tpu as pltpu


# ---------------------------------------------------------------------------
# Helpers
# ---------------------------------------------------------------------------
def _round_up(n, m):
    return ((n + m - 1) // m) * m


def _pack_gates(w, h, h_pad):
    """w: (rows, 4h) with PyTorch gate blocks [i, f, g, o] along the last axis.
    Returns (rows, 4*h_pad) repacked as [i, f, o, g], each block zero-padded to
    h_pad columns (so the three sigmoid gates form one contiguous 3*h_pad slab)."""
    i_b, f_b, g_b, o_b = jnp.split(w, 4, axis=-1)
    blocks = [i_b, f_b, o_b, g_b]          # sigmoid, sigmoid, sigmoid, tanh
    return jnp.concatenate(
        [jnp.pad(b, ((0, 0), (0, h_pad - h))) for b in blocks], axis=-1)


# ---------------------------------------------------------------------------
# Fused Pallas kernel
# ---------------------------------------------------------------------------
def _make_fused_kernel(num_layers, seq_len, b_pad, h_pad, unroll):
    """Kernel refs (in order):
       x2d, [w_ih_t, w_hh_t, bias] * num_layers, w_fc_t, b_fc,   (inputs)
       out,                                                       (output)
       gates_scr, hseq_scr                                        (VMEM scratch)
    """

    def kernel(*refs):
        x_ref = refs[0]
        w_refs = refs[1:1 + 3 * num_layers]
        wfc_ref = refs[1 + 3 * num_layers]
        bfc_ref = refs[2 + 3 * num_layers]
        out_ref = refs[3 + 3 * num_layers]
        gates_scr = refs[4 + 3 * num_layers]   # (T*B, 4H) pre-activations
        hseq_scr = refs[5 + 3 * num_layers]    # (T*B, H) hidden seq of current layer

        h_last = None
        for layer in range(num_layers):
            wih_ref = w_refs[3 * layer + 0]
            whh_ref = w_refs[3 * layer + 1]
            b_ref = w_refs[3 * layer + 2]
            is_last_layer = layer == num_layers - 1

            # --- Hoisted input projection: all timesteps in ONE MXU matmul,
            #     bias broadcast added once (outside the recurrence loop). ---
            layer_in = x_ref[...] if layer == 0 else hseq_scr[...]
            gates_scr[...] = (
                jnp.dot(layer_in, wih_ref[...], preferred_element_type=jnp.float32)
                + b_ref[...]
            )

            # --- Sequential recurrence; h/c live in vregs (fori_loop carry),
            #     only h_new spills to VMEM (and only when a next layer reads it). ---
            def step(t, carry, _is_last=is_last_layer, _whh_ref=whh_ref):
                h_prev, c_prev = carry
                row = pl.multiple_of(t * b_pad, b_pad)        # sublane-aligned
                g = gates_scr[pl.ds(row, b_pad), :] + jnp.dot(
                    h_prev, _whh_ref[...],
                    preferred_element_type=jnp.float32)
                # Packed gate order [i, f, o, g]: one contiguous sigmoid slab + tanh.
                ifo = jax.nn.sigmoid(g[:, 0:3 * h_pad])
                g_g = jnp.tanh(g[:, 3 * h_pad:4 * h_pad])
                i_g = ifo[:, 0 * h_pad:1 * h_pad]
                f_g = ifo[:, 1 * h_pad:2 * h_pad]
                o_g = ifo[:, 2 * h_pad:3 * h_pad]
                c_new = f_g * c_prev + i_g * g_g
                h_new = o_g * jnp.tanh(c_new)
                if not _is_last:
                    hseq_scr[pl.ds(row, b_pad), :] = h_new
                return (h_new, c_new)

            init = (jnp.zeros((b_pad, h_pad), jnp.float32),
                    jnp.zeros((b_pad, h_pad), jnp.float32))
            h_last, _ = lax.fori_loop(0, seq_len, step, init, unroll=unroll)

        # --- Fused FC head on h_{T-1} of the last layer (lane-dense output). ---
        out_ref[...] = (
            jnp.dot(h_last, wfc_ref[...], preferred_element_type=jnp.float32)
            + bfc_ref[...]
        )

    return kernel


# ---------------------------------------------------------------------------
# Parameters (PyTorch-style init, pre-transposed + pre-padded + gate-repacked)
# ---------------------------------------------------------------------------
def init_params(key, input_size, hidden_size, num_layers, num_classes,
                lane=128):
    """uniform(-1/sqrt(H), 1/sqrt(H)) init (PyTorch default), stored transposed,
    zero-padded to lane/sublane friendly shapes, gates repacked to [i, f, o, g]."""
    H = hidden_size
    H_pad = _round_up(H, lane)
    D_pad = _round_up(input_size, lane)
    C_pad = _round_up(num_classes, lane)
    k = 1.0 / (hidden_size ** 0.5)

    params = {"lstm": [], "fc": None}
    for layer in range(num_layers):
        d_in = input_size if layer == 0 else hidden_size
        d_in_pad = D_pad if layer == 0 else H_pad
        key, k1, k2, k3, k4 = jax.random.split(key, 5)
        w_ih = jax.random.uniform(k1, (4 * H, d_in), jnp.float32, -k, k)
        w_hh = jax.random.uniform(k2, (4 * H, H), jnp.float32, -k, k)
        b_ih = jax.random.uniform(k3, (4 * H,), jnp.float32, -k, k)
        b_hh = jax.random.uniform(k4, (4 * H,), jnp.float32, -k, k)

        w_ih_t = _pack_gates(w_ih.T, H, H_pad)                       # (d_in, 4*H_pad)
        w_ih_t = jnp.pad(w_ih_t, ((0, d_in_pad - d_in), (0, 0)))     # (d_in_pad, 4*H_pad)
        w_hh_t = _pack_gates(w_hh.T, H, H_pad)
        w_hh_t = jnp.pad(w_hh_t, ((0, H_pad - H), (0, 0)))           # (H_pad, 4*H_pad)
        bias = _pack_gates((b_ih + b_hh).reshape(1, 4 * H), H, H_pad)  # (1, 4*H_pad)

        params["lstm"].append({"w_ih_t": w_ih_t, "w_hh_t": w_hh_t, "bias": bias})

    key, k5, k6 = jax.random.split(key, 3)
    w_fc = jax.random.uniform(k5, (num_classes, hidden_size), jnp.float32, -k, k)
    b_fc = jax.random.uniform(k6, (num_classes,), jnp.float32, -k, k)
    params["fc"] = {
        "w_t": jnp.pad(w_fc.T, ((0, H_pad - H), (0, C_pad - num_classes))),  # (H_pad, C_pad)
        "b": jnp.pad(b_fc.reshape(1, num_classes),
                     ((0, 0), (0, C_pad - num_classes))),                    # (1, C_pad)
    }
    return params


# ---------------------------------------------------------------------------
# Forward
# ---------------------------------------------------------------------------
@functools.partial(jax.jit, static_argnames=("num_classes",))
def lstm_forward(params, x, *, num_classes):
    """x: (B, T, input_size) batch-first (PyTorch convention) -> (B, num_classes)."""
    B, T, D_in = x.shape
    lstm_p = params["lstm"]
    num_layers = len(lstm_p)
    H_pad, G_pad = lstm_p[0]["w_hh_t"].shape
    D_pad = lstm_p[0]["w_ih_t"].shape[0]
    C_pad = params["fc"]["w_t"].shape[1]
    B_pad = _round_up(max(B, 8), 8)

    # Batch-first -> time-major, pad batch (sublanes) and features (lanes),
    # flatten time into the matmul M dimension: row t*B_pad + b == (t, b).
    # TODO(synk): for long sequences, produce x time-major/padded upstream (or feed
    #             per-time-chunk tiles via an index_map) to avoid this extra HBM pass.
    x_tm = jnp.transpose(x, (1, 0, 2)).astype(jnp.float32)
    x_tm = jnp.pad(x_tm, ((0, 0), (0, B_pad - B), (0, D_pad - D_in)))
    x2d = x_tm.reshape(T * B_pad, D_pad)

    def _full_spec(shape):
        return pl.BlockSpec(shape, lambda i: (0,) * len(shape))

    inputs = [x2d]
    in_specs = [_full_spec(x2d.shape)]
    for lp in lstm_p:
        for name in ("w_ih_t", "w_hh_t", "bias"):
            inputs.append(lp[name])
            in_specs.append(_full_spec(lp[name].shape))
    for name in ("w_t", "b"):
        inputs.append(params["fc"][name])
        in_specs.append(_full_spec(params["fc"][name].shape))

    kernel = _make_fused_kernel(num_layers=num_layers, seq_len=T,
                                b_pad=B_pad, h_pad=H_pad,
                                unroll=min(T, 8))

    # Explicit scoped-VMEM budget (tightest default is v5e's 16 MiB): double-buffered
    # inputs/outputs + scratch, with headroom.
    in_bytes = sum(int(np.prod(a.shape)) * a.dtype.itemsize for a in inputs)
    out_bytes = B_pad * C_pad * 4
    scratch_bytes = T * B_pad * (G_pad + H_pad) * 4
    vmem_limit = min(128 * 1024 * 1024,
                     2 * (in_bytes + out_bytes) + scratch_bytes + (4 << 20))

    out_pad = pl.pallas_call(
        kernel,
        out_shape=jax.ShapeDtypeStruct((B_pad, C_pad), jnp.float32),
        grid_spec=pltpu.PrefetchScalarGridSpec(
            num_scalar_prefetch=0,
            grid=(1,),
            in_specs=in_specs,
            out_specs=pl.BlockSpec((B_pad, C_pad), lambda i: (0, 0)),
            scratch_shapes=[
                pltpu.VMEM((T * B_pad, G_pad), jnp.float32),  # hoisted input projections
                pltpu.VMEM((T * B_pad, H_pad), jnp.float32),  # hidden seq of current layer
            ],
        ),
        compiler_params=pltpu.CompilerParams(
            dimension_semantics=("arbitrary",),
            vmem_limit_bytes=int(vmem_limit),
        ),
    )(*inputs)

    return out_pad[:B, :num_classes]


# ---------------------------------------------------------------------------
# Pure-JAX reference (same padded/repacked params; padding is semantically neutral)
# ---------------------------------------------------------------------------
def _reference_forward(params, x, num_classes):
    hi = jax.lax.Precision.HIGHEST
    B, T, D_in = x.shape
    D_pad = params["lstm"][0]["w_ih_t"].shape[0]
    H_pad = params["lstm"][0]["w_hh_t"].shape[0]
    h_in = jnp.pad(x.astype(jnp.float32), ((0, 0), (0, 0), (0, D_pad - D_in)))
    h = None
    for lp in params["lstm"]:
        h = jnp.zeros((B, H_pad), jnp.float32)
        c = jnp.zeros((B, H_pad), jnp.float32)
        outs = []
        for t in range(T):
            g = (jnp.dot(h_in[:, t, :], lp["w_ih_t"], precision=hi)
                 + jnp.dot(h, lp["w_hh_t"], precision=hi) + lp["bias"])
            # Packed gate order [i, f, o, g].
            i_g = jax.nn.sigmoid(g[:, 0 * H_pad:1 * H_pad])
            f_g = jax.nn.sigmoid(g[:, 1 * H_pad:2 * H_pad])
            o_g = jax.nn.sigmoid(g[:, 2 * H_pad:3 * H_pad])
            g_g = jnp.tanh(g[:, 3 * H_pad:4 * H_pad])
            c = f_g * c + i_g * g_g
            h = o_g * jnp.tanh(c)
            outs.append(h)
        h_in = jnp.stack(outs, axis=1)
    out = jnp.dot(h, params["fc"]["w_t"], precision=hi) + params["fc"]["b"]
    return out[:, :num_classes]


if __name__ == "__main__":
    # Small shapes consistent with the module's forward.
    batch, seq_len, input_size = 2, 8, 16
    hidden_size, num_layers, num_classes = 32, 2, 4

    key = jax.random.PRNGKey(0)
    key, k_x, k_p = jax.random.split(key, 3)
    x = jax.random.normal(k_x, (batch, seq_len, input_size), dtype=jnp.float32)
    params = init_params(k_p, input_size, hidden_size, num_layers, num_classes)

    out = lstm_forward(params, x, num_classes=num_classes)
    jax.block_until_ready(out)
    assert out.shape == (batch, num_classes)

    ref = _reference_forward(params, x, num_classes)
    np.testing.assert_allclose(np.asarray(out), np.asarray(ref), rtol=1e-2, atol=1e-2)

    print("KERNEL_OK")
</pallas_src>

<mosaic_0001>
module attributes {stable_mosaic.version = 11 : i64} {
  func.func @kernel(%arg0: i32, %arg1: memref<64x128xf32, #tpu.memory_space<vmem>>, %arg2: memref<128x512xf32, #tpu.memory_space<vmem>>, %arg3: memref<128x512xf32, #tpu.memory_space<vmem>>, %arg4: memref<1x512xf32, #tpu.memory_space<vmem>>, %arg5: memref<128x512xf32, #tpu.memory_space<vmem>>, %arg6: memref<128x512xf32, #tpu.memory_space<vmem>>, %arg7: memref<1x512xf32, #tpu.memory_space<vmem>>, %arg8: memref<128x128xf32, #tpu.memory_space<vmem>>, %arg9: memref<1x128xf32, #tpu.memory_space<vmem>>, %arg10: memref<8x128xf32, #tpu.memory_space<vmem>>, %arg11: memref<64x512xf32, #tpu.memory_space<vmem>>, %arg12: memref<64x128xf32, #tpu.memory_space<vmem>>) attributes {dimension_semantics = [#tpu.dimension_semantics<arbitrary>], iteration_bounds = array<i64: 1>, scalar_prefetch = 0 : i64, scratch_operands = 2 : i64, tpu.core_type = #tpu.core_type<tc>, window_params = [{pipeline_mode = #tpu.pipeline_mode<synchronous>, transform_indices = @transform_0, window_bounds = array<i64: 64, 128>}, {pipeline_mode = #tpu.pipeline_mode<synchronous>, transform_indices = @transform_1, window_bounds = array<i64: 128, 512>}, {pipeline_mode = #tpu.pipeline_mode<synchronous>, transform_indices = @transform_2, window_bounds = array<i64: 128, 512>}, {pipeline_mode = #tpu.pipeline_mode<synchronous>, transform_indices = @transform_3, window_bounds = array<i64: 1, 512>}, {pipeline_mode = #tpu.pipeline_mode<synchronous>, transform_indices = @transform_4, window_bounds = array<i64: 128, 512>}, {pipeline_mode = #tpu.pipeline_mode<synchronous>, transform_indices = @transform_5, window_bounds = array<i64: 128, 512>}, {pipeline_mode = #tpu.pipeline_mode<synchronous>, transform_indices = @transform_6, window_bounds = array<i64: 1, 512>}, {pipeline_mode = #tpu.pipeline_mode<synchronous>, transform_indices = @transform_7, window_bounds = array<i64: 128, 128>}, {pipeline_mode = #tpu.pipeline_mode<synchronous>, transform_indices = @transform_8, window_bounds = array<i64: 1, 128>}, {pipeline_mode = #tpu.pipeline_mode<synchronous>, transform_indices = @transform_9, window_bounds = array<i64: 8, 128>}]} {
    %c0 = arith.constant 0 : index
    %c0_0 = arith.constant 0 : index
    %0 = vector.load %arg1[%c0, %c0_0] : memref<64x128xf32, #tpu.memory_space<vmem>>, vector<64x128xf32>
    %c0_1 = arith.constant 0 : index
    %c0_2 = arith.constant 0 : index
    %1 = vector.load %arg2[%c0_1, %c0_2] : memref<128x512xf32, #tpu.memory_space<vmem>>, vector<128x512xf32>
    %cst = arith.constant dense<0.000000e+00> : vector<64x512xf32>
    %2 = tpu.matmul %0, %1, %cst {dimension_numbers = #tpu.dot_dimension_numbers<[1], [0], [0], [1], [0, 0, 1, 1], [], []>} : vector<64x128xf32>, vector<128x512xf32>, vector<64x512xf32> -> vector<64x512xf32>
    %c0_3 = arith.constant 0 : index
    %c0_4 = arith.constant 0 : index
    %3 = vector.load %arg4[%c0_3, %c0_4] : memref<1x512xf32, #tpu.memory_space<vmem>>, vector<1x512xf32>
    %4 = vector.broadcast %3 : vector<1x512xf32> to vector<64x512xf32>
    %5 = arith.addf %2, %4 : vector<64x512xf32>
    %c0_5 = arith.constant 0 : index
    %c0_6 = arith.constant 0 : index
    %6 = vector.load %arg11[%c0_5, %c0_6] : memref<64x512xf32, #tpu.memory_space<vmem>>, vector<64x512xf32>
    tpu.vector_store %arg11[%c0_5, %c0_6], %5 {strides = array<i32>} : memref<64x512xf32, #tpu.memory_space<vmem>>, vector<64x512xf32>,
    %cst_7 = arith.constant 0.000000e+00 : f32
    %7 = vector.broadcast %cst_7 : f32 to vector<8x128xf32>
    %cst_8 = arith.constant 0.000000e+00 : f32
    %8 = vector.broadcast %cst_8 : f32 to vector<8x128xf32>
    %c0_i32 = arith.constant 0 : i32
    %c8_i32 = arith.constant 8 : i32
    %9 = arith.muli %c0_i32, %c8_i32 : i32
    %10 = tpu.assume_multiple %9, 8 : i32
    %11 = arith.index_cast %10 : i32 to index
    %c0_9 = arith.constant 0 : index
    %12 = vector.load %arg11[%11, %c0_9] : memref<64x512xf32, #tpu.memory_space<vmem>>, vector<8x512xf32>
    %c0_10 = arith.constant 0 : index
    %c0_11 = arith.constant 0 : index
    %13 = vector.load %arg3[%c0_10, %c0_11] : memref<128x512xf32, #tpu.memory_space<vmem>>, vector<128x512xf32>
    %cst_12 = arith.constant dense<0.000000e+00> : vector<8x512xf32>
    %14 = tpu.matmul %7, %13, %cst_12 {dimension_numbers = #tpu.dot_dimension_numbers<[1], [0], [0], [1], [0, 0, 1, 1], [], []>} : vector<8x128xf32>, vector<128x512xf32>, vector<8x512xf32> -> vector<8x512xf32>
    %15 = arith.addf %12, %14 : vector<8x512xf32>
    %16 = vector.extract_strided_slice %15 {offsets = [0, 0], sizes = [8, 384], strides = [1, 1]} : vector<8x512xf32> to vector<8x384xf32>
    %17 = arith.negf %16 : vector<8x384xf32>
    %18 = math.exp %17 : vector<8x384xf32>
    %cst_13 = arith.constant 1.000000e+00 : f32
    %19 = vector.broadcast %cst_13 : f32 to vector<8x384xf32>
    %20 = arith.addf %19, %18 : vector<8x384xf32>
    %21 = arith.divf %19, %20 : vector<8x384xf32>
    %22 = vector.extract_strided_slice %15 {offsets = [0, 384], sizes = [8, 128], strides = [1, 1]} : vector<8x512xf32> to vector<8x128xf32>
    %23 = math.tanh %22 : vector<8x128xf32>
    %24 = vector.extract_strided_slice %21 {offsets = [0, 0], sizes = [8, 128], strides = [1, 1]} : vector<8x384xf32> to vector<8x128xf32>
    %25 = vector.extract_strided_slice %21 {offsets = [0, 128], sizes = [8, 128], strides = [1, 1]} : vector<8x384xf32> to vector<8x128xf32>
    %26 = vector.extract_strided_slice %21 {offsets = [0, 256], sizes = [8, 128], strides = [1, 1]} : vector<8x384xf32> to vector<8x128xf32>
    %27 = arith.mulf %25, %8 : vector<8x128xf32>
    %28 = arith.mulf %24, %23 : vector<8x128xf32>
    %29 = arith.addf %27, %28 : vector<8x128xf32>
    %30 = math.tanh %29 : vector<8x128xf32>
    %31 = arith.mulf %26, %30 : vector<8x128xf32>
    %32 = arith.index_cast %10 : i32 to index
    %c0_14 = arith.constant 0 : index
    %33 = vector.load %arg12[%32, %c0_14] : memref<64x128xf32, #tpu.memory_space<vmem>>, vector<8x128xf32>
    tpu.vector_store %arg12[%32, %c0_14], %31 {strides = array<i32>} : memref<64x128xf32, #tpu.memory_space<vmem>>, vector<8x128xf32>,
    %c1_i32 = arith.constant 1 : i32
    %c8_i32_15 = arith.constant 8 : i32
    %34 = arith.muli %c1_i32, %c8_i32_15 : i32
    %35 = tpu.assume_multiple %34, 8 : i32
    %36 = arith.index_cast %35 : i32 to index
    %c0_16 = arith.constant 0 : index
    %37 = vector.load %arg11[%36, %c0_16] : memref<64x512xf32, #tpu.memory_space<vmem>>, vector<8x512xf32>
    %c0_17 = arith.constant 0 : index
    %c0_18 = arith.constant 0 : index
    %38 = vector.load %arg3[%c0_17, %c0_18] : memref<128x512xf32, #tpu.memory_space<vmem>>, vector<128x512xf32>
    %cst_19 = arith.constant dense<0.000000e+00> : vector<8x512xf32>
    %39 = tpu.matmul %31, %38, %cst_19 {dimension_numbers = #tpu.dot_dimension_numbers<[1], [0], [0], [1], [0, 0, 1, 1], [], []>} : vector<8x128xf32>, vector<128x512xf32>, vector<8x512xf32> -> vector<8x512xf32>
    %40 = arith.addf %37, %39 : vector<8x512xf32>
    %41 = vector.extract_strided_slice %40 {offsets = [0, 0], sizes = [8, 384], strides = [1, 1]} : vector<8x512xf32> to vector<8x384xf32>
    %42 = arith.negf %41 : vector<8x384xf32>
    %43 = math.exp %42 : vector<8x384xf32>
    %cst_20 = arith.constant 1.000000e+00 : f32
    %44 = vector.broadcast %cst_20 : f32 to vector<8x384xf32>
    %45 = arith.addf %44, %43 : vector<8x384xf32>
    %46 = arith.divf %44, %45 : vector<8x384xf32>
    %47 = vector.extract_strided_slice %40 {offsets = [0, 384], sizes = [8, 128], strides = [1, 1]} : vector<8x512xf32> to vector<8x128xf32>
    %48 = math.tanh %47 : vector<8x128xf32>
    %49 = vector.extract_strided_slice %46 {offsets = [0, 0], sizes = [8, 128], strides = [1, 1]} : vector<8x384xf32> to vector<8x128xf32>
    %50 = vector.extract_strided_slice %46 {offsets = [0, 128], sizes = [8, 128], strides = [1, 1]} : vector<8x384xf32> to vector<8x128xf32>
    %51 = vector.extract_strided_slice %46 {offsets = [0, 256], sizes = [8, 128], strides = [1, 1]} : vector<8x384xf32> to vector<8x128xf32>
    %52 = arith.mulf %50, %29 : vector<8x128xf32>
    %53 = arith.mulf %49, %48 : vector<8x128xf32>
    %54 = arith.addf %52, %53 : vector<8x128xf32>
    %55 = math.tanh %54 : vector<8x128xf32>
    %56 = arith.mulf %51, %55 : vector<8x128xf32>
    %57 = arith.index_cast %35 : i32 to index
    %c0_21 = arith.constant 0 : index
    %58 = vector.load %arg12[%57, %c0_21] : memref<64x128xf32, #tpu.memory_space<vmem>>, vector<8x128xf32>
    tpu.vector_store %arg12[%57, %c0_21], %56 {strides = array<i32>} : memref<64x128xf32, #tpu.memory_space<vmem>>, vector<8x128xf32>,
    %c2_i32 = arith.constant 2 : i32
    %c8_i32_22 = arith.constant 8 : i32
    %59 = arith.muli %c2_i32, %c8_i32_22 : i32
    %60 = tpu.assume_multiple %59, 8 : i32
    %61 = arith.index_cast %60 : i32 to index
    %c0_23 = arith.constant 0 : index
    %62 = vector.load %arg11[%61, %c0_23] : memref<64x512xf32, #tpu.memory_space<vmem>>, vector<8x512xf32>
    %c0_24 = arith.constant 0 : index
    %c0_25 = arith.constant 0 : index
    %63 = vector.load %arg3[%c0_24, %c0_25] : memref<128x512xf32, #tpu.memory_space<vmem>>, vector<128x512xf32>
    %cst_26 = arith.constant dense<0.000000e+00> : vector<8x512xf32>
    %64 = tpu.matmul %56, %63, %cst_26 {dimension_numbers = #tpu.dot_dimension_numbers<[1], [0], [0], [1], [0, 0, 1, 1], [], []>} : vector<8x128xf32>, vector<128x512xf32>, vector<8x512xf32> -> vector<8x512xf32>
    %65 = arith.addf %62, %64 : vector<8x512xf32>
    %66 = vector.extract_strided_slice %65 {offsets = [0, 0], sizes = [8, 384], strides = [1, 1]} : vector<8x512xf32> to vector<8x384xf32>
    %67 = arith.negf %66 : vector<8x384xf32>
    %68 = math.exp %67 : vector<8x384xf32>
    %cst_27 = arith.constant 1.000000e+00 : f32
    %69 = vector.broadcast %cst_27 : f32 to vector<8x384xf32>
    %70 = arith.addf %69, %68 : vector<8x384xf32>
    %71 = arith.divf %69, %70 : vector<8x384xf32>
    %72 = vector.extract_strided_slice %65 {offsets = [0, 384], sizes = [8, 128], strides = [1, 1]} : vector<8x512xf32> to vector<8x128xf32>
    %73 = math.tanh %72 : vector<8x128xf32>
    %74 = vector.extract_strided_slice %71 {offsets = [0, 0], sizes = [8, 128], strides = [1, 1]} : vector<8x384xf32> to vector<8x128xf32>
    %75 = vector.extract_strided_slice %71 {offsets = [0, 128], sizes = [8, 128], strides = [1, 1]} : vector<8x384xf32> to vector<8x128xf32>
    %76 = vector.extract_strided_slice %71 {offsets = [0, 256], sizes = [8, 128], strides = [1, 1]} : vector<8x384xf32> to vector<8x128xf32>
    %77 = arith.mulf %75, %54 : vector<8x128xf32>
    %78 = arith.mulf %74, %73 : vector<8x128xf32>
    %79 = arith.addf %77, %78 : vector<8x128xf32>
    %80 = math.tanh %79 : vector<8x128xf32>
    %81 = arith.mulf %76, %80 : vector<8x128xf32>
    %82 = arith.index_cast %60 : i32 to index
    %c0_28 = arith.constant 0 : index
    %83 = vector.load %arg12[%82, %c0_28] : memref<64x128xf32, #tpu.memory_space<vmem>>, vector<8x128xf32>
    tpu.vector_store %arg12[%82, %c0_28], %81 {strides = array<i32>} : memref<64x128xf32, #tpu.memory_space<vmem>>, vector<8x128xf32>,
    %c3_i32 = arith.constant 3 : i32
    %c8_i32_29 = arith.constant 8 : i32
    %84 = arith.muli %c3_i32, %c8_i32_29 : i32
    %85 = tpu.assume_multiple %84, 8 : i32
    %86 = arith.index_cast %85 : i32 to index
    %c0_30 = arith.constant 0 : index
    %87 = vector.load %arg11[%86, %c0_30] : memref<64x512xf32, #tpu.memory_space<vmem>>, vector<8x512xf32>
    %c0_31 = arith.constant 0 : index
    %c0_32 = arith.constant 0 : index
    %88 = vector.load %arg3[%c0_31, %c0_32] : memref<128x512xf32, #tpu.memory_space<vmem>>, vector<128x512xf32>
    %cst_33 = arith.constant dense<0.000000e+00> : vector<8x512xf32>
    %89 = tpu.matmul %81, %88, %cst_33 {dimension_numbers = #tpu.dot_dimension_numbers<[1], [0], [0], [1], [0, 0, 1, 1], [], []>} : vector<8x128xf32>, vector<128x512xf32>, vector<8x512xf32> -> vector<8x512xf32>
    %90 = arith.addf %87, %89 : vector<8x512xf32>
    %91 = vector.extract_strided_slice %90 {offsets = [0, 0], sizes = [8, 384], strides = [1, 1]} : vector<8x512xf32> to vector<8x384xf32>
    %92 = arith.negf %91 : vector<8x384xf32>
    %93 = math.exp %92 : vector<8x384xf32>
    %cst_34 = arith.constant 1.000000e+00 : f32
    %94 = vector.broadcast %cst_34 : f32 to vector<8x384xf32>
    %95 = arith.addf %94, %93 : vector<8x384xf32>
    %96 = arith.divf %94, %95 : vector<8x384xf32>
    %97 = vector.extract_strided_slice %90 {offsets = [0, 384], sizes = [8, 128], strides = [1, 1]} : vector<8x512xf32> to vector<8x128xf32>
    %98 = math.tanh %97 : vector<8x128xf32>
    %99 = vector.extract_strided_slice %96 {offsets = [0, 0], sizes = [8, 128], strides = [1, 1]} : vector<8x384xf32> to vector<8x128xf32>
    %100 = vector.extract_strided_slice %96 {offsets = [0, 128], sizes = [8, 128], strides = [1, 1]} : vector<8x384xf32> to vector<8x128xf32>
    %101 = vector.extract_strided_slice %96 {offsets = [0, 256], sizes = [8, 128], strides = [1, 1]} : vector<8x384xf32> to vector<8x128xf32>
    %102 = arith.mulf %100, %79 : vector<8x128xf32>
    %103 = arith.mulf %99, %98 : vector<8x128xf32>
    %104 = arith.addf %102, %103 : vector<8x128xf32>
    %105 = math.tanh %104 : vector<8x128xf32>
    %106 = arith.mulf %101, %105 : vector<8x128xf32>
    %107 = arith.index_cast %85 : i32 to index
    %c0_35 = arith.constant 0 : index
    %108 = vector.load %arg12[%107, %c0_35] : memref<64x128xf32, #tpu.memory_space<vmem>>, vector<8x128xf32>
    tpu.vector_store %arg12[%107, %c0_35], %106 {strides = array<i32>} : memref<64x128xf32, #tpu.memory_space<vmem>>, vector<8x128xf32>,
    %c4_i32 = arith.constant 4 : i32
    %c8_i32_36 = arith.constant 8 : i32
    %109 = arith.muli %c4_i32, %c8_i32_36 : i32
    %110 = tpu.assume_multiple %109, 8 : i32
    %111 = arith.index_cast %110 : i32 to index
    %c0_37 = arith.constant 0 : index
    %112 = vector.load %arg11[%111, %c0_37] : memref<64x512xf32, #tpu.memory_space<vmem>>, vector<8x512xf32>
    %c0_38 = arith.constant 0 : index
    %c0_39 = arith.constant 0 : index
    %113 = vector.load %arg3[%c0_38, %c0_39] : memref<128x512xf32, #tpu.memory_space<vmem>>, vector<128x512xf32>
    %cst_40 = arith.constant dense<0.000000e+00> : vector<8x512xf32>
    %114 = tpu.matmul %106, %113, %cst_40 {dimension_numbers = #tpu.dot_dimension_numbers<[1], [0], [0], [1], [0, 0, 1, 1], [], []>} : vector<8x128xf32>, vector<128x512xf32>, vector<8x512xf32> -> vector<8x512xf32>
    %115 = arith.addf %112, %114 : vector<8x512xf32>
    %116 = vector.extract_strided_slice %115 {offsets = [0, 0], sizes = [8, 384], strides = [1, 1]} : vector<8x512xf32> to vector<8x384xf32>
    %117 = arith.negf %116 : vector<8x384xf32>
    %118 = math.exp %117 : vector<8x384xf32>
    %cst_41 = arith.constant 1.000000e+00 : f32
    %119 = vector.broadcast %cst_41 : f32 to vector<8x384xf32>
    %120 = arith.addf %119, %118 : vector<8x384xf32>
    %121 = arith.divf %119, %120 : vector<8x384xf32>
    %122 = vector.extract_strided_slice %115 {offsets = [0, 384], sizes = [8, 128], strides = [1, 1]} : vector<8x512xf32> to vector<8x128xf32>
    %123 = math.tanh %122 : vector<8x128xf32>
    %124 = vector.extract_strided_slice %121 {offsets = [0, 0], sizes = [8, 128], strides = [1, 1]} : vector<8x384xf32> to vector<8x128xf32>
    %125 = vector.extract_strided_slice %121 {offsets = [0, 128], sizes = [8, 128], strides = [1, 1]} : vector<8x384xf32> to vector<8x128xf32>
    %126 = vector.extract_strided_slice %121 {offsets = [0, 256], sizes = [8, 128], strides = [1, 1]} : vector<8x384xf32> to vector<8x128xf32>
    %127 = arith.mulf %125, %104 : vector<8x128xf32>
    %128 = arith.mulf %124, %123 : vector<8x128xf32>
    %129 = arith.addf %127, %128 : vector<8x128xf32>
    %130 = math.tanh %129 : vector<8x128xf32>
    %131 = arith.mulf %126, %130 : vector<8x128xf32>
    %132 = arith.index_cast %110 : i32 to index
    %c0_42 = arith.constant 0 : index
    %133 = vector.load %arg12[%132, %c0_42] : memref<64x128xf32, #tpu.memory_space<vmem>>, vector<8x128xf32>
    tpu.vector_store %arg12[%132, %c0_42], %131 {strides = array<i32>} : memref<64x128xf32, #tpu.memory_space<vmem>>, vector<8x128xf32>,
    %c5_i32 = arith.constant 5 : i32
    %c8_i32_43 = arith.constant 8 : i32
    %134 = arith.muli %c5_i32, %c8_i32_43 : i32
    %135 = tpu.assume_multiple %134, 8 : i32
    %136 = arith.index_cast %135 : i32 to index
    %c0_44 = arith.constant 0 : index
    %137 = vector.load %arg11[%136, %c0_44] : memref<64x512xf32, #tpu.memory_space<vmem>>, vector<8x512xf32>
    %c0_45 = arith.constant 0 : index
    %c0_46 = arith.constant 0 : index
    %138 = vector.load %arg3[%c0_45, %c0_46] : memref<128x512xf32, #tpu.memory_space<vmem>>, vector<128x512xf32>
    %cst_47 = arith.constant dense<0.000000e+00> : vector<8x512xf32>
    %139 = tpu.matmul %131, %138, %cst_47 {dimension_numbers = #tpu.dot_dimension_numbers<[1], [0], [0], [1], [0, 0, 1, 1], [], []>} : vector<8x128xf32>, vector<128x512xf32>, vector<8x512xf32> -> vector<8x512xf32>
    %140 = arith.addf %137, %139 : vector<8x512xf32>
    %141 = vector.extract_strided_slice %140 {offsets = [0, 0], sizes = [8, 384], strides = [1, 1]} : vector<8x512xf32> to vector<8x384xf32>
    %142 = arith.negf %141 : vector<8x384xf32>
    %143 = math.exp %142 : vector<8x384xf32>
    %cst_48 = arith.constant 1.000000e+00 : f32
    %144 = vector.broadcast %cst_48 : f32 to vector<8x384xf32>
    %145 = arith.addf %144, %143 : vector<8x384xf32>
    %146 = arith.divf %144, %145 : vector<8x384xf32>
    %147 = vector.extract_strided_slice %140 {offsets = [0, 384], sizes = [8, 128], strides = [1, 1]} : vector<8x512xf32> to vector<8x128xf32>
    %148 = math.tanh %147 : vector<8x128xf32>
    %149 = vector.extract_strided_slice %146 {offsets = [0, 0], sizes = [8, 128], strides = [1, 1]} : vector<8x384xf32> to vector<8x128xf32>
    %150 = vector.extract_strided_slice %146 {offsets = [0, 128], sizes = [8, 128], strides = [1, 1]} : vector<8x384xf32> to vector<8x128xf32>
    %151 = vector.extract_strided_slice %146 {offsets = [0, 256], sizes = [8, 128], strides = [1, 1]} : vector<8x384xf32> to vector<8x128xf32>
    %152 = arith.mulf %150, %129 : vector<8x128xf32>
    %153 = arith.mulf %149, %148 : vector<8x128xf32>
    %154 = arith.addf %152, %153 : vector<8x128xf32>
    %155 = math.tanh %154 : vector<8x128xf32>
    %156 = arith.mulf %151, %155 : vector<8x128xf32>
    %157 = arith.index_cast %135 : i32 to index
    %c0_49 = arith.constant 0 : index
    %158 = vector.load %arg12[%157, %c0_49] : memref<64x128xf32, #tpu.memory_space<vmem>>, vector<8x128xf32>
    tpu.vector_store %arg12[%157, %c0_49], %156 {strides = array<i32>} : memref<64x128xf32, #tpu.memory_space<vmem>>, vector<8x128xf32>,
    %c6_i32 = arith.constant 6 : i32
    %c8_i32_50 = arith.constant 8 : i32
    %159 = arith.muli %c6_i32, %c8_i32_50 : i32
    %160 = tpu.assume_multiple %159, 8 : i32
    %161 = arith.index_cast %160 : i32 to index
    %c0_51 = arith.constant 0 : index
    %162 = vector.load %arg11[%161, %c0_51] : memref<64x512xf32, #tpu.memory_space<vmem>>, vector<8x512xf32>
    %c0_52 = arith.constant 0 : index
    %c0_53 = arith.constant 0 : index
    %163 = vector.load %arg3[%c0_52, %c0_53] : memref<128x512xf32, #tpu.memory_space<vmem>>, vector<128x512xf32>
    %cst_54 = arith.constant dense<0.000000e+00> : vector<8x512xf32>
    %164 = tpu.matmul %156, %163, %cst_54 {dimension_numbers = #tpu.dot_dimension_numbers<[1], [0], [0], [1], [0, 0, 1, 1], [], []>} : vector<8x128xf32>, vector<128x512xf32>, vector<8x512xf32> -> vector<8x512xf32>
    %165 = arith.addf %162, %164 : vector<8x512xf32>
    %166 = vector.extract_strided_slice %165 {offsets = [0, 0], sizes = [8, 384], strides = [1, 1]} : vector<8x512xf32> to vector<8x384xf32>
    %167 = arith.negf %166 : vector<8x384xf32>
    %168 = math.exp %167 : vector<8x384xf32>
    %cst_55 = arith.constant 1.000000e+00 : f32
    %169 = vector.broadcast %cst_55 : f32 to vector<8x384xf32>
    %170 = arith.addf %169, %168 : vector<8x384xf32>
    %171 = arith.divf %169, %170 : vector<8x384xf32>
    %172 = vector.extract_strided_slice %165 {offsets = [0, 384], sizes = [8, 128], strides = [1, 1]} : vector<8x512xf32> to vector<8x128xf32>
    %173 = math.tanh %172 : vector<8x128xf32>
    %174 = vector.extract_strided_slice %171 {offsets = [0, 0], sizes = [8, 128], strides = [1, 1]} : vector<8x384xf32> to vector<8x128xf32>
    %175 = vector.extract_strided_slice %171 {offsets = [0, 128], sizes = [8, 128], strides = [1, 1]} : vector<8x384xf32> to vector<8x128xf32>
    %176 = vector.extract_strided_slice %171 {offsets = [0, 256], sizes = [8, 128], strides = [1, 1]} : vector<8x384xf32> to vector<8x128xf32>
    %177 = arith.mulf %175, %154 : vector<8x128xf32>
    %178 = arith.mulf %174, %173 : vector<8x128xf32>
    %179 = arith.addf %177, %178 : vector<8x128xf32>
    %180 = math.tanh %179 : vector<8x128xf32>
    %181 = arith.mulf %176, %180 : vector<8x128xf32>
    %182 = arith.index_cast %160 : i32 to index
    %c0_56 = arith.constant 0 : index
    %183 = vector.load %arg12[%182, %c0_56] : memref<64x128xf32, #tpu.memory_space<vmem>>, vector<8x128xf32>
    tpu.vector_store %arg12[%182, %c0_56], %181 {strides = array<i32>} : memref<64x128xf32, #tpu.memory_space<vmem>>, vector<8x128xf32>,
    %c7_i32 = arith.constant 7 : i32
    %c8_i32_57 = arith.constant 8 : i32
    %184 = arith.muli %c7_i32, %c8_i32_57 : i32
    %185 = tpu.assume_multiple %184, 8 : i32
    %186 = arith.index_cast %185 : i32 to index
    %c0_58 = arith.constant 0 : index
    %187 = vector.load %arg11[%186, %c0_58] : memref<64x512xf32, #tpu.memory_space<vmem>>, vector<8x512xf32>
    %c0_59 = arith.constant 0 : index
    %c0_60 = arith.constant 0 : index
    %188 = vector.load %arg3[%c0_59, %c0_60] : memref<128x512xf32, #tpu.memory_space<vmem>>, vector<128x512xf32>
    %cst_61 = arith.constant dense<0.000000e+00> : vector<8x512xf32>
    %189 = tpu.matmul %181, %188, %cst_61 {dimension_numbers = #tpu.dot_dimension_numbers<[1], [0], [0], [1], [0, 0, 1, 1], [], []>} : vector<8x128xf32>, vector<128x512xf32>, vector<8x512xf32> -> vector<8x512xf32>
    %190 = arith.addf %187, %189 : vector<8x512xf32>
    %191 = vector.extract_strided_slice %190 {offsets = [0, 0], sizes = [8, 384], strides = [1, 1]} : vector<8x512xf32> to vector<8x384xf32>
    %192 = arith.negf %191 : vector<8x384xf32>
    %193 = math.exp %192 : vector<8x384xf32>
    %cst_62 = arith.constant 1.000000e+00 : f32
    %194 = vector.broadcast %cst_62 : f32 to vector<8x384xf32>
    %195 = arith.addf %194, %193 : vector<8x384xf32>
    %196 = arith.divf %194, %195 : vector<8x384xf32>
    %197 = vector.extract_strided_slice %190 {offsets = [0, 384], sizes = [8, 128], strides = [1, 1]} : vector<8x512xf32> to vector<8x128xf32>
    %198 = math.tanh %197 : vector<8x128xf32>
    %199 = vector.extract_strided_slice %196 {offsets = [0, 0], sizes = [8, 128], strides = [1, 1]} : vector<8x384xf32> to vector<8x128xf32>
    %200 = vector.extract_strided_slice %196 {offsets = [0, 128], sizes = [8, 128], strides = [1, 1]} : vector<8x384xf32> to vector<8x128xf32>
    %201 = vector.extract_strided_slice %196 {offsets = [0, 256], sizes = [8, 128], strides = [1, 1]} : vector<8x384xf32> to vector<8x128xf32>
    %202 = arith.mulf %200, %179 : vector<8x128xf32>
    %203 = arith.mulf %199, %198 : vector<8x128xf32>
    %204 = arith.addf %202, %203 : vector<8x128xf32>
    %205 = math.tanh %204 : vector<8x128xf32>
    %206 = arith.mulf %201, %205 : vector<8x128xf32>
    %207 = arith.index_cast %185 : i32 to index
    %c0_63 = arith.constant 0 : index
    %208 = vector.load %arg12[%207, %c0_63] : memref<64x128xf32, #tpu.memory_space<vmem>>, vector<8x128xf32>
    tpu.vector_store %arg12[%207, %c0_63], %206 {strides = array<i32>} : memref<64x128xf32, #tpu.memory_space<vmem>>, vector<8x128xf32>,
    %c8_i32_64 = arith.constant 8 : i32
    %c0_65 = arith.constant 0 : index
    %c0_66 = arith.constant 0 : index
    %209 = vector.load %arg12[%c0_65, %c0_66] : memref<64x128xf32, #tpu.memory_space<vmem>>, vector<64x128xf32>
    %c0_67 = arith.constant 0 : index
    %c0_68 = arith.constant 0 : index
    %210 = vector.load %arg5[%c0_67, %c0_68] : memref<128x512xf32, #tpu.memory_space<vmem>>, vector<128x512xf32>
    %cst_69 = arith.constant dense<0.000000e+00> : vector<64x512xf32>
    %211 = tpu.matmul %209, %210, %cst_69 {dimension_numbers = #tpu.dot_dimension_numbers<[1], [0], [0], [1], [0, 0, 1, 1], [], []>} : vector<64x128xf32>, vector<128x512xf32>, vector<64x512xf32> -> vector<64x512xf32>
    %c0_70 = arith.constant 0 : index
    %c0_71 = arith.constant 0 : index
    %212 = vector.load %arg7[%c0_70, %c0_71] : memref<1x512xf32, #tpu.memory_space<vmem>>, vector<1x512xf32>
    %213 = vector.broadcast %212 : vector<1x512xf32> to vector<64x512xf32>
    %214 = arith.addf %211, %213 : vector<64x512xf32>
    %c0_72 = arith.constant 0 : index
    %c0_73 = arith.constant 0 : index
    %215 = vector.load %arg11[%c0_72, %c0_73] : memref<64x512xf32, #tpu.memory_space<vmem>>, vector<64x512xf32>
    tpu.vector_store %arg11[%c0_72, %c0_73], %214 {strides = array<i32>} : memref<64x512xf32, #tpu.memory_space<vmem>>, vector<64x512xf32>,
    %cst_74 = arith.constant 0.000000e+00 : f32
    %216 = vector.broadcast %cst_74 : f32 to vector<8x128xf32>
    %cst_75 = arith.constant 0.000000e+00 : f32
    %217 = vector.broadcast %cst_75 : f32 to vector<8x128xf32>
    %c0_i32_76 = arith.constant 0 : i32
    %c8_i32_77 = arith.constant 8 : i32
    %218 = arith.muli %c0_i32_76, %c8_i32_77 : i32
    %219 = tpu.assume_multiple %218, 8 : i32
    %220 = arith.index_cast %219 : i32 to index
    %c0_78 = arith.constant 0 : index
    %221 = vector.load %arg11[%220, %c0_78] : memref<64x512xf32, #tpu.memory_space<vmem>>, vector<8x512xf32>
    %c0_79 = arith.constant 0 : index
    %c0_80 = arith.constant 0 : index
    %222 = vector.load %arg6[%c0_79, %c0_80] : memref<128x512xf32, #tpu.memory_space<vmem>>, vector<128x512xf32>
    %cst_81 = arith.constant dense<0.000000e+00> : vector<8x512xf32>
    %223 = tpu.matmul %216, %222, %cst_81 {dimension_numbers = #tpu.dot_dimension_numbers<[1], [0], [0], [1], [0, 0, 1, 1], [], []>} : vector<8x128xf32>, vector<128x512xf32>, vector<8x512xf32> -> vector<8x512xf32>
    %224 = arith.addf %221, %223 : vector<8x512xf32>
    %225 = vector.extract_strided_slice %224 {offsets = [0, 0], sizes = [8, 384], strides = [1, 1]} : vector<8x512xf32> to vector<8x384xf32>
    %226 = arith.negf %225 : vector<8x384xf32>
    %227 = math.exp %226 : vector<8x384xf32>
    %cst_82 = arith.constant 1.000000e+00 : f32
    %228 = vector.broadcast %cst_82 : f32 to vector<8x384xf32>
    %229 = arith.addf %228, %227 : vector<8x384xf32>
    %230 = arith.divf %228, %229 : vector<8x384xf32>
    %231 = vector.extract_strided_slice %224 {offsets = [0, 384], sizes = [8, 128], strides = [1, 1]} : vector<8x512xf32> to vector<8x128xf32>
    %232 = math.tanh %231 : vector<8x128xf32>
    %233 = vector.extract_strided_slice %230 {offsets = [0, 0], sizes = [8, 128], strides = [1, 1]} : vector<8x384xf32> to vector<8x128xf32>
    %234 = vector.extract_strided_slice %230 {offsets = [0, 128], sizes = [8, 128], strides = [1, 1]} : vector<8x384xf32> to vector<8x128xf32>
    %235 = vector.extract_strided_slice %230 {offsets = [0, 256], sizes = [8, 128], strides = [1, 1]} : vector<8x384xf32> to vector<8x128xf32>
    %236 = arith.mulf %234, %217 : vector<8x128xf32>
    %237 = arith.mulf %233, %232 : vector<8x128xf32>
    %238 = arith.addf %236, %237 : vector<8x128xf32>
    %239 = math.tanh %238 : vector<8x128xf32>
    %240 = arith.mulf %235, %239 : vector<8x128xf32>
    %c1_i32_83 = arith.constant 1 : i32
    %c8_i32_84 = arith.constant 8 : i32
    %241 = arith.muli %c1_i32_83, %c8_i32_84 : i32
    %242 = tpu.assume_multiple %241, 8 : i32
    %243 = arith.index_cast %242 : i32 to index
    %c0_85 = arith.constant 0 : index
    %244 = vector.load %arg11[%243, %c0_85] : memref<64x512xf32, #tpu.memory_space<vmem>>, vector<8x512xf32>
    %c0_86 = arith.constant 0 : index
    %c0_87 = arith.constant 0 : index
    %245 = vector.load %arg6[%c0_86, %c0_87] : memref<128x512xf32, #tpu.memory_space<vmem>>, vector<128x512xf32>
    %cst_88 = arith.constant dense<0.000000e+00> : vector<8x512xf32>
    %246 = tpu.matmul %240, %245, %cst_88 {dimension_numbers = #tpu.dot_dimension_numbers<[1], [0], [0], [1], [0, 0, 1, 1], [], []>} : vector<8x128xf32>, vector<128x512xf32>, vector<8x512xf32> -> vector<8x512xf32>
    %247 = arith.addf %244, %246 : vector<8x512xf32>
    %248 = vector.extract_strided_slice %247 {offsets = [0, 0], sizes = [8, 384], strides = [1, 1]} : vector<8x512xf32> to vector<8x384xf32>
    %249 = arith.negf %248 : vector<8x384xf32>
    %250 = math.exp %249 : vector<8x384xf32>
    %cst_89 = arith.constant 1.000000e+00 : f32
    %251 = vector.broadcast %cst_89 : f32 to vector<8x384xf32>
    %252 = arith.addf %251, %250 : vector<8x384xf32>
    %253 = arith.divf %251, %252 : vector<8x384xf32>
    %254 = vector.extract_strided_slice %247 {offsets = [0, 384], sizes = [8, 128], strides = [1, 1]} : vector<8x512xf32> to vector<8x128xf32>
    %255 = math.tanh %254 : vector<8x128xf32>
    %256 = vector.extract_strided_slice %253 {offsets = [0, 0], sizes = [8, 128], strides = [1, 1]} : vector<8x384xf32> to vector<8x128xf32>
    %257 = vector.extract_strided_slice %253 {offsets = [0, 128], sizes = [8, 128], strides = [1, 1]} : vector<8x384xf32> to vector<8x128xf32>
    %258 = vector.extract_strided_slice %253 {offsets = [0, 256], sizes = [8, 128], strides = [1, 1]} : vector<8x384xf32> to vector<8x128xf32>
    %259 = arith.mulf %257, %238 : vector<8x128xf32>
    %260 = arith.mulf %256, %255 : vector<8x128xf32>
    %261 = arith.addf %259, %260 : vector<8x128xf32>
    %262 = math.tanh %261 : vector<8x128xf32>
    %263 = arith.mulf %258, %262 : vector<8x128xf32>
    %c2_i32_90 = arith.constant 2 : i32
    %c8_i32_91 = arith.constant 8 : i32
    %264 = arith.muli %c2_i32_90, %c8_i32_91 : i32
    %265 = tpu.assume_multiple %264, 8 : i32
    %266 = arith.index_cast %265 : i32 to index
    %c0_92 = arith.constant 0 : index
    %267 = vector.load %arg11[%266, %c0_92] : memref<64x512xf32, #tpu.memory_space<vmem>>, vector<8x512xf32>
    %c0_93 = arith.constant 0 : index
    %c0_94 = arith.constant 0 : index
    %268 = vector.load %arg6[%c0_93, %c0_94] : memref<128x512xf32, #tpu.memory_space<vmem>>, vector<128x512xf32>
    %cst_95 = arith.constant dense<0.000000e+00> : vector<8x512xf32>
    %269 = tpu.matmul %263, %268, %cst_95 {dimension_numbers = #tpu.dot_dimension_numbers<[1], [0], [0], [1], [0, 0, 1, 1], [], []>} : vector<8x128xf32>, vector<128x512xf32>, vector<8x512xf32> -> vector<8x512xf32>
    %270 = arith.addf %267, %269 : vector<8x512xf32>
    %271 = vector.extract_strided_slice %270 {offsets = [0, 0], sizes = [8, 384], strides = [1, 1]} : vector<8x512xf32> to vector<8x384xf32>
    %272 = arith.negf %271 : vector<8x384xf32>
    %273 = math.exp %272 : vector<8x384xf32>
    %cst_96 = arith.constant 1.000000e+00 : f32
    %274 = vector.broadcast %cst_96 : f32 to vector<8x384xf32>
    %275 = arith.addf %274, %273 : vector<8x384xf32>
    %276 = arith.divf %274, %275 : vector<8x384xf32>
    %277 = vector.extract_strided_slice %270 {offsets = [0, 384], sizes = [8, 128], strides = [1, 1]} : vector<8x512xf32> to vector<8x128xf32>
    %278 = math.tanh %277 : vector<8x128xf32>
    %279 = vector.extract_strided_slice %276 {offsets = [0, 0], sizes = [8, 128], strides = [1, 1]} : vector<8x384xf32> to vector<8x128xf32>
    %280 = vector.extract_strided_slice %276 {offsets = [0, 128], sizes = [8, 128], strides = [1, 1]} : vector<8x384xf32> to vector<8x128xf32>
    %281 = vector.extract_strided_slice %276 {offsets = [0, 256], sizes = [8, 128], strides = [1, 1]} : vector<8x384xf32> to vector<8x128xf32>
    %282 = arith.mulf %280, %261 : vector<8x128xf32>
    %283 = arith.mulf %279, %278 : vector<8x128xf32>
    %284 = arith.addf %282, %283 : vector<8x128xf32>
    %285 = math.tanh %284 : vector<8x128xf32>
    %286 = arith.mulf %281, %285 : vector<8x128xf32>
    %c3_i32_97 = arith.constant 3 : i32
    %c8_i32_98 = arith.constant 8 : i32
    %287 = arith.muli %c3_i32_97, %c8_i32_98 : i32
    %288 = tpu.assume_multiple %287, 8 : i32
    %289 = arith.index_cast %288 : i32 to index
    %c0_99 = arith.constant 0 : index
    %290 = vector.load %arg11[%289, %c0_99] : memref<64x512xf32, #tpu.memory_space<vmem>>, vector<8x512xf32>
    %c0_100 = arith.constant 0 : index
    %c0_101 = arith.constant 0 : index
    %291 = vector.load %arg6[%c0_100, %c0_101] : memref<128x512xf32, #tpu.memory_space<vmem>>, vector<128x512xf32>
    %cst_102 = arith.constant dense<0.000000e+00> : vector<8x512xf32>
    %292 = tpu.matmul %286, %291, %cst_102 {dimension_numbers = #tpu.dot_dimension_numbers<[1], [0], [0], [1], [0, 0, 1, 1], [], []>} : vector<8x128xf32>, vector<128x512xf32>, vector<8x512xf32> -> vector<8x512xf32>
    %293 = arith.addf %290, %292 : vector<8x512xf32>
    %294 = vector.extract_strided_slice %293 {offsets = [0, 0], sizes = [8, 384], strides = [1, 1]} : vector<8x512xf32> to vector<8x384xf32>
    %295 = arith.negf %294 : vector<8x384xf32>
    %296 = math.exp %295 : vector<8x384xf32>
    %cst_103 = arith.constant 1.000000e+00 : f32
    %297 = vector.broadcast %cst_103 : f32 to vector<8x384xf32>
    %298 = arith.addf %297, %296 : vector<8x384xf32>
    %299 = arith.divf %297, %298 : vector<8x384xf32>
    %300 = vector.extract_strided_slice %293 {offsets = [0, 384], sizes = [8, 128], strides = [1, 1]} : vector<8x512xf32> to vector<8x128xf32>
    %301 = math.tanh %300 : vector<8x128xf32>
    %302 = vector.extract_strided_slice %299 {offsets = [0, 0], sizes = [8, 128], strides = [1, 1]} : vector<8x384xf32> to vector<8x128xf32>
    %303 = vector.extract_strided_slice %299 {offsets = [0, 128], sizes = [8, 128], strides = [1, 1]} : vector<8x384xf32> to vector<8x128xf32>
    %304 = vector.extract_strided_slice %299 {offsets = [0, 256], sizes = [8, 128], strides = [1, 1]} : vector<8x384xf32> to vector<8x128xf32>
    %305 = arith.mulf %303, %284 : vector<8x128xf32>
    %306 = arith.mulf %302, %301 : vector<8x128xf32>
    %307 = arith.addf %305, %306 : vector<8x128xf32>
    %308 = math.tanh %307 : vector<8x128xf32>
    %309 = arith.mulf %304, %308 : vector<8x128xf32>
    %c4_i32_104 = arith.constant 4 : i32
    %c8_i32_105 = arith.constant 8 : i32
    %310 = arith.muli %c4_i32_104, %c8_i32_105 : i32
    %311 = tpu.assume_multiple %310, 8 : i32
    %312 = arith.index_cast %311 : i32 to index
    %c0_106 = arith.constant 0 : index
    %313 = vector.load %arg11[%312, %c0_106] : memref<64x512xf32, #tpu.memory_space<vmem>>, vector<8x512xf32>
    %c0_107 = arith.constant 0 : index
    %c0_108 = arith.constant 0 : index
    %314 = vector.load %arg6[%c0_107, %c0_108] : memref<128x512xf32, #tpu.memory_space<vmem>>, vector<128x512xf32>
    %cst_109 = arith.constant dense<0.000000e+00> : vector<8x512xf32>
    %315 = tpu.matmul %309, %314, %cst_109 {dimension_numbers = #tpu.dot_dimension_numbers<[1], [0], [0], [1], [0, 0, 1, 1], [], []>} : vector<8x128xf32>, vector<128x512xf32>, vector<8x512xf32> -> vector<8x512xf32>
    %316 = arith.addf %313, %315 : vector<8x512xf32>
    %317 = vector.extract_strided_slice %316 {offsets = [0, 0], sizes = [8, 384], strides = [1, 1]} : vector<8x512xf32> to vector<8x384xf32>
    %318 = arith.negf %317 : vector<8x384xf32>
    %319 = math.exp %318 : vector<8x384xf32>
    %cst_110 = arith.constant 1.000000e+00 : f32
    %320 = vector.broadcast %cst_110 : f32 to vector<8x384xf32>
    %321 = arith.addf %320, %319 : vector<8x384xf32>
    %322 = arith.divf %320, %321 : vector<8x384xf32>
    %323 = vector.extract_strided_slice %316 {offsets = [0, 384], sizes = [8, 128], strides = [1, 1]} : vector<8x512xf32> to vector<8x128xf32>
    %324 = math.tanh %323 : vector<8x128xf32>
    %325 = vector.extract_strided_slice %322 {offsets = [0, 0], sizes = [8, 128], strides = [1, 1]} : vector<8x384xf32> to vector<8x128xf32>
    %326 = vector.extract_strided_slice %322 {offsets = [0, 128], sizes = [8, 128], strides = [1, 1]} : vector<8x384xf32> to vector<8x128xf32>
    %327 = vector.extract_strided_slice %322 {offsets = [0, 256], sizes = [8, 128], strides = [1, 1]} : vector<8x384xf32> to vector<8x128xf32>
    %328 = arith.mulf %326, %307 : vector<8x128xf32>
    %329 = arith.mulf %325, %324 : vector<8x128xf32>
    %330 = arith.addf %328, %329 : vector<8x128xf32>
    %331 = math.tanh %330 : vector<8x128xf32>
    %332 = arith.mulf %327, %331 : vector<8x128xf32>
    %c5_i32_111 = arith.constant 5 : i32
    %c8_i32_112 = arith.constant 8 : i32
    %333 = arith.muli %c5_i32_111, %c8_i32_112 : i32
    %334 = tpu.assume_multiple %333, 8 : i32
    %335 = arith.index_cast %334 : i32 to index
    %c0_113 = arith.constant 0 : index
    %336 = vector.load %arg11[%335, %c0_113] : memref<64x512xf32, #tpu.memory_space<vmem>>, vector<8x512xf32>
    %c0_114 = arith.constant 0 : index
    %c0_115 = arith.constant 0 : index
    %337 = vector.load %arg6[%c0_114, %c0_115] : memref<128x512xf32, #tpu.memory_space<vmem>>, vector<128x512xf32>
    %cst_116 = arith.constant dense<0.000000e+00> : vector<8x512xf32>
    %338 = tpu.matmul %332, %337, %cst_116 {dimension_numbers = #tpu.dot_dimension_numbers<[1], [0], [0], [1], [0, 0, 1, 1], [], []>} : vector<8x128xf32>, vector<128x512xf32>, vector<8x512xf32> -> vector<8x512xf32>
    %339 = arith.addf %336, %338 : vector<8x512xf32>
    %340 = vector.extract_strided_slice %339 {offsets = [0, 0], sizes = [8, 384], strides = [1, 1]} : vector<8x512xf32> to vector<8x384xf32>
    %341 = arith.negf %340 : vector<8x384xf32>
    %342 = math.exp %341 : vector<8x384xf32>
    %cst_117 = arith.constant 1.000000e+00 : f32
    %343 = vector.broadcast %cst_117 : f32 to vector<8x384xf32>
    %344 = arith.addf %343, %342 : vector<8x384xf32>
    %345 = arith.divf %343, %344 : vector<8x384xf32>
    %346 = vector.extract_strided_slice %339 {offsets = [0, 384], sizes = [8, 128], strides = [1, 1]} : vector<8x512xf32> to vector<8x128xf32>
    %347 = math.tanh %346 : vector<8x128xf32>
    %348 = vector.extract_strided_slice %345 {offsets = [0, 0], sizes = [8, 128], strides = [1, 1]} : vector<8x384xf32> to vector<8x128xf32>
    %349 = vector.extract_strided_slice %345 {offsets = [0, 128], sizes = [8, 128], strides = [1, 1]} : vector<8x384xf32> to vector<8x128xf32>
    %350 = vector.extract_strided_slice %345 {offsets = [0, 256], sizes = [8, 128], strides = [1, 1]} : vector<8x384xf32> to vector<8x128xf32>
    %351 = arith.mulf %349, %330 : vector<8x128xf32>
    %352 = arith.mulf %348, %347 : vector<8x128xf32>
    %353 = arith.addf %351, %352 : vector<8x128xf32>
    %354 = math.tanh %353 : vector<8x128xf32>
    %355 = arith.mulf %350, %354 : vector<8x128xf32>
    %c6_i32_118 = arith.constant 6 : i32
    %c8_i32_119 = arith.constant 8 : i32
    %356 = arith.muli %c6_i32_118, %c8_i32_119 : i32
    %357 = tpu.assume_multiple %356, 8 : i32
    %358 = arith.index_cast %357 : i32 to index
    %c0_120 = arith.constant 0 : index
    %359 = vector.load %arg11[%358, %c0_120] : memref<64x512xf32, #tpu.memory_space<vmem>>, vector<8x512xf32>
    %c0_121 = arith.constant 0 : index
    %c0_122 = arith.constant 0 : index
    %360 = vector.load %arg6[%c0_121, %c0_122] : memref<128x512xf32, #tpu.memory_space<vmem>>, vector<128x512xf32>
    %cst_123 = arith.constant dense<0.000000e+00> : vector<8x512xf32>
    %361 = tpu.matmul %355, %360, %cst_123 {dimension_numbers = #tpu.dot_dimension_numbers<[1], [0], [0], [1], [0, 0, 1, 1], [], []>} : vector<8x128xf32>, vector<128x512xf32>, vector<8x512xf32> -> vector<8x512xf32>
    %362 = arith.addf %359, %361 : vector<8x512xf32>
    %363 = vector.extract_strided_slice %362 {offsets = [0, 0], sizes = [8, 384], strides = [1, 1]} : vector<8x512xf32> to vector<8x384xf32>
    %364 = arith.negf %363 : vector<8x384xf32>
    %365 = math.exp %364 : vector<8x384xf32>
    %cst_124 = arith.constant 1.000000e+00 : f32
    %366 = vector.broadcast %cst_124 : f32 to vector<8x384xf32>
    %367 = arith.addf %366, %365 : vector<8x384xf32>
    %368 = arith.divf %366, %367 : vector<8x384xf32>
    %369 = vector.extract_strided_slice %362 {offsets = [0, 384], sizes = [8, 128], strides = [1, 1]} : vector<8x512xf32> to vector<8x128xf32>
    %370 = math.tanh %369 : vector<8x128xf32>
    %371 = vector.extract_strided_slice %368 {offsets = [0, 0], sizes = [8, 128], strides = [1, 1]} : vector<8x384xf32> to vector<8x128xf32>
    %372 = vector.extract_strided_slice %368 {offsets = [0, 128], sizes = [8, 128], strides = [1, 1]} : vector<8x384xf32> to vector<8x128xf32>
    %373 = vector.extract_strided_slice %368 {offsets = [0, 256], sizes = [8, 128], strides = [1, 1]} : vector<8x384xf32> to vector<8x128xf32>
    %374 = arith.mulf %372, %353 : vector<8x128xf32>
    %375 = arith.mulf %371, %370 : vector<8x128xf32>
    %376 = arith.addf %374, %375 : vector<8x128xf32>
    %377 = math.tanh %376 : vector<8x128xf32>
    %378 = arith.mulf %373, %377 : vector<8x128xf32>
    %c7_i32_125 = arith.constant 7 : i32
    %c8_i32_126 = arith.constant 8 : i32
    %379 = arith.muli %c7_i32_125, %c8_i32_126 : i32
    %380 = tpu.assume_multiple %379, 8 : i32
    %381 = arith.index_cast %380 : i32 to index
    %c0_127 = arith.constant 0 : index
    %382 = vector.load %arg11[%381, %c0_127] : memref<64x512xf32, #tpu.memory_space<vmem>>, vector<8x512xf32>
    %c0_128 = arith.constant 0 : index
    %c0_129 = arith.constant 0 : index
    %383 = vector.load %arg6[%c0_128, %c0_129] : memref<128x512xf32, #tpu.memory_space<vmem>>, vector<128x512xf32>
    %cst_130 = arith.constant dense<0.000000e+00> : vector<8x512xf32>
    %384 = tpu.matmul %378, %383, %cst_130 {dimension_numbers = #tpu.dot_dimension_numbers<[1], [0], [0], [1], [0, 0, 1, 1], [], []>} : vector<8x128xf32>, vector<128x512xf32>, vector<8x512xf32> -> vector<8x512xf32>
    %385 = arith.addf %382, %384 : vector<8x512xf32>
    %386 = vector.extract_strided_slice %385 {offsets = [0, 0], sizes = [8, 384], strides = [1, 1]} : vector<8x512xf32> to vector<8x384xf32>
    %387 = arith.negf %386 : vector<8x384xf32>
    %388 = math.exp %387 : vector<8x384xf32>
    %cst_131 = arith.constant 1.000000e+00 : f32
    %389 = vector.broadcast %cst_131 : f32 to vector<8x384xf32>
    %390 = arith.addf %389, %388 : vector<8x384xf32>
    %391 = arith.divf %389, %390 : vector<8x384xf32>
    %392 = vector.extract_strided_slice %385 {offsets = [0, 384], sizes = [8, 128], strides = [1, 1]} : vector<8x512xf32> to vector<8x128xf32>
    %393 = math.tanh %392 : vector<8x128xf32>
    %394 = vector.extract_strided_slice %391 {offsets = [0, 0], sizes = [8, 128], strides = [1, 1]} : vector<8x384xf32> to vector<8x128xf32>
    %395 = vector.extract_strided_slice %391 {offsets = [0, 128], sizes = [8, 128], strides = [1, 1]} : vector<8x384xf32> to vector<8x128xf32>
    %396 = vector.extract_strided_slice %391 {offsets = [0, 256], sizes = [8, 128], strides = [1, 1]} : vector<8x384xf32> to vector<8x128xf32>
    %397 = arith.mulf %395, %376 : vector<8x128xf32>
    %398 = arith.mulf %394, %393 : vector<8x128xf32>
    %399 = arith.addf %397, %398 : vector<8x128xf32>
    %400 = math.tanh %399 : vector<8x128xf32>
    %401 = arith.mulf %396, %400 : vector<8x128xf32>
    %c8_i32_132 = arith.constant 8 : i32
    %c0_133 = arith.constant 0 : index
    %c0_134 = arith.constant 0 : index
    %402 = vector.load %arg8[%c0_133, %c0_134] : memref<128x128xf32, #tpu.memory_space<vmem>>, vector<128x128xf32>
    %cst_135 = arith.constant dense<0.000000e+00> : vector<8x128xf32>
    %403 = tpu.matmul %401, %402, %cst_135 {dimension_numbers = #tpu.dot_dimension_numbers<[1], [0], [0], [1], [0, 0, 1, 1], [], []>} : vector<8x128xf32>, vector<128x128xf32>, vector<8x128xf32> -> vector<8x128xf32>
    %c0_136 = arith.constant 0 : index
    %c0_137 = arith.constant 0 : index
    %404 = vector.load %arg9[%c0_136, %c0_137] : memref<1x128xf32, #tpu.memory_space<vmem>>, vector<1x128xf32>
    %405 = vector.broadcast %404 : vector<1x128xf32> to vector<8x128xf32>
    %406 = arith.addf %403, %405 : vector<8x128xf32>
    %c0_138 = arith.constant 0 : index
    %c0_139 = arith.constant 0 : index
    %407 = vector.load %arg10[%c0_138, %c0_139] : memref<8x128xf32, #tpu.memory_space<vmem>>, vector<8x128xf32>
    tpu.vector_store %arg10[%c0_138, %c0_139], %406 {strides = array<i32>} : memref<8x128xf32, #tpu.memory_space<vmem>>, vector<8x128xf32>,
    return
  }
  func.func @transform_0(%arg0: i32) -> (i32, i32) {
    %c0_i32 = arith.constant 0 : i32
    %c0_i32_0 = arith.constant 0 : i32
    %c0_i32_1 = arith.constant 0 : i32
    return %c0_i32, %c0_i32_0 : i32, i32
  }
  func.func @transform_1(%arg0: i32) -> (i32, i32) {
    %c0_i32 = arith.constant 0 : i32
    %c0_i32_0 = arith.constant 0 : i32
    %c0_i32_1 = arith.constant 0 : i32
    return %c0_i32, %c0_i32_0 : i32, i32
  }
  func.func @transform_2(%arg0: i32) -> (i32, i32) {
    %c0_i32 = arith.constant 0 : i32
    %c0_i32_0 = arith.constant 0 : i32
    %c0_i32_1 = arith.constant 0 : i32
    return %c0_i32, %c0_i32_0 : i32, i32
  }
  func.func @transform_3(%arg0: i32) -> (i32, i32) {
    %c0_i32 = arith.constant 0 : i32
    %c0_i32_0 = arith.constant 0 : i32
    %c0_i32_1 = arith.constant 0 : i32
    return %c0_i32, %c0_i32_0 : i32, i32
  }
  func.func @transform_4(%arg0: i32) -> (i32, i32) {
    %c0_i32 = arith.constant 0 : i32
    %c0_i32_0 = arith.constant 0 : i32
    %c0_i32_1 = arith.constant 0 : i32
    return %c0_i32, %c0_i32_0 : i32, i32
  }
  func.func @transform_5(%arg0: i32) -> (i32, i32) {
    %c0_i32 = arith.constant 0 : i32
    %c0_i32_0 = arith.constant 0 : i32
    %c0_i32_1 = arith.constant 0 : i32
    return %c0_i32, %c0_i32_0 : i32, i32
  }
  func.func @transform_6(%arg0: i32) -> (i32, i32) {
    %c0_i32 = arith.constant 0 : i32
    %c0_i32_0 = arith.constant 0 : i32
    %c0_i32_1 = arith.constant 0 : i32
    return %c0_i32, %c0_i32_0 : i32, i32
  }
  func.func @transform_7(%arg0: i32) -> (i32, i32) {
    %c0_i32 = arith.constant 0 : i32
    %c0_i32_0 = arith.constant 0 : i32
    %c0_i32_1 = arith.constant 0 : i32
    return %c0_i32, %c0_i32_0 : i32, i32
  }
  func.func @transform_8(%arg0: i32) -> (i32, i32) {
    %c0_i32 = arith.constant 0 : i32
    %c0_i32_0 = arith.constant 0 : i32
    %c0_i32_1 = arith.constant 0 : i32
    return %c0_i32, %c0_i32_0 : i32, i32
  }
  func.func @transform_9(%arg0: i32) -> (i32, i32) {
    %c0_i32 = arith.constant 0 : i32
    %c0_i32_0 = arith.constant 0 : i32
    %c0_i32_1 = arith.constant 0 : i32
    return %c0_i32, %c0_i32_0 : i32, i32
  }
}

</mosaic_0001>

<llo_original>
// kernel: lstm_forward.1
$region0: #{lstm_forward.1}
  #allocation0 [shape = 'u32[]', space=smem, size = 0x4, offset = 0x4, fixed_abs, tag = 'smem constant byte address 0x4 - core index']
  #allocation1 [shape = 'u32[72,128]{1,0:T(1,128)}', space=vmem, size = 0x9000, scoped, tag = 'internal scratch']
  #allocation2 [shape = 'f32[64,512]{1,0:T(8,128)}', space=vmem, size = 0x20000, scoped, tag = 'scratch operand']
  #allocation3 [shape = 'f32[64,128]{1,0:T(8,128)}', space=vmem, size = 0x8000, scoped, tag = 'scratch operand']
  %s0 = inlined_call_operand.vmem [shape: f32[64,128], index: 0, kind: input, shape index: {}]
  %s1 = inlined_call_operand.hbm [shape: f32[128,512], index: 1, kind: input, shape index: {}]
  %s2 = inlined_call_operand.hbm [shape: f32[128,512], index: 2, kind: input, shape index: {}]
  %s3 = inlined_call_operand.vmem [shape: f32[1,512], index: 3, kind: input, shape index: {}]
  %s4 = inlined_call_operand.hbm [shape: f32[128,512], index: 4, kind: input, shape index: {}]
  %s5 = inlined_call_operand.hbm [shape: f32[128,512], index: 5, kind: input, shape index: {}]
  %s6 = inlined_call_operand.vmem [shape: f32[1,512], index: 6, kind: input, shape index: {}]
  %s7 = inlined_call_operand.hbm [shape: f32[128,128], index: 7, kind: input, shape index: {}]
  %s8 = inlined_call_operand.vmem [shape: f32[1,128], index: 8, kind: input, shape index: {}]
  %s9 = inlined_call_operand.vmem [shape: f32[8,128], index: 9, kind: output, shape index: {}]
  %s10 = sld [smem:[#allocation0]]
  $region66: #{lstm_forward.1} parent=0
    _
  %s12 = ssub.s32 1, %s10
  %s13 = scalar_select 0, %s12, %s10
  $region1: #{lstm_forward.1} parent=0
    #allocation4 [shape = 'u8[262144]{0}', space=vmem, size = 0x40000, scoped, tag = 'input window, operand 1, single buffered']
    #allocation5 [shape = 's32[1]{0}', space=sflag, size = 0x4, scoped, tag = 'scoped memory for lstm_forward.1']
    #allocation6 [shape = 'u8[262144]{0}', space=vmem, size = 0x40000, scoped, tag = 'input window, operand 2, single buffered']
    #allocation7 [shape = 's32[1]{0}', space=sflag, size = 0x4, scoped, tag = 'scoped memory for lstm_forward.1']
    #allocation8 [shape = 'u8[262144]{0}', space=vmem, size = 0x40000, scoped, tag = 'input window, operand 4, single buffered']
    #allocation9 [shape = 'u8[262144]{0}', space=vmem, size = 0x40000, scoped, tag = 'input window, operand 5, single buffered']
    #allocation10 [shape = 's32[1]{0}', space=sflag, size = 0x4, scoped, tag = 'scoped memory for lstm_forward.1']
    #allocation11 [shape = 'u8[65536]{0}', space=vmem, size = 0x10000, scoped, tag = 'input window, operand 7, single buffered']
    %14 = vsyncpa [#allocation5], 0
    %15 = vsyncpa [#allocation7], 0
    %16 = vsyncpa [#allocation10], 0
    // Predicated region
    $region2: #{lstm_forward.1} parent=1 // pred_check
      _
    $region3: #{lstm_forward.1} parent=1 // pred_check_branch
      %18 = sbr.rel (0) target = $region5
    $region4: #{lstm_forward.1} parent=1 // pred_region
      _
    $region5: #{lstm_forward.1} parent=1 // pred_fallthru
      _
    // Predicated region
    $region6: #{lstm_forward.1} parent=1 // pred_check
      _
    $region7: #{lstm_forward.1} parent=1 // pred_check_branch
      %20 = sbr.rel (0) target = $region9
    $region8: #{lstm_forward.1} parent=1 // pred_region
      %22 = vsyncadd [#allocation5], 0
      %s23 = sshll.u32 %s1, 4
      %s24 = int_to_ptr.hbm [resolvable:$true] %s23
      %s25 = sshll.u32 [#allocation4], 4
      %s26 = int_to_ptr.vmem [resolvable:$true] %s25
      %31 = dma.hbm_to_vmem [thread:$0]  %s24, 8192, %s26, [#allocation5], 512, 512, 32
    $region9: #{lstm_forward.1} parent=1 // pred_fallthru
      _
    // Predicated region
    $region10: #{lstm_forward.1} parent=1 // pred_check
      _
    $region11: #{lstm_forward.1} parent=1 // pred_check_branch
      %33 = sbr.rel (0) target = $region13
    $region12: #{lstm_forward.1} parent=1 // pred_region
      %35 = vsyncadd [#allocation7], 0
      %s36 = sshll.u32 %s2, 4
      %s37 = int_to_ptr.hbm [resolvable:$true] %s36
      %s38 = sshll.u32 [#allocation6], 4
      %s39 = int_to_ptr.vmem [resolvable:$true] %s38
      %44 = dma.hbm_to_vmem [thread:$0]  %s37, 8192, %s39, [#allocation7], 512, 512, 32
    $region13: #{lstm_forward.1} parent=1 // pred_fallthru
      _
    // Predicated region
    $region14: #{lstm_forward.1} parent=1 // pred_check
      _
    $region15: #{lstm_forward.1} parent=1 // pred_check_branch
      %46 = sbr.rel (0) target = $region17
    $region16: #{lstm_forward.1} parent=1 // pred_region
      _
    $region17: #{lstm_forward.1} parent=1 // pred_fallthru
      _
    // Predicated region
    $region18: #{lstm_forward.1} parent=1 // pred_check
      _
    $region19: #{lstm_forward.1} parent=1 // pred_check_branch
      %48 = sbr.rel (0) target = $region21
    $region20: #{lstm_forward.1} parent=1 // pred_region
      %50 = vsyncadd [#allocation7], 0
      %s51 = sshll.u32 %s4, 4
      %s52 = int_to_ptr.hbm [resolvable:$true] %s51
      %s53 = sshll.u32 [#allocation8], 4
      %s54 = int_to_ptr.vmem [resolvable:$true] %s53
      %59 = dma.hbm_to_vmem [thread:$0]  %s52, 8192, %s54, [#allocation7], 512, 512, 32
    $region21: #{lstm_forward.1} parent=1 // pred_fallthru
      _
    // Predicated region
    $region22: #{lstm_forward.1} parent=1 // pred_check
      _
    $region23: #{lstm_forward.1} parent=1 // pred_check_branch
      %61 = sbr.rel (0) target = $region25
    $region24: #{lstm_forward.1} parent=1 // pred_region
      %63 = vsyncadd [#allocation10], 0
      %s64 = sshll.u32 %s5, 4
      %s65 = int_to_ptr.hbm [resolvable:$true] %s64
      %s66 = sshll.u32 [#allocation9], 4
      %s67 = int_to_ptr.vmem [resolvable:$true] %s66
      %72 = dma.hbm_to_vmem [thread:$0]  %s65, 8192, %s67, [#allocation10], 512, 512, 32
    $region25: #{lstm_forward.1} parent=1 // pred_fallthru
      _
    // Predicated region
    $region26: #{lstm_forward.1} parent=1 // pred_check
      _
    $region27: #{lstm_forward.1} parent=1 // pred_check_branch
      %74 = sbr.rel (0) target = $region29
    $region28: #{lstm_forward.1} parent=1 // pred_region
      _
    $region29: #{lstm_forward.1} parent=1 // pred_fallthru
      _
    // Predicated region
    $region30: #{lstm_forward.1} parent=1 // pred_check
      _
    $region31: #{lstm_forward.1} parent=1 // pred_check_branch
      %76 = sbr.rel (0) target = $region33
    $region32: #{lstm_forward.1} parent=1 // pred_region
      %78 = vsyncadd [#allocation10], 0
      %s79 = sshll.u32 %s7, 4
      %s80 = int_to_ptr.hbm [resolvable:$true] %s79
      %s81 = sshll.u32 [#allocation11], 4
      %s82 = int_to_ptr.vmem [resolvable:$true] %s81
      %87 = dma.hbm_to_vmem [thread:$0]  %s80, 2048, %s82, [#allocation10], 128, 128, 8
    $region33: #{lstm_forward.1} parent=1 // pred_fallthru
      _
    // Predicated region
    $region34: #{lstm_forward.1} parent=1 // pred_check
      _
    $region35: #{lstm_forward.1} parent=1 // pred_check_branch
      %89 = sbr.rel (0) target = $region37
    $region36: #{lstm_forward.1} parent=1 // pred_region
      _
    $region37: #{lstm_forward.1} parent=1 // pred_fallthru
      _
    // Predicated region
    $region38: #{lstm_forward.1} parent=1 // pred_check
      _
    $region39: #{lstm_forward.1} parent=1 // pred_check_branch
      %91 = sbr.rel (0) target = $region41
    $region40: #{lstm_forward.1} parent=1 // pred_region
      %93 = dma.done [#allocation5], 8192
    $region41: #{lstm_forward.1} parent=1 // pred_fallthru
      _
    // Predicated region
    $region42: #{lstm_forward.1} parent=1 // pred_check
      _
    $region43: #{lstm_forward.1} parent=1 // pred_check_branch
      %95 = sbr.rel (0) target = $region45
    $region44: #{lstm_forward.1} parent=1 // pred_region
      %97 = dma.done [#allocation7], 8192
    $region45: #{lstm_forward.1} parent=1 // pred_fallthru
      _
    // Predicated region
    $region46: #{lstm_forward.1} parent=1 // pred_check
      _
    $region47: #{lstm_forward.1} parent=1 // pred_check_branch
      %99 = sbr.rel (0) target = $region49
    $region48: #{lstm_forward.1} parent=1 // pred_region
      %101 = dma.done [#allocation7], 8192
    $region49: #{lstm_forward.1} parent=1 // pred_fallthru
      _
    // Predicated region
    $region50: #{lstm_forward.1} parent=1 // pred_check
      _
    $region51: #{lstm_forward.1} parent=1 // pred_check_branch
      %103 = sbr.rel (0) target = $region53
    $region52: #{lstm_forward.1} parent=1 // pred_region
      %105 = dma.done [#allocation10], 8192
    $region53: #{lstm_forward.1} parent=1 // pred_fallthru
      _
    // Predicated region
    $region54: #{lstm_forward.1} parent=1 // pred_check
      _
    $region55: #{lstm_forward.1} parent=1 // pred_check_branch
      %107 = sbr.rel (0) target = $region57
    $region56: #{lstm_forward.1} parent=1 // pred_region
      %109 = dma.done [#allocation10], 2048
    $region57: #{lstm_forward.1} parent=1 // pred_fallthru
      _
    %v110 = vld [vmem:[%s0] sm:$0xff]
    %v111 = vld [vmem:[%s0 + $0x8] sm:$0xff]
    %v112 = vld [vmem:[%s0 + $0x10] sm:$0xff]
    %v113 = vld [vmem:[%s0 + $0x18] sm:$0xff]
    %v114 = vld [vmem:[%s0 + $0x20] sm:$0xff]
    %v115 = vld [vmem:[%s0 + $0x28] sm:$0xff]
    %v116 = vld [vmem:[%s0 + $0x30] sm:$0xff]
    %v117 = vld [vmem:[%s0 + $0x38] sm:$0xff]
    %v118 = vld [vmem:[#allocation4] sm:$0xff]
    %v119 = vld [vmem:[#allocation4 + $0x8] sm:$0xff]
    %v120 = vld [vmem:[#allocation4 + $0x10] sm:$0xff]
    %v121 = vld [vmem:[#allocation4 + $0x18] sm:$0xff]
    %v122 = vld [vmem:[#allocation4 + $0x20] sm:$0xff]
    %v123 = vld [vmem:[#allocation4 + $0x28] sm:$0xff]
    %v124 = vld [vmem:[#allocation4 + $0x30] sm:$0xff]
    %v125 = vld [vmem:[#allocation4 + $0x38] sm:$0xff]
    %v126 = vld [vmem:[#allocation4 + $0x40] sm:$0xff]
    %v127 = vld [vmem:[#allocation4 + $0x48] sm:$0xff]
    %v128 = vld [vmem:[#allocation4 + $0x50] sm:$0xff]
    %v129 = vld [vmem:[#allocation4 + $0x58] sm:$0xff]
    %v130 = vld [vmem:[#allocation4 + $0x60] sm:$0xff]
    %v131 = vld [vmem:[#allocation4 + $0x68] sm:$0xff]
    %v132 = vld [vmem:[#allocation4 + $0x70] sm:$0xff]
    %v133 = vld [vmem:[#allocation4 + $0x78] sm:$0xff]
    %v134 = vld [vmem:[#allocation4 + $0x80] sm:$0xff]
    %v135 = vld [vmem:[#allocation4 + $0x88] sm:$0xff]
    %v136 = vld [vmem:[#allocation4 + $0x90] sm:$0xff]
    %v137 = vld [vmem:[#allocation4 + $0x98] sm:$0xff]
    %v138 = vld [vmem:[#allocation4 + $0xa0] sm:$0xff]
    %v139 = vld [vmem:[#allocation4 + $0xa8] sm:$0xff]
    %v140 = vld [vmem:[#allocation4 + $0xb0] sm:$0xff]
    %v141 = vld [vmem:[#allocation4 + $0xb8] sm:$0xff]
    %v142 = vld [vmem:[#allocation4 + $0xc0] sm:$0xff]
    %v143 = vld [vmem:[#allocation4 + $0xc8] sm:$0xff]
    %v144 = vld [vmem:[#allocation4 + $0xd0] sm:$0xff]
    %v145 = vld [vmem:[#allocation4 + $0xd8] sm:$0xff]
    %v146 = vld [vmem:[#allocation4 + $0xe0] sm:$0xff]
    %v147 = vld [vmem:[#allocation4 + $0xe8] sm:$0xff]
    %v148 = vld [vmem:[#allocation4 + $0xf0] sm:$0xff]
    %v149 = vld [vmem:[#allocation4 + $0xf8] sm:$0xff]
    %v150 = vld [vmem:[#allocation4 + $0x100] sm:$0xff]
    %v151 = vld [vmem:[#allocation4 + $0x108] sm:$0xff]
    %v152 = vld [vmem:[#allocation4 + $0x110] sm:$0xff]
    %v153 = vld [vmem:[#allocation4 + $0x118] sm:$0xff]
    %v154 = vld [vmem:[#allocation4 + $0x120] sm:$0xff]
    %v155 = vld [vmem:[#allocation4 + $0x128] sm:$0xff]
    %v156 = vld [vmem:[#allocation4 + $0x130] sm:$0xff]
    %v157 = vld [vmem:[#allocation4 + $0x138] sm:$0xff]
    %v158 = vld [vmem:[#allocation4 + $0x140] sm:$0xff]
    %v159 = vld [vmem:[#allocation4 + $0x148] sm:$0xff]
    %v160 = vld [vmem:[#allocation4 + $0x150] sm:$0xff]
    %v161 = vld [vmem:[#allocation4 + $0x158] sm:$0xff]
    %v162 = vld [vmem:[#allocation4 + $0x160] sm:$0xff]
    %v163 = vld [vmem:[#allocation4 + $0x168] sm:$0xff]
    %v164 = vld [vmem:[#allocation4 + $0x170] sm:$0xff]
    %v165 = vld [vmem:[#allocation4 + $0x178] sm:$0xff]
    %v166 = vld [vmem:[#allocation4 + $0x180] sm:$0xff]
    %v167 = vld [vmem:[#allocation4 + $0x188] sm:$0xff]
    %v168 = vld [vmem:[#allocation4 + $0x190] sm:$0xff]
    %v169 = vld [vmem:[#allocation4 + $0x198] sm:$0xff]
    %v170 = vld [vmem:[#allocation4 + $0x1a0] sm:$0xff]
    %v171 = vld [vmem:[#allocation4 + $0x1a8] sm:$0xff]
    %v172 = vld [vmem:[#allocation4 + $0x1b0] sm:$0xff]
    %v173 = vld [vmem:[#allocation4 + $0x1b8] sm:$0xff]
    %v174 = vld [vmem:[#allocation4 + $0x1c0] sm:$0xff]
    %v175 = vld [vmem:[#allocation4 + $0x1c8] sm:$0xff]
    %v176 = vld [vmem:[#allocation4 + $0x1d0] sm:$0xff]
    %v177 = vld [vmem:[#allocation4 + $0x1d8] sm:$0xff]
    %v178 = vld [vmem:[#allocation4 + $0x1e0] sm:$0xff]
    %v179 = vld [vmem:[#allocation4 + $0x1e8] sm:$0xff]
    %v180 = vld [vmem:[#allocation4 + $0x1f0] sm:$0xff]
    %v181 = vld [vmem:[#allocation4 + $0x1f8] sm:$0xff]
    %v182 = vld [vmem:[%s3] sm:$0xf]
    %v184 = vperm.slane %v182, 0
    %v185 = vperm.slane %v182, 1
    %v186 = vperm.slane %v182, 2
    %v187 = vperm.slane %v182, 3
    %192 = vmatpush.msra.mxu0 %v178
    %193 = vmatpush.msra.mxu0 %v174
    %194 = vmatpush.msra.mxu0 %v170
    %195 = vmatpush.msra.mxu0 %v166
    %196 = vmatpush.msra.mxu0 %v162
    %197 = vmatpush.msra.mxu0 %v158
    %198 = vmatpush.msra.mxu0 %v154
    %199 = vmatpush.msra.mxu0 %v150
    %200 = vmatpush.msra.mxu0 %v146
    %201 = vmatpush.msra.mxu0 %v142
    %202 = vmatpush.msra.mxu0 %v138
    %203 = vmatpush.msra.mxu0 %v134
    %204 = vmatpush.msra.mxu0 %v130
    %205 = vmatpush.msra.mxu0 %v126
    %206 = vmatpush.msra.mxu0 %v122
    %207 = vmatpush.msra.mxu0 %v118
    %208 = vmatmul.f32.gmra.mxu0 %v110
    %v209 = vpop.f32.mrf.mxu0
    %v210 = vadd.f32 %v184, %v209
    %211 = vmatmul.f32.gmra.mxu0 %v111
    %v212 = vpop.f32.mrf.mxu0
    %v213 = vadd.f32 %v184, %v212
    %214 = vmatmul.f32.gmra.mxu0 %v112
    %v215 = vpop.f32.mrf.mxu0
    %v216 = vadd.f32 %v184, %v215
    %217 = vmatmul.f32.gmra.mxu0 %v113
    %v218 = vpop.f32.mrf.mxu0
    %v219 = vadd.f32 %v184, %v218
    %220 = vmatmul.f32.gmra.mxu0 %v114
    %v221 = vpop.f32.mrf.mxu0
    %v222 = vadd.f32 %v184, %v221
    %223 = vmatmul.f32.gmra.mxu0 %v115
    %v224 = vpop.f32.mrf.mxu0
    %v225 = vadd.f32 %v184, %v224
    %226 = vmatmul.f32.gmra.mxu0 %v116
    %v227 = vpop.f32.mrf.mxu0
    %v228 = vadd.f32 %v184, %v227
    %229 = vmatmul.f32.gmra.mxu0 %v117
    %v230 = vpop.f32.mrf.mxu0
    %v231 = vadd.f32 %v184, %v230
    %232 = vdwg.mxu0
    %233 = vmatpush.msra.mxu0 %v179
    %234 = vmatpush.msra.mxu0 %v175
    %235 = vmatpush.msra.mxu0 %v171
    %236 = vmatpush.msra.mxu0 %v167
    %237 = vmatpush.msra.mxu0 %v163
    %238 = vmatpush.msra.mxu0 %v159
    %239 = vmatpush.msra.mxu0 %v155
    %240 = vmatpush.msra.mxu0 %v151
    %241 = vmatpush.msra.mxu0 %v147
    %242 = vmatpush.msra.mxu0 %v143
    %243 = vmatpush.msra.mxu0 %v139
    %244 = vmatpush.msra.mxu0 %v135
    %245 = vmatpush.msra.mxu0 %v131
    %246 = vmatpush.msra.mxu0 %v127
    %247 = vmatpush.msra.mxu0 %v123
    %248 = vmatpush.msra.mxu0 %v119
    %249 = vmatmul.f32.gmra.mxu0 %v110
    %v250 = vpop.f32.mrf.mxu0
    %v251 = vadd.f32 %v185, %v250
    %252 = vmatmul.f32.gmra.mxu0 %v111
    %v253 = vpop.f32.mrf.mxu0
    %v254 = vadd.f32 %v185, %v253
    %255 = vmatmul.f32.gmra.mxu0 %v112
    %v256 = vpop.f32.mrf.mxu0
    %v257 = vadd.f32 %v185, %v256
    %258 = vmatmul.f32.gmra.mxu0 %v113
    %v259 = vpop.f32.mrf.mxu0
    %v260 = vadd.f32 %v185, %v259
    %261 = vmatmul.f32.gmra.mxu0 %v114
    %v262 = vpop.f32.mrf.mxu0
    %v263 = vadd.f32 %v185, %v262
    %264 = vmatmul.f32.gmra.mxu0 %v115
    %v265 = vpop.f32.mrf.mxu0
    %v266 = vadd.f32 %v185, %v265
    %267 = vmatmul.f32.gmra.mxu0 %v116
    %v268 = vpop.f32.mrf.mxu0
    %v269 = vadd.f32 %v185, %v268
    %270 = vmatmul.f32.gmra.mxu0 %v117
    %v271 = vpop.f32.mrf.mxu0
    %v272 = vadd.f32 %v185, %v271
    %273 = vdwg.mxu0
    %274 = vmatpush.msra.mxu0 %v180
    %275 = vmatpush.msra.mxu0 %v176
    %276 = vmatpush.msra.mxu0 %v172
    %277 = vmatpush.msra.mxu0 %v168
    %278 = vmatpush.msra.mxu0 %v164
    %279 = vmatpush.msra.mxu0 %v160
    %280 = vmatpush.msra.mxu0 %v156
    %281 = vmatpush.msra.mxu0 %v152
    %282 = vmatpush.msra.mxu0 %v148
    %283 = vmatpush.msra.mxu0 %v144
    %284 = vmatpush.msra.mxu0 %v140
    %285 = vmatpush.msra.mxu0 %v136
    %286 = vmatpush.msra.mxu0 %v132
    %287 = vmatpush.msra.mxu0 %v128
    %288 = vmatpush.msra.mxu0 %v124
    %289 = vmatpush.msra.mxu0 %v120
    %290 = vmatmul.f32.gmra.mxu0 %v110
    %v291 = vpop.f32.mrf.mxu0
    %v292 = vadd.f32 %v186, %v291
    %293 = vmatmul.f32.gmra.mxu0 %v111
    %v294 = vpop.f32.mrf.mxu0
    %v295 = vadd.f32 %v186, %v294
    %296 = vmatmul.f32.gmra.mxu0 %v112
    %v297 = vpop.f32.mrf.mxu0
    %v298 = vadd.f32 %v186, %v297
    %299 = vmatmul.f32.gmra.mxu0 %v113
    %v300 = vpop.f32.mrf.mxu0
    %v301 = vadd.f32 %v186, %v300
    %302 = vmatmul.f32.gmra.mxu0 %v114
    %v303 = vpop.f32.mrf.mxu0
    %v304 = vadd.f32 %v186, %v303
    %305 = vmatmul.f32.gmra.mxu0 %v115
    %v306 = vpop.f32.mrf.mxu0
    %v307 = vadd.f32 %v186, %v306
    %308 = vmatmul.f32.gmra.mxu0 %v116
    %v309 = vpop.f32.mrf.mxu0
    %v310 = vadd.f32 %v186, %v309
    %311 = vmatmul.f32.gmra.mxu0 %v117
    %v312 = vpop.f32.mrf.mxu0
    %v313 = vadd.f32 %v186, %v312
    %314 = vdwg.mxu0
    %315 = vmatpush.msra.mxu0 %v181
    %316 = vmatpush.msra.mxu0 %v177
    %317 = vmatpush.msra.mxu0 %v173
    %318 = vmatpush.msra.mxu0 %v169
    %319 = vmatpush.msra.mxu0 %v165
    %320 = vmatpush.msra.mxu0 %v161
    %321 = vmatpush.msra.mxu0 %v157
    %322 = vmatpush.msra.mxu0 %v153
    %323 = vmatpush.msra.mxu0 %v149
    %324 = vmatpush.msra.mxu0 %v145
    %325 = vmatpush.msra.mxu0 %v141
    %326 = vmatpush.msra.mxu0 %v137
    %327 = vmatpush.msra.mxu0 %v133
    %328 = vmatpush.msra.mxu0 %v129
    %329 = vmatpush.msra.mxu0 %v125
    %330 = vmatpush.msra.mxu0 %v121
    %331 = vmatmul.f32.gmra.mxu0 %v110
    %v332 = vpop.f32.mrf.mxu0
    %v333 = vadd.f32 %v187, %v332
    %334 = vmatmul.f32.gmra.mxu0 %v111
    %v335 = vpop.f32.mrf.mxu0
    %v336 = vadd.f32 %v187, %v335
    %337 = vmatmul.f32.gmra.mxu0 %v112
    %v338 = vpop.f32.mrf.mxu0
    %v339 = vadd.f32 %v187, %v338
    %340 = vmatmul.f32.gmra.mxu0 %v113
    %v341 = vpop.f32.mrf.mxu0
    %v342 = vadd.f32 %v187, %v341
    %343 = vmatmul.f32.gmra.mxu0 %v114
    %v344 = vpop.f32.mrf.mxu0
    %v345 = vadd.f32 %v187, %v344
    %346 = vmatmul.f32.gmra.mxu0 %v115
    %v347 = vpop.f32.mrf.mxu0
    %v348 = vadd.f32 %v187, %v347
    %349 = vmatmul.f32.gmra.mxu0 %v116
    %v350 = vpop.f32.mrf.mxu0
    %v351 = vadd.f32 %v187, %v350
    %352 = vmatmul.f32.gmra.mxu0 %v117
    %v353 = vpop.f32.mrf.mxu0
    %v354 = vadd.f32 %v187, %v353
    %355 = vdwg.mxu0
    %356 = vst [vmem:[#allocation2] sm:$0xff] %v210
    %357 = vst [vmem:[#allocation2 + $0x8] sm:$0xff] %v251
    %358 = vst [vmem:[#allocation2 + $0x10] sm:$0xff] %v292
    %359 = vst [vmem:[#allocation2 + $0x18] sm:$0xff] %v333
    %360 = vst [vmem:[#allocation2 + $0x20] sm:$0xff] %v213
    %361 = vst [vmem:[#allocation2 + $0x28] sm:$0xff] %v254
    %362 = vst [vmem:[#allocation2 + $0x30] sm:$0xff] %v295
    %363 = vst [vmem:[#allocation2 + $0x38] sm:$0xff] %v336
    %364 = vst [vmem:[#allocation2 + $0x40] sm:$0xff] %v216
    %365 = vst [vmem:[#allocation2 + $0x48] sm:$0xff] %v257
    %366 = vst [vmem:[#allocation2 + $0x50] sm:$0xff] %v298
    %367 = vst [vmem:[#allocation2 + $0x58] sm:$0xff] %v339
    %368 = vst [vmem:[#allocation2 + $0x60] sm:$0xff] %v219
    %369 = vst [vmem:[#allocation2 + $0x68] sm:$0xff] %v260
    %370 = vst [vmem:[#allocation2 + $0x70] sm:$0xff] %v301
    %371 = vst [vmem:[#allocation2 + $0x78] sm:$0xff] %v342
    %372 = vst [vmem:[#allocation2 + $0x80] sm:$0xff] %v222
    %373 = vst [vmem:[#allocation2 + $0x88] sm:$0xff] %v263
    %374 = vst [vmem:[#allocation2 + $0x90] sm:$0xff] %v304
    %375 = vst [vmem:[#allocation2 + $0x98] sm:$0xff] %v345
    %376 = vst [vmem:[#allocation2 + $0xa0] sm:$0xff] %v225
    %377 = vst [vmem:[#allocation2 + $0xa8] sm:$0xff] %v266
    %378 = vst [vmem:[#allocation2 + $0xb0] sm:$0xff] %v307
    %379 = vst [vmem:[#allocation2 + $0xb8] sm:$0xff] %v348
    %380 = vst [vmem:[#allocation2 + $0xc0] sm:$0xff] %v228
    %381 = vst [vmem:[#allocation2 + $0xc8] sm:$0xff] %v269
    %382 = vst [vmem:[#allocation2 + $0xd0] sm:$0xff] %v310
    %383 = vst [vmem:[#allocation2 + $0xd8] sm:$0xff] %v351
    %384 = vst [vmem:[#allocation2 + $0xe0] sm:$0xff] %v231
    %385 = vst [vmem:[#allocation2 + $0xe8] sm:$0xff] %v272
    %386 = vst [vmem:[#allocation2 + $0xf0] sm:$0xff] %v313
    %387 = vst [vmem:[#allocation2 + $0xf8] sm:$0xff] %v354
    %s388 = smul.u32 0, 4
    %s389 = smul.addr %s388, 8
    %s390 = scalar_lea.vmem [#allocation2], %s389
    %v391 = vld [vmem:[%s390] sm:$0xff]
    %v392 = vld [vmem:[%s390 + $0x8] sm:$0xff]
    %v393 = vld [vmem:[%s390 + $0x10] sm:$0xff]
    %v394 = vld [vmem:[%s390 + $0x18] sm:$0xff]
    %v395 = vld [vmem:[#allocation6] sm:$0xff]
    %v396 = vld [vmem:[#allocation6 + $0x8] sm:$0xff]
    %v397 = vld [vmem:[#allocation6 + $0x10] sm:$0xff]
    %v398 = vld [vmem:[#allocation6 + $0x18] sm:$0xff]
    %v399 = vld [vmem:[#allocation6 + $0x20] sm:$0xff]
    %v400 = vld [vmem:[#allocation6 + $0x28] sm:$0xff]
    %v401 = vld [vmem:[#allocation6 + $0x30] sm:$0xff]
    %v402 = vld [vmem:[#allocation6 + $0x38] sm:$0xff]
    %v403 = vld [vmem:[#allocation6 + $0x40] sm:$0xff]
    %v404 = vld [vmem:[#allocation6 + $0x48] sm:$0xff]
    %v405 = vld [vmem:[#allocation6 + $0x50] sm:$0xff]
    %v406 = vld [vmem:[#allocation6 + $0x58] sm:$0xff]
    %v407 = vld [vmem:[#allocation6 + $0x60] sm:$0xff]
    %v408 = vld [vmem:[#allocation6 + $0x68] sm:$0xff]
    %v409 = vld [vmem:[#allocation6 + $0x70] sm:$0xff]
    %v410 = vld [vmem:[#allocation6 + $0x78] sm:$0xff]
    %v411 = vld [vmem:[#allocation6 + $0x80] sm:$0xff]
    %v412 = vld [vmem:[#allocation6 + $0x88] sm:$0xff]
    %v413 = vld [vmem:[#allocation6 + $0x90] sm:$0xff]
    %v414 = vld [vmem:[#allocation6 + $0x98] sm:$0xff]
    %v415 = vld [vmem:[#allocation6 + $0xa0] sm:$0xff]
    %v416 = vld [vmem:[#allocation6 + $0xa8] sm:$0xff]
    %v417 = vld [vmem:[#allocation6 + $0xb0] sm:$0xff]
    %v418 = vld [vmem:[#allocation6 + $0xb8] sm:$0xff]
    %v419 = vld [vmem:[#allocation6 + $0xc0] sm:$0xff]
    %v420 = vld [vmem:[#allocation6 + $0xc8] sm:$0xff]
    %v421 = vld [vmem:[#allocation6 + $0xd0] sm:$0xff]
    %v422 = vld [vmem:[#allocation6 + $0xd8] sm:$0xff]
    %v423 = vld [vmem:[#allocation6 + $0xe0] sm:$0xff]
    %v424 = vld [vmem:[#allocation6 + $0xe8] sm:$0xff]
    %v425 = vld [vmem:[#allocation6 + $0xf0] sm:$0xff]
    %v426 = vld [vmem:[#allocation6 + $0xf8] sm:$0xff]
    %v427 = vld [vmem:[#allocation6 + $0x100] sm:$0xff]
    %v428 = vld [vmem:[#allocation6 + $0x108] sm:$0xff]
    %v429 = vld [vmem:[#allocation6 + $0x110] sm:$0xff]
    %v430 = vld [vmem:[#allocation6 + $0x118] sm:$0xff]
    %v431 = vld [vmem:[#allocation6 + $0x120] sm:$0xff]
    %v432 = vld [vmem:[#allocation6 + $0x128] sm:$0xff]
    %v433 = vld [vmem:[#allocation6 + $0x130] sm:$0xff]
    %v434 = vld [vmem:[#allocation6 + $0x138] sm:$0xff]
    %v435 = vld [vmem:[#allocation6 + $0x140] sm:$0xff]
    %v436 = vld [vmem:[#allocation6 + $0x148] sm:$0xff]
    %v437 = vld [vmem:[#allocation6 + $0x150] sm:$0xff]
    %v438 = vld [vmem:[#allocation6 + $0x158] sm:$0xff]
    %v439 = vld [vmem:[#allocation6 + $0x160] sm:$0xff]
    %v440 = vld [vmem:[#allocation6 + $0x168] sm:$0xff]
    %v441 = vld [vmem:[#allocation6 + $0x170] sm:$0xff]
    %v442 = vld [vmem:[#allocation6 + $0x178] sm:$0xff]
    %v443 = vld [vmem:[#allocation6 + $0x180] sm:$0xff]
    %v444 = vld [vmem:[#allocation6 + $0x188] sm:$0xff]
    %v445 = vld [vmem:[#allocation6 + $0x190] sm:$0xff]
    %v446 = vld [vmem:[#allocation6 + $0x198] sm:$0xff]
    %v447 = vld [vmem:[#allocation6 + $0x1a0] sm:$0xff]
    %v448 = vld [vmem:[#allocation6 + $0x1a8] sm:$0xff]
    %v449 = vld [vmem:[#allocation6 + $0x1b0] sm:$0xff]
    %v450 = vld [vmem:[#allocation6 + $0x1b8] sm:$0xff]
    %v451 = vld [vmem:[#allocation6 + $0x1c0] sm:$0xff]
    %v452 = vld [vmem:[#allocation6 + $0x1c8] sm:$0xff]
    %v453 = vld [vmem:[#allocation6 + $0x1d0] sm:$0xff]
    %v454 = vld [vmem:[#allocation6 + $0x1d8] sm:$0xff]
    %v455 = vld [vmem:[#allocation6 + $0x1e0] sm:$0xff]
    %v456 = vld [vmem:[#allocation6 + $0x1e8] sm:$0xff]
    %v457 = vld [vmem:[#allocation6 + $0x1f0] sm:$0xff]
    %v458 = vld [vmem:[#allocation6 + $0x1f8] sm:$0xff]
    %459 = vmatpush.msra.mxu0 %v455
    %460 = vmatpush.msra.mxu0 %v451
    %461 = vmatpush.msra.mxu0 %v447
    %462 = vmatpush.msra.mxu0 %v443
    %463 = vmatpush.msra.mxu0 %v439
    %464 = vmatpush.msra.mxu0 %v435
    %465 = vmatpush.msra.mxu0 %v431
    %466 = vmatpush.msra.mxu0 %v427
    %467 = vmatpush.msra.mxu0 %v423
    %468 = vmatpush.msra.mxu0 %v419
    %469 = vmatpush.msra.mxu0 %v415
    %470 = vmatpush.msra.mxu0 %v411
    %471 = vmatpush.msra.mxu0 %v407
    %472 = vmatpush.msra.mxu0 %v403
    %473 = vmatpush.msra.mxu0 %v399
    %474 = vmatpush.msra.mxu0 %v395
    %475 = vmatmul.f32.gmra.mxu0 0.0
    %v476 = vpop.f32.mrf.mxu0
    %v477 = vadd.f32 0.0, %v476
    %478 = vdwg.mxu0
    %479 = vmatpush.msra.mxu0 %v456
    %480 = vmatpush.msra.mxu0 %v452
    %481 = vmatpush.msra.mxu0 %v448
    %482 = vmatpush.msra.mxu0 %v444
    %483 = vmatpush.msra.mxu0 %v440
    %484 = vmatpush.msra.mxu0 %v436
    %485 = vmatpush.msra.mxu0 %v432
    %486 = vmatpush.msra.mxu0 %v428
    %487 = vmatpush.msra.mxu0 %v424
    %488 = vmatpush.msra.mxu0 %v420
    %489 = vmatpush.msra.mxu0 %v416
    %490 = vmatpush.msra.mxu0 %v412
    %491 = vmatpush.msra.mxu0 %v408
    %492 = vmatpush.msra.mxu0 %v404
    %493 = vmatpush.msra.mxu0 %v400
    %494 = vmatpush.msra.mxu0 %v396
    %495 = vmatmul.f32.gmra.mxu0 0.0
    %v496 = vpop.f32.mrf.mxu0
    %v497 = vadd.f32 0.0, %v496
    %498 = vdwg.mxu0
    %499 = vmatpush.msra.mxu0 %v457
    %500 = vmatpush.msra.mxu0 %v453
    %501 = vmatpush.msra.mxu0 %v449
    %502 = vmatpush.msra.mxu0 %v445
    %503 = vmatpush.msra.mxu0 %v441
    %504 = vmatpush.msra.mxu0 %v437
    %505 = vmatpush.msra.mxu0 %v433
    %506 = vmatpush.msra.mxu0 %v429
    %507 = vmatpush.msra.mxu0 %v425
    %508 = vmatpush.msra.mxu0 %v421
    %509 = vmatpush.msra.mxu0 %v417
    %510 = vmatpush.msra.mxu0 %v413
    %511 = vmatpush.msra.mxu0 %v409
    %512 = vmatpush.msra.mxu0 %v405
    %513 = vmatpush.msra.mxu0 %v401
    %514 = vmatpush.msra.mxu0 %v397
    %515 = vmatmul.f32.gmra.mxu0 0.0
    %v516 = vpop.f32.mrf.mxu0
    %v517 = vadd.f32 0.0, %v516
    %518 = vdwg.mxu0
    %519 = vmatpush.msra.mxu0 %v458
    %520 = vmatpush.msra.mxu0 %v454
    %521 = vmatpush.msra.mxu0 %v450
    %522 = vmatpush.msra.mxu0 %v446
    %523 = vmatpush.msra.mxu0 %v442
    %524 = vmatpush.msra.mxu0 %v438
    %525 = vmatpush.msra.mxu0 %v434
    %526 = vmatpush.msra.mxu0 %v430
    %527 = vmatpush.msra.mxu0 %v426
    %528 = vmatpush.msra.mxu0 %v422
    %529 = vmatpush.msra.mxu0 %v418
    %530 = vmatpush.msra.mxu0 %v414
    %531 = vmatpush.msra.mxu0 %v410
    %532 = vmatpush.msra.mxu0 %v406
    %533 = vmatpush.msra.mxu0 %v402
    %534 = vmatpush.msra.mxu0 %v398
    %535 = vmatmul.f32.gmra.mxu0 0.0
    %v536 = vpop.f32.mrf.mxu0
    %v537 = vadd.f32 0.0, %v536
    %538 = vdwg.mxu0
    %v539 = vadd.f32 %v391, %v477
    %v540 = vadd.f32 %v392, %v497
    %v541 = vadd.f32 %v393, %v517
    %v542 = vadd.f32 %v394, %v537
    %v543 = vxor.u32 %v539, 2147483648
    %v544 = vxor.u32 %v540, 2147483648
    %v545 = vxor.u32 %v541, 2147483648
    %v546 = vmul.f32 %v543, 1.442695
    %v547 = vpow.pop %v546
    %v548 = vmul.f32 %v544, 1.442695
    %v549 = vpow.pop %v548
    %v550 = vmul.f32 %v545, 1.442695
    %v551 = vpow.pop %v550
    %v552 = vadd.f32 %v547, 1.0
    %v553 = vadd.f32 %v549, 1.0
    %v554 = vadd.f32 %v551, 1.0
    %v555 = vrcp.pop %v552
    %v556 = vmul.f32 %v552, %v555
    %v557 = vsub.f32 1.0, %v556
    %v558 = vmul.f32 %v555, %v557
    %v559 = vadd.f32 %v555, %v558
    %vm560 = vweird.f32 %v552
    %vm561 = vweird.f32 %v555
    %vm562 = vmor %vm560, %vm561
    %v563 = vsel %vm562, %v555, %v559
    %v564 = vand.u32 2147483647, %v552
    %vm565 = vcmp.eq.f32.partialorder %v564, 8.507059e+37
    %v566 = vand.u32 %v552, 2147483648
    %v567 = vor.u32 1.1754944e-38, %v566
    %v568 = vsel %vm565, %v567, %v563
    %v569 = vmul.f32 1.0, %v568
    %v570 = vrcp.pop %v553
    %v571 = vmul.f32 %v553, %v570
    %v572 = vsub.f32 1.0, %v571
    %v573 = vmul.f32 %v570, %v572
    %v574 = vadd.f32 %v570, %v573
    %vm575 = vweird.f32 %v553
    %vm576 = vweird.f32 %v570
    %vm577 = vmor %vm575, %vm576
    %v578 = vsel %vm577, %v570, %v574
    %v579 = vand.u32 2147483647, %v553
    %vm580 = vcmp.eq.f32.partialorder %v579, 8.507059e+37
    %v581 = vand.u32 %v553, 2147483648
    %v582 = vor.u32 1.1754944e-38, %v581
    %v583 = vsel %vm580, %v582, %v578
    %v584 = vmul.f32 1.0, %v583
    %v585 = vrcp.pop %v554
    %v586 = vmul.f32 %v554, %v585
    %v587 = vsub.f32 1.0, %v586
    %v588 = vmul.f32 %v585, %v587
    %v589 = vadd.f32 %v585, %v588
    %vm590 = vweird.f32 %v554
    %vm591 = vweird.f32 %v585
    %vm592 = vmor %vm590, %vm591
    %v593 = vsel %vm592, %v585, %v589
    %v594 = vand.u32 2147483647, %v554
    %vm595 = vcmp.eq.f32.partialorder %v594, 8.507059e+37
    %v596 = vand.u32 %v554, 2147483648
    %v597 = vor.u32 1.1754944e-38, %v596
    %v598 = vsel %vm595, %v597, %v593
    %v599 = vmul.f32 1.0, %v598
    %v600 = vtanh.pop %v542
    %v601 = vmul.f32 %v584, 0.0
    %v602 = vmul.f32 %v569, %v600
    %v603 = vadd.f32 %v601, %v602
    %v604 = vtanh.pop %v603
    %v605 = vmul.f32 %v599, %v604
    %606 = vst [vmem:[#allocation3] sm:$0xff] %v605
    %s607 = smul.u32 1, 4
    %s608 = smul.addr %s607, 8
    %s609 = scalar_lea.vmem [#allocation2], %s608
    %v610 = vld [vmem:[%s609] sm:$0xff]
    %v611 = vld [vmem:[%s609 + $0x8] sm:$0xff]
    %v612 = vld [vmem:[%s609 + $0x10] sm:$0xff]
    %v613 = vld [vmem:[%s609 + $0x18] sm:$0xff]
    %v614 = vld [vmem:[#allocation6] sm:$0xff]
    %v615 = vld [vmem:[#allocation6 + $0x8] sm:$0xff]
    %v616 = vld [vmem:[#allocation6 + $0x10] sm:$0xff]
    %v617 = vld [vmem:[#allocation6 + $0x18] sm:$0xff]
    %v618 = vld [vmem:[#allocation6 + $0x20] sm:$0xff]
    %v619 = vld [vmem:[#allocation6 + $0x28] sm:$0xff]
    %v620 = vld [vmem:[#allocation6 + $0x30] sm:$0xff]
    %v621 = vld [vmem:[#allocation6 + $0x38] sm:$0xff]
    %v622 = vld [vmem:[#allocation6 + $0x40] sm:$0xff]
    %v623 = vld [vmem:[#allocation6 + $0x48] sm:$0xff]
    %v624 = vld [vmem:[#allocation6 + $0x50] sm:$0xff]
    %v625 = vld [vmem:[#allocation6 + $0x58] sm:$0xff]
    %v626 = vld [vmem:[#allocation6 + $0x60] sm:$0xff]
    %v627 = vld [vmem:[#allocation6 + $0x68] sm:$0xff]
    %v628 = vld [vmem:[#allocation6 + $0x70] sm:$0xff]
    %v629 = vld [vmem:[#allocation6 + $0x78] sm:$0xff]
    %v630 = vld [vmem:[#allocation6 + $0x80] sm:$0xff]
    %v631 = vld [vmem:[#allocation6 + $0x88] sm:$0xff]
    %v632 = vld [vmem:[#allocation6 + $0x90] sm:$0xff]
    %v633 = vld [vmem:[#allocation6 + $0x98] sm:$0xff]
    %v634 = vld [vmem:[#allocation6 + $0xa0] sm:$0xff]
    %v635 = vld [vmem:[#allocation6 + $0xa8] sm:$0xff]
    %v636 = vld [vmem:[#allocation6 + $0xb0] sm:$0xff]
    %v637 = vld [vmem:[#allocation6 + $0xb8] sm:$0xff]
    %v638 = vld [vmem:[#allocation6 + $0xc0] sm:$0xff]
    %v639 = vld [vmem:[#allocation6 + $0xc8] sm:$0xff]
    %v640 = vld [vmem:[#allocation6 + $0xd0] sm:$0xff]
    %v641 = vld [vmem:[#allocation6 + $0xd8] sm:$0xff]
    %v642 = vld [vmem:[#allocation6 + $0xe0] sm:$0xff]
    %v643 = vld [vmem:[#allocation6 + $0xe8] sm:$0xff]
    %v644 = vld [vmem:[#allocation6 + $0xf0] sm:$0xff]
    %v645 = vld [vmem:[#allocation6 + $0xf8] sm:$0xff]
    %v646 = vld [vmem:[#allocation6 + $0x100] sm:$0xff]
    %v647 = vld [vmem:[#allocation6 + $0x108] sm:$0xff]
    %v648 = vld [vmem:[#allocation6 + $0x110] sm:$0xff]
    %v649 = vld [vmem:[#allocation6 + $0x118] sm:$0xff]
    %v650 = vld [vmem:[#allocation6 + $0x120] sm:$0xff]
    %v651 = vld [vmem:[#allocation6 + $0x128] sm:$0xff]
    %v652 = vld [vmem:[#allocation6 + $0x130] sm:$0xff]
    %v653 = vld [vmem:[#allocation6 + $0x138] sm:$0xff]
    %v654 = vld [vmem:[#allocation6 + $0x140] sm:$0xff]
    %v655 = vld [vmem:[#allocation6 + $0x148] sm:$0xff]
    %v656 = vld [vmem:[#allocation6 + $0x150] sm:$0xff]
    %v657 = vld [vmem:[#allocation6 + $0x158] sm:$0xff]
    %v658 = vld [vmem:[#allocation6 + $0x160] sm:$0xff]
    %v659 = vld [vmem:[#allocation6 + $0x168] sm:$0xff]
    %v660 = vld [vmem:[#allocation6 + $0x170] sm:$0xff]
    %v661 = vld [vmem:[#allocation6 + $0x178] sm:$0xff]
    %v662 = vld [vmem:[#allocation6 + $0x180] sm:$0xff]
    %v663 = vld [vmem:[#allocation6 + $0x188] sm:$0xff]
    %v664 = vld [vmem:[#allocation6 + $0x190] sm:$0xff]
    %v665 = vld [vmem:[#allocation6 + $0x198] sm:$0xff]
    %v666 = vld [vmem:[#allocation6 + $0x1a0] sm:$0xff]
    %v667 = vld [vmem:[#allocation6 + $0x1a8] sm:$0xff]
    %v668 = vld [vmem:[#allocation6 + $0x1b0] sm:$0xff]
    %v669 = vld [vmem:[#allocation6 + $0x1b8] sm:$0xff]
    %v670 = vld [vmem:[#allocation6 + $0x1c0] sm:$0xff]
    %v671 = vld [vmem:[#allocation6 + $0x1c8] sm:$0xff]
    %v672 = vld [vmem:[#allocation6 + $0x1d0] sm:$0xff]
    %v673 = vld [vmem:[#allocation6 + $0x1d8] sm:$0xff]
    %v674 = vld [vmem:[#allocation6 + $0x1e0] sm:$0xff]
    %v675 = vld [vmem:[#allocation6 + $0x1e8] sm:$0xff]
    %v676 = vld [vmem:[#allocation6 + $0x1f0] sm:$0xff]
    %v677 = vld [vmem:[#allocation6 + $0x1f8] sm:$0xff]
    %678 = vmatpush.msra.mxu0 %v674
    %679 = vmatpush.msra.mxu0 %v670
    %680 = vmatpush.msra.mxu0 %v666
    %681 = vmatpush.msra.mxu0 %v662
    %682 = vmatpush.msra.mxu0 %v658
    %683 = vmatpush.msra.mxu0 %v654
    %684 = vmatpush.msra.mxu0 %v650
    %685 = vmatpush.msra.mxu0 %v646
    %686 = vmatpush.msra.mxu0 %v642
    %687 = vmatpush.msra.mxu0 %v638
    %688 = vmatpush.msra.mxu0 %v634
    %689 = vmatpush.msra.mxu0 %v630
    %690 = vmatpush.msra.mxu0 %v626
    %691 = vmatpush.msra.mxu0 %v622
    %692 = vmatpush.msra.mxu0 %v618
    %693 = vmatpush.msra.mxu0 %v614
    %694 = vmatmul.f32.gmra.mxu0 %v605
    %v695 = vpop.f32.mrf.mxu0
    %v696 = vadd.f32 0.0, %v695
    %697 = vdwg.mxu0
    %698 = vmatpush.msra.mxu0 %v675
    %699 = vmatpush.msra.mxu0 %v671
    %700 = vmatpush.msra.mxu0 %v667
    %701 = vmatpush.msra.mxu0 %v663
    %702 = vmatpush.msra.mxu0 %v659
    %703 = vmatpush.msra.mxu0 %v655
    %704 = vmatpush.msra.mxu0 %v651
    %705 = vmatpush.msra.mxu0 %v647
    %706 = vmatpush.msra.mxu0 %v643
    %707 = vmatpush.msra.mxu0 %v639
    %708 = vmatpush.msra.mxu0 %v635
    %709 = vmatpush.msra.mxu0 %v631
    %710 = vmatpush.msra.mxu0 %v627
    %711 = vmatpush.msra.mxu0 %v623
    %712 = vmatpush.msra.mxu0 %v619
    %713 = vmatpush.msra.mxu0 %v615
    %714 = vmatmul.f32.gmra.mxu0 %v605
    %v715 = vpop.f32.mrf.mxu0
    %v716 = vadd.f32 0.0, %v715
    %717 = vdwg.mxu0
    %718 = vmatpush.msra.mxu0 %v676
    %719 = vmatpush.msra.mxu0 %v672
    %720 = vmatpush.msra.mxu0 %v668
    %721 = vmatpush.msra.mxu0 %v664
    %722 = vmatpush.msra.mxu0 %v660
    %723 = vmatpush.msra.mxu0 %v656
    %724 = vmatpush.msra.mxu0 %v652
    %725 = vmatpush.msra.mxu0 %v648
    %726 = vmatpush.msra.mxu0 %v644
    %727 = vmatpush.msra.mxu0 %v640
    %728 = vmatpush.msra.mxu0 %v636
    %729 = vmatpush.msra.mxu0 %v632
    %730 = vmatpush.msra.mxu0 %v628
    %731 = vmatpush.msra.mxu0 %v624
    %732 = vmatpush.msra.mxu0 %v620
    %733 = vmatpush.msra.mxu0 %v616
    %734 = vmatmul.f32.gmra.mxu0 %v605
    %v735 = vpop.f32.mrf.mxu0
    %v736 = vadd.f32 0.0, %v735
    %737 = vdwg.mxu0
    %738 = vmatpush.msra.mxu0 %v677
    %739 = vmatpush.msra.mxu0 %v673
    %740 = vmatpush.msra.mxu0 %v669
    %741 = vmatpush.msra.mxu0 %v665
    %742 = vmatpush.msra.mxu0 %v661
    %743 = vmatpush.msra.mxu0 %v657
    %744 = vmatpush.msra.mxu0 %v653
    %745 = vmatpush.msra.mxu0 %v649
    %746 = vmatpush.msra.mxu0 %v645
    %747 = vmatpush.msra.mxu0 %v641
    %748 = vmatpush.msra.mxu0 %v637
    %749 = vmatpush.msra.mxu0 %v633
    %750 = vmatpush.msra.mxu0 %v629
    %751 = vmatpush.msra.mxu0 %v625
    %752 = vmatpush.msra.mxu0 %v621
    %753 = vmatpush.msra.mxu0 %v617
    %754 = vmatmul.f32.gmra.mxu0 %v605
    %v755 = vpop.f32.mrf.mxu0
    %v756 = vadd.f32 0.0, %v755
    %757 = vdwg.mxu0
    %v758 = vadd.f32 %v610, %v696
    %v759 = vadd.f32 %v611, %v716
    %v760 = vadd.f32 %v612, %v736
    %v761 = vadd.f32 %v613, %v756
    %v762 = vxor.u32 %v758, 2147483648
    %v763 = vxor.u32 %v759, 2147483648
    %v764 = vxor.u32 %v760, 2147483648
    %v765 = vmul.f32 %v762, 1.442695
    %v766 = vpow.pop %v765
    %v767 = vmul.f32 %v763, 1.442695
    %v768 = vpow.pop %v767
    %v769 = vmul.f32 %v764, 1.442695
    %v770 = vpow.pop %v769
    %v771 = vadd.f32 %v766, 1.0
    %v772 = vadd.f32 %v768, 1.0
    %v773 = vadd.f32 %v770, 1.0
    %v774 = vrcp.pop %v771
    %v775 = vmul.f32 %v771, %v774
    %v776 = vsub.f32 1.0, %v775
    %v777 = vmul.f32 %v774, %v776
    %v778 = vadd.f32 %v774, %v777
    %vm779 = vweird.f32 %v771
    %vm780 = vweird.f32 %v774
    %vm781 = vmor %vm779, %vm780
    %v782 = vsel %vm781, %v774, %v778
    %v783 = vand.u32 2147483647, %v771
    %vm784 = vcmp.eq.f32.partialorder %v783, 8.507059e+37
    %v785 = vand.u32 %v771, 2147483648
    %v786 = vor.u32 1.1754944e-38, %v785
    %v787 = vsel %vm784, %v786, %v782
    %v788 = vmul.f32 1.0, %v787
    %v789 = vrcp.pop %v772
    %v790 = vmul.f32 %v772, %v789
    %v791 = vsub.f32 1.0, %v790
    %v792 = vmul.f32 %v789, %v791
    %v793 = vadd.f32 %v789, %v792
    %vm794 = vweird.f32 %v772
    %vm795 = vweird.f32 %v789
    %vm796 = vmor %vm794, %vm795
    %v797 = vsel %vm796, %v789, %v793
    %v798 = vand.u32 2147483647, %v772
    %vm799 = vcmp.eq.f32.partialorder %v798, 8.507059e+37
    %v800 = vand.u32 %v772, 2147483648
    %v801 = vor.u32 1.1754944e-38, %v800
    %v802 = vsel %vm799, %v801, %v797
    %v803 = vmul.f32 1.0, %v802
    %v804 = vrcp.pop %v773
    %v805 = vmul.f32 %v773, %v804
    %v806 = vsub.f32 1.0, %v805
    %v807 = vmul.f32 %v804, %v806
    %v808 = vadd.f32 %v804, %v807
    %vm809 = vweird.f32 %v773
    %vm810 = vweird.f32 %v804
    %vm811 = vmor %vm809, %vm810
    %v812 = vsel %vm811, %v804, %v808
    %v813 = vand.u32 2147483647, %v773
    %vm814 = vcmp.eq.f32.partialorder %v813, 8.507059e+37
    %v815 = vand.u32 %v773, 2147483648
    %v816 = vor.u32 1.1754944e-38, %v815
    %v817 = vsel %vm814, %v816, %v812
    %v818 = vmul.f32 1.0, %v817
    %v819 = vtanh.pop %v761
    %v820 = vmul.f32 %v803, %v603
    %v821 = vmul.f32 %v788, %v819
    %v822 = vadd.f32 %v820, %v821
    %v823 = vtanh.pop %v822
    %v824 = vmul.f32 %v818, %v823
    %s825 = scalar_lea.vmem [#allocation3], 8
    %826 = vst [vmem:[%s825] sm:$0xff] %v824
    %s827 = smul.u32 2, 4
    %s828 = smul.addr %s827, 8
    %s829 = scalar_lea.vmem [#allocation2], %s828
    %v830 = vld [vmem:[%s829] sm:$0xff]
    %v831 = vld [vmem:[%s829 + $0x8] sm:$0xff]
    %v832 = vld [vmem:[%s829 + $0x10] sm:$0xff]
    %v833 = vld [vmem:[%s829 + $0x18] sm:$0xff]
    %v834 = vld [vmem:[#allocation6] sm:$0xff]
    %v835 = vld [vmem:[#allocation6 + $0x8] sm:$0xff]
    %v836 = vld [vmem:[#allocation6 + $0x10] sm:$0xff]
    %v837 = vld [vmem:[#allocation6 + $0x18] sm:$0xff]
    %v838 = vld [vmem:[#allocation6 + $0x20] sm:$0xff]
    %v839 = vld [vmem:[#allocation6 + $0x28] sm:$0xff]
    %v840 = vld [vmem:[#allocation6 + $0x30] sm:$0xff]
    %v841 = vld [vmem:[#allocation6 + $0x38] sm:$0xff]
    %v842 = vld [vmem:[#allocation6 + $0x40] sm:$0xff]
    %v843 = vld [vmem:[#allocation6 + $0x48] sm:$0xff]
    %v844 = vld [vmem:[#allocation6 + $0x50] sm:$0xff]
    %v845 = vld [vmem:[#allocation6 + $0x58] sm:$0xff]
    %v846 = vld [vmem:[#allocation6 + $0x60] sm:$0xff]
    %v847 = vld [vmem:[#allocation6 + $0x68] sm:$0xff]
    %v848 = vld [vmem:[#allocation6 + $0x70] sm:$0xff]
    %v849 = vld [vmem:[#allocation6 + $0x78] sm:$0xff]
    %v850 = vld [vmem:[#allocation6 + $0x80] sm:$0xff]
    %v851 = vld [vmem:[#allocation6 + $0x88] sm:$0xff]
    %v852 = vld [vmem:[#allocation6 + $0x90] sm:$0xff]
    %v853 = vld [vmem:[#allocation6 + $0x98] sm:$0xff]
    %v854 = vld [vmem:[#allocation6 + $0xa0] sm:$0xff]
    %v855 = vld [vmem:[#allocation6 + $0xa8] sm:$0xff]
    %v856 = vld [vmem:[#allocation6 + $0xb0] sm:$0xff]
    %v857 = vld [vmem:[#allocation6 + $0xb8] sm:$0xff]
    %v858 = vld [vmem:[#allocation6 + $0xc0] sm:$0xff]
    %v859 = vld [vmem:[#allocation6 + $0xc8] sm:$0xff]
    %v860 = vld [vmem:[#allocation6 + $0xd0] sm:$0xff]
    %v861 = vld [vmem:[#allocation6 + $0xd8] sm:$0xff]
    %v862 = vld [vmem:[#allocation6 + $0xe0] sm:$0xff]
    %v863 = vld [vmem:[#allocation6 + $0xe8] sm:$0xff]
    %v864 = vld [vmem:[#allocation6 + $0xf0] sm:$0xff]
    %v865 = vld [vmem:[#allocation6 + $0xf8] sm:$0xff]
    %v866 = vld [vmem:[#allocation6 + $0x100] sm:$0xff]
    %v867 = vld [vmem:[#allocation6 + $0x108] sm:$0xff]
    %v868 = vld [vmem:[#allocation6 + $0x110] sm:$0xff]
    %v869 = vld [vmem:[#allocation6 + $0x118] sm:$0xff]
    %v870 = vld [vmem:[#allocation6 + $0x120] sm:$0xff]
    %v871 = vld [vmem:[#allocation6 + $0x128] sm:$0xff]
    %v872 = vld [vmem:[#allocation6 + $0x130] sm:$0xff]
    %v873 = vld [vmem:[#allocation6 + $0x138] sm:$0xff]
    %v874 = vld [vmem:[#allocation6 + $0x140] sm:$0xff]
    %v875 = vld [vmem:[#allocation6 + $0x148] sm:$0xff]
    %v876 = vld [vmem:[#allocation6 + $0x150] sm:$0xff]
    %v877 = vld [vmem:[#allocation6 + $0x158] sm:$0xff]
    %v878 = vld [vmem:[#allocation6 + $0x160] sm:$0xff]
    %v879 = vld [vmem:[#allocation6 + $0x168] sm:$0xff]
    %v880 = vld [vmem:[#allocation6 + $0x170] sm:$0xff]
    %v881 = vld [vmem:[#allocation6 + $0x178] sm:$0xff]
    %v882 = vld [vmem:[#allocation6 + $0x180] sm:$0xff]
    %v883 = vld [vmem:[#allocation6 + $0x188] sm:$0xff]
    %v884 = vld [vmem:[#allocation6 + $0x190] sm:$0xff]
    %v885 = vld [vmem:[#allocation6 + $0x198] sm:$0xff]
    %v886 = vld [vmem:[#allocation6 + $0x1a0] sm:$0xff]
    %v887 = vld [vmem:[#allocation6 + $0x1a8] sm:$0xff]
    %v888 = vld [vmem:[#allocation6 + $0x1b0] sm:$0xff]
    %v889 = vld [vmem:[#allocation6 + $0x1b8] sm:$0xff]
    %v890 = vld [vmem:[#allocation6 + $0x1c0] sm:$0xff]
    %v891 = vld [vmem:[#allocation6 + $0x1c8] sm:$0xff]
    %v892 = vld [vmem:[#allocation6 + $0x1d0] sm:$0xff]
    %v893 = vld [vmem:[#allocation6 + $0x1d8] sm:$0xff]
    %v894 = vld [vmem:[#allocation6 + $0x1e0] sm:$0xff]
    %v895 = vld [vmem:[#allocation6 + $0x1e8] sm:$0xff]
    %v896 = vld [vmem:[#allocation6 + $0x1f0] sm:$0xff]
    %v897 = vld [vmem:[#allocation6 + $0x1f8] sm:$0xff]
    %898 = vmatpush.msra.mxu0 %v894
    %899 = vmatpush.msra.mxu0 %v890
    %900 = vmatpush.msra.mxu0 %v886
    %901 = vmatpush.msra.mxu0 %v882
    %902 = vmatpush.msra.mxu0 %v878
    %903 = vmatpush.msra.mxu0 %v874
    %904 = vmatpush.msra.mxu0 %v870
    %905 = vmatpush.msra.mxu0 %v866
    %906 = vmatpush.msra.mxu0 %v862
    %907 = vmatpush.msra.mxu0 %v858
    %908 = vmatpush.msra.mxu0 %v854
    %909 = vmatpush.msra.mxu0 %v850
    %910 = vmatpush.msra.mxu0 %v846
    %911 = vmatpush.msra.mxu0 %v842
    %912 = vmatpush.msra.mxu0 %v838
    %913 = vmatpush.msra.mxu0 %v834
    %914 = vmatmul.f32.gmra.mxu0 %v824
    %v915 = vpop.f32.mrf.mxu0
    %v916 = vadd.f32 0.0, %v915
    %917 = vdwg.mxu0
    %918 = vmatpush.msra.mxu0 %v895
    %919 = vmatpush.msra.mxu0 %v891
    %920 = vmatpush.msra.mxu0 %v887
    %921 = vmatpush.msra.mxu0 %v883
    %922 = vmatpush.msra.mxu0 %v879
    %923 = vmatpush.msra.mxu0 %v875
    %924 = vmatpush.msra.mxu0 %v871
    %925 = vmatpush.msra.mxu0 %v867
    %926 = vmatpush.msra.mxu0 %v863
    %927 = vmatpush.msra.mxu0 %v859
    %928 = vmatpush.msra.mxu0 %v855
    %929 = vmatpush.msra.mxu0 %v851
    %930 = vmatpush.msra.mxu0 %v847
    %931 = vmatpush.msra.mxu0 %v843
    %932 = vmatpush.msra.mxu0 %v839
    %933 = vmatpush.msra.mxu0 %v835
    %934 = vmatmul.f32.gmra.mxu0 %v824
    %v935 = vpop.f32.mrf.mxu0
    %v936 = vadd.f32 0.0, %v935
    %937 = vdwg.mxu0
    %938 = vmatpush.msra.mxu0 %v896
    %939 = vmatpush.msra.mxu0 %v892
    %940 = vmatpush.msra.mxu0 %v888
    %941 = vmatpush.msra.mxu0 %v884
    %942 = vmatpush.msra.mxu0 %v880
    %943 = vmatpush.msra.mxu0 %v876
    %944 = vmatpush.msra.mxu0 %v872
    %945 = vmatpush.msra.mxu0 %v868
    %946 = vmatpush.msra.mxu0 %v864
    %947 = vmatpush.msra.mxu0 %v860
    %948 = vmatpush.msra.mxu0 %v856
    %949 = vmatpush.msra.mxu0 %v852
    %950 = vmatpush.msra.mxu0 %v848
    %951 = vmatpush.msra.mxu0 %v844
    %952 = vmatpush.msra.mxu0 %v840
    %953 = vmatpush.msra.mxu0 %v836
    %954 = vmatmul.f32.gmra.mxu0 %v824
    %v955 = vpop.f32.mrf.mxu0
    %v956 = vadd.f32 0.0, %v955
    %957 = vdwg.mxu0
    %958 = vmatpush.msra.mxu0 %v897
    %959 = vmatpush.msra.mxu0 %v893
    %960 = vmatpush.msra.mxu0 %v889
    %961 = vmatpush.msra.mxu0 %v885
    %962 = vmatpush.msra.mxu0 %v881
    %963 = vmatpush.msra.mxu0 %v877
    %964 = vmatpush.msra.mxu0 %v873
    %965 = vmatpush.msra.mxu0 %v869
    %966 = vmatpush.msra.mxu0 %v865
    %967 = vmatpush.msra.mxu0 %v861
    %968 = vmatpush.msra.mxu0 %v857
    %969 = vmatpush.msra.mxu0 %v853
    %970 = vmatpush.msra.mxu0 %v849
    %971 = vmatpush.msra.mxu0 %v845
    %972 = vmatpush.msra.mxu0 %v841
    %973 = vmatpush.msra.mxu0 %v837
    %974 = vmatmul.f32.gmra.mxu0 %v824
    %v975 = vpop.f32.mrf.mxu0
    %v976 = vadd.f32 0.0, %v975
    %977 = vdwg.mxu0
    %v978 = vadd.f32 %v830, %v916
    %v979 = vadd.f32 %v831, %v936
    %v980 = vadd.f32 %v832, %v956
    %v981 = vadd.f32 %v833, %v976
    %v982 = vxor.u32 %v978, 2147483648
    %v983 = vxor.u32 %v979, 2147483648
    %v984 = vxor.u32 %v980, 2147483648
    %v985 = vmul.f32 %v982, 1.442695
    %v986 = vpow.pop %v985
    %v987 = vmul.f32 %v983, 1.442695
    %v988 = vpow.pop %v987
    %v989 = vmul.f32 %v984, 1.442695
    %v990 = vpow.pop %v989
    %v991 = vadd.f32 %v986, 1.0
    %v992 = vadd.f32 %v988, 1.0
    %v993 = vadd.f32 %v990, 1.0
    %v994 = vrcp.pop %v991
    %v995 = vmul.f32 %v991, %v994
    %v996 = vsub.f32 1.0, %v995
    %v997 = vmul.f32 %v994, %v996
    %v998 = vadd.f32 %v994, %v997
    %vm999 = vweird.f32 %v991
    %vm1000 = vweird.f32 %v994
    %vm1001 = vmor %vm999, %vm1000
    %v1002 = vsel %vm1001, %v994, %v998
    %v1003 = vand.u32 2147483647, %v991
    %vm1004 = vcmp.eq.f32.partialorder %v1003, 8.507059e+37
    %v1005 = vand.u32 %v991, 2147483648
    %v1006 = vor.u32 1.1754944e-38, %v1005
    %v1007 = vsel %vm1004, %v1006, %v1002
    %v1008 = vmul.f32 1.0, %v1007
    %v1009 = vrcp.pop %v992
    %v1010 = vmul.f32 %v992, %v1009
    %v1011 = vsub.f32 1.0, %v1010
    %v1012 = vmul.f32 %v1009, %v1011
    %v1013 = vadd.f32 %v1009, %v1012
    %vm1014 = vweird.f32 %v992
    %vm1015 = vweird.f32 %v1009
    %vm1016 = vmor %vm1014, %vm1015
    %v1017 = vsel %vm1016, %v1009, %v1013
    %v1018 = vand.u32 2147483647, %v992
    %vm1019 = vcmp.eq.f32.partialorder %v1018, 8.507059e+37
    %v1020 = vand.u32 %v992, 2147483648
    %v1021 = vor.u32 1.1754944e-38, %v1020
    %v1022 = vsel %vm1019, %v1021, %v1017
    %v1023 = vmul.f32 1.0, %v1022
    %v1024 = vrcp.pop %v993
    %v1025 = vmul.f32 %v993, %v1024
    %v1026 = vsub.f32 1.0, %v1025
    %v1027 = vmul.f32 %v1024, %v1026
    %v1028 = vadd.f32 %v1024, %v1027
    %vm1029 = vweird.f32 %v993
    %vm1030 = vweird.f32 %v1024
    %vm1031 = vmor %vm1029, %vm1030
    %v1032 = vsel %vm1031, %v1024, %v1028
    %v1033 = vand.u32 2147483647, %v993
    %vm1034 = vcmp.eq.f32.partialorder %v1033, 8.507059e+37
    %v1035 = vand.u32 %v993, 2147483648
    %v1036 = vor.u32 1.1754944e-38, %v1035
    %v1037 = vsel %vm1034, %v1036, %v1032
    %v1038 = vmul.f32 1.0, %v1037
    %v1039 = vtanh.pop %v981
    %v1040 = vmul.f32 %v1023, %v822
    %v1041 = vmul.f32 %v1008, %v1039
    %v1042 = vadd.f32 %v1040, %v1041
    %v1043 = vtanh.pop %v1042
    %v1044 = vmul.f32 %v1038, %v1043
    %s1045 = scalar_lea.vmem [#allocation3], 16
    %1046 = vst [vmem:[%s1045] sm:$0xff] %v1044
    %s1047 = smul.u32 3, 4
    %s1048 = smul.addr %s1047, 8
    %s1049 = scalar_lea.vmem [#allocation2], %s1048
    %v1050 = vld [vmem:[%s1049] sm:$0xff]
    %v1051 = vld [vmem:[%s1049 + $0x8] sm:$0xff]
    %v1052 = vld [vmem:[%s1049 + $0x10] sm:$0xff]
    %v1053 = vld [vmem:[%s1049 + $0x18] sm:$0xff]
    %v1054 = vld [vmem:[#allocation6] sm:$0xff]
    %v1055 = vld [vmem:[#allocation6 + $0x8] sm:$0xff]
    %v1056 = vld [vmem:[#allocation6 + $0x10] sm:$0xff]
    %v1057 = vld [vmem:[#allocation6 + $0x18] sm:$0xff]
    %v1058 = vld [vmem:[#allocation6 + $0x20] sm:$0xff]
    %v1059 = vld [vmem:[#allocation6 + $0x28] sm:$0xff]
    %v1060 = vld [vmem:[#allocation6 + $0x30] sm:$0xff]
    %v1061 = vld [vmem:[#allocation6 + $0x38] sm:$0xff]
    %v1062 = vld [vmem:[#allocation6 + $0x40] sm:$0xff]
    %v1063 = vld [vmem:[#allocation6 + $0x48] sm:$0xff]
    %v1064 = vld [vmem:[#allocation6 + $0x50] sm:$0xff]
    %v1065 = vld [vmem:[#allocation6 + $0x58] sm:$0xff]
    %v1066 = vld [vmem:[#allocation6 + $0x60] sm:$0xff]
    %v1067 = vld [vmem:[#allocation6 + $0x68] sm:$0xff]
    %v1068 = vld [vmem:[#allocation6 + $0x70] sm:$0xff]
    %v1069 = vld [vmem:[#allocation6 + $0x78] sm:$0xff]
    %v1070 = vld [vmem:[#allocation6 + $0x80] sm:$0xff]
    %v1071 = vld [vmem:[#allocation6 + $0x88] sm:$0xff]
    %v1072 = vld [vmem:[#allocation6 + $0x90] sm:$0xff]
    %v1073 = vld [vmem:[#allocation6 + $0x98] sm:$0xff]
    %v1074 = vld [vmem:[#allocation6 + $0xa0] sm:$0xff]
    %v1075 = vld [vmem:[#allocation6 + $0xa8] sm:$0xff]
    %v1076 = vld [vmem:[#allocation6 + $0xb0] sm:$0xff]
    %v1077 = vld [vmem:[#allocation6 + $0xb8] sm:$0xff]
    %v1078 = vld [vmem:[#allocation6 + $0xc0] sm:$0xff]
    %v1079 = vld [vmem:[#allocation6 + $0xc8] sm:$0xff]
    %v1080 = vld [vmem:[#allocation6 + $0xd0] sm:$0xff]
    %v1081 = vld [vmem:[#allocation6 + $0xd8] sm:$0xff]
    %v1082 = vld [vmem:[#allocation6 + $0xe0] sm:$0xff]
    %v1083 = vld [vmem:[#allocation6 + $0xe8] sm:$0xff]
    %v1084 = vld [vmem:[#allocation6 + $0xf0] sm:$0xff]
    %v1085 = vld [vmem:[#allocation6 + $0xf8] sm:$0xff]
    %v1086 = vld [vmem:[#allocation6 + $0x100] sm:$0xff]
    %v1087 = vld [vmem:[#allocation6 + $0x108] sm:$0xff]
    %v1088 = vld [vmem:[#allocation6 + $0x110] sm:$0xff]
    %v1089 = vld [vmem:[#allocation6 + $0x118] sm:$0xff]
    %v1090 = vld [vmem:[#allocation6 + $0x120] sm:$0xff]
    %v1091 = vld [vmem:[#allocation6 + $0x128] sm:$0xff]
    %v1092 = vld [vmem:[#allocation6 + $0x130] sm:$0xff]
    %v1093 = vld [vmem:[#allocation6 + $0x138] sm:$0xff]
    %v1094 = vld [vmem:[#allocation6 + $0x140] sm:$0xff]
    %v1095 = vld [vmem:[#allocation6 + $0x148] sm:$0xff]
    %v1096 = vld [vmem:[#allocation6 + $0x150] sm:$0xff]
    %v1097 = vld [vmem:[#allocation6 + $0x158] sm:$0xff]
    %v1098 = vld [vmem:[#allocation6 + $0x160] sm:$0xff]
    %v1099 = vld [vmem:[#allocation6 + $0x168] sm:$0xff]
    %v1100 = vld [vmem:[#allocation6 + $0x170] sm:$0xff]
    %v1101 = vld [vmem:[#allocation6 + $0x178] sm:$0xff]
    %v1102 = vld [vmem:[#allocation6 + $0x180] sm:$0xff]
    %v1103 = vld [vmem:[#allocation6 + $0x188] sm:$0xff]
    %v1104 = vld [vmem:[#allocation6 + $0x190] sm:$0xff]
    %v1105 = vld [vmem:[#allocation6 + $0x198] sm:$0xff]
    %v1106 = vld [vmem:[#allocation6 + $0x1a0] sm:$0xff]
    %v1107 = vld [vmem:[#allocation6 + $0x1a8] sm:$0xff]
    %v1108 = vld [vmem:[#allocation6 + $0x1b0] sm:$0xff]
    %v1109 = vld [vmem:[#allocation6 + $0x1b8] sm:$0xff]
    %v1110 = vld [vmem:[#allocation6 + $0x1c0] sm:$0xff]
    %v1111 = vld [vmem:[#allocation6 + $0x1c8] sm:$0xff]
    %v1112 = vld [vmem:[#allocation6 + $0x1d0] sm:$0xff]
    %v1113 = vld [vmem:[#allocation6 + $0x1d8] sm:$0xff]
    %v1114 = vld [vmem:[#allocation6 + $0x1e0] sm:$0xff]
    %v1115 = vld [vmem:[#allocation6 + $0x1e8] sm:$0xff]
    %v1116 = vld [vmem:[#allocation6 + $0x1f0] sm:$0xff]
    %v1117 = vld [vmem:[#allocation6 + $0x1f8] sm:$0xff]
    %1118 = vmatpush.msra.mxu0 %v1114
    %1119 = vmatpush.msra.mxu0 %v1110
    %1120 = vmatpush.msra.mxu0 %v1106
    %1121 = vmatpush.msra.mxu0 %v1102
    %1122 = vmatpush.msra.mxu0 %v1098
    %1123 = vmatpush.msra.mxu0 %v1094
    %1124 = vmatpush.msra.mxu0 %v1090
    %1125 = vmatpush.msra.mxu0 %v1086
    %1126 = vmatpush.msra.mxu0 %v1082
    %1127 = vmatpush.msra.mxu0 %v1078
    %1128 = vmatpush.msra.mxu0 %v1074
    %1129 = vmatpush.msra.mxu0 %v1070
    %1130 = vmatpush.msra.mxu0 %v1066
    %1131 = vmatpush.msra.mxu0 %v1062
    %1132 = vmatpush.msra.mxu0 %v1058
    %1133 = vmatpush.msra.mxu0 %v1054
    %1134 = vmatmul.f32.gmra.mxu0 %v1044
    %v1135 = vpop.f32.mrf.mxu0
    %v1136 = vadd.f32 0.0, %v1135
    %1137 = vdwg.mxu0
    %1138 = vmatpush.msra.mxu0 %v1115
    %1139 = vmatpush.msra.mxu0 %v1111
    %1140 = vmatpush.msra.mxu0 %v1107
    %1141 = vmatpush.msra.mxu0 %v1103
    %1142 = vmatpush.msra.mxu0 %v1099
    %1143 = vmatpush.msra.mxu0 %v1095
    %1144 = vmatpush.msra.mxu0 %v1091
    %1145 = vmatpush.msra.mxu0 %v1087
    %1146 = vmatpush.msra.mxu0 %v1083
    %1147 = vmatpush.msra.mxu0 %v1079
    %1148 = vmatpush.msra.mxu0 %v1075
    %1149 = vmatpush.msra.mxu0 %v1071
    %1150 = vmatpush.msra.mxu0 %v1067
    %1151 = vmatpush.msra.mxu0 %v1063
    %1152 = vmatpush.msra.mxu0 %v1059
    %1153 = vmatpush.msra.mxu0 %v1055
    %1154 = vmatmul.f32.gmra.mxu0 %v1044
    %v1155 = vpop.f32.mrf.mxu0
    %v1156 = vadd.f32 0.0, %v1155
    %1157 = vdwg.mxu0
    %1158 = vmatpush.msra.mxu0 %v1116
    %1159 = vmatpush.msra.mxu0 %v1112
    %1160 = vmatpush.msra.mxu0 %v1108
    %1161 = vmatpush.msra.mxu0 %v1104
    %1162 = vmatpush.msra.mxu0 %v1100
    %1163 = vmatpush.msra.mxu0 %v1096
    %1164 = vmatpush.msra.mxu0 %v1092
    %1165 = vmatpush.msra.mxu0 %v1088
    %1166 = vmatpush.msra.mxu0 %v1084
    %1167 = vmatpush.msra.mxu0 %v1080
    %1168 = vmatpush.msra.mxu0 %v1076
    %1169 = vmatpush.msra.mxu0 %v1072
    %1170 = vmatpush.msra.mxu0 %v1068
    %1171 = vmatpush.msra.mxu0 %v1064
    %1172 = vmatpush.msra.mxu0 %v1060
    %1173 = vmatpush.msra.mxu0 %v1056
    %1174 = vmatmul.f32.gmra.mxu0 %v1044
    %v1175 = vpop.f32.mrf.mxu0
    %v1176 = vadd.f32 0.0, %v1175
    %1177 = vdwg.mxu0
    %1178 = vmatpush.msra.mxu0 %v1117
    %1179 = vmatpush.msra.mxu0 %v1113
    %1180 = vmatpush.msra.mxu0 %v1109
    %1181 = vmatpush.msra.mxu0 %v1105
    %1182 = vmatpush.msra.mxu0 %v1101
    %1183 = vmatpush.msra.mxu0 %v1097
    %1184 = vmatpush.msra.mxu0 %v1093
    %1185 = vmatpush.msra.mxu0 %v1089
    %1186 = vmatpush.msra.mxu0 %v1085
    %1187 = vmatpush.msra.mxu0 %v1081
    %1188 = vmatpush.msra.mxu0 %v1077
    %1189 = vmatpush.msra.mxu0 %v1073
    %1190 = vmatpush.msra.mxu0 %v1069
    %1191 = vmatpush.msra.mxu0 %v1065
    %1192 = vmatpush.msra.mxu0 %v1061
    %1193 = vmatpush.msra.mxu0 %v1057
    %1194 = vmatmul.f32.gmra.mxu0 %v1044
    %v1195 = vpop.f32.mrf.mxu0
    %v1196 = vadd.f32 0.0, %v1195
    %1197 = vdwg.mxu0
    %v1198 = vadd.f32 %v1050, %v1136
    %v1199 = vadd.f32 %v1051, %v1156
    %v1200 = vadd.f32 %v1052, %v1176
    %v1201 = vadd.f32 %v1053, %v1196
    %v1202 = vxor.u32 %v1198, 2147483648
    %v1203 = vxor.u32 %v1199, 2147483648
    %v1204 = vxor.u32 %v1200, 2147483648
    %v1205 = vmul.f32 %v1202, 1.442695
    %v1206 = vpow.pop %v1205
    %v1207 = vmul.f32 %v1203, 1.442695
    %v1208 = vpow.pop %v1207
    %v1209 = vmul.f32 %v1204, 1.442695
    %v1210 = vpow.pop %v1209
    %v1211 = vadd.f32 %v1206, 1.0
    %v1212 = vadd.f32 %v1208, 1.0
    %v1213 = vadd.f32 %v1210, 1.0
    %v1214 = vrcp.pop %v1211
    %v1215 = vmul.f32 %v1211, %v1214
    %v1216 = vsub.f32 1.0, %v1215
    %v1217 = vmul.f32 %v1214, %v1216
    %v1218 = vadd.f32 %v1214, %v1217
    %vm1219 = vweird.f32 %v1211
    %vm1220 = vweird.f32 %v1214
    %vm1221 = vmor %vm1219, %vm1220
    %v1222 = vsel %vm1221, %v1214, %v1218
    %v1223 = vand.u32 2147483647, %v1211
    %vm1224 = vcmp.eq.f32.partialorder %v1223, 8.507059e+37
    %v1225 = vand.u32 %v1211, 2147483648
    %v1226 = vor.u32 1.1754944e-38, %v1225
    %v1227 = vsel %vm1224, %v1226, %v1222
    %v1228 = vmul.f32 1.0, %v1227
    %v1229 = vrcp.pop %v1212
    %v1230 = vmul.f32 %v1212, %v1229
    %v1231 = vsub.f32 1.0, %v1230
    %v1232 = vmul.f32 %v1229, %v1231
    %v1233 = vadd.f32 %v1229, %v1232
    %vm1234 = vweird.f32 %v1212
    %vm1235 = vweird.f32 %v1229
    %vm1236 = vmor %vm1234, %vm1235
    %v1237 = vsel %vm1236, %v1229, %v1233
    %v1238 = vand.u32 2147483647, %v1212
    %vm1239 = vcmp.eq.f32.partialorder %v1238, 8.507059e+37
    %v1240 = vand.u32 %v1212, 2147483648
    %v1241 = vor.u32 1.1754944e-38, %v1240
    %v1242 = vsel %vm1239, %v1241, %v1237
    %v1243 = vmul.f32 1.0, %v1242
    %v1244 = vrcp.pop %v1213
    %v1245 = vmul.f32 %v1213, %v1244
    %v1246 = vsub.f32 1.0, %v1245
    %v1247 = vmul.f32 %v1244, %v1246
    %v1248 = vadd.f32 %v1244, %v1247
    %vm1249 = vweird.f32 %v1213
    %vm1250 = vweird.f32 %v1244
    %vm1251 = vmor %vm1249, %vm1250
    %v1252 = vsel %vm1251, %v1244, %v1248
    %v1253 = vand.u32 2147483647, %v1213
    %vm1254 = vcmp.eq.f32.partialorder %v1253, 8.507059e+37
    %v1255 = vand.u32 %v1213, 2147483648
    %v1256 = vor.u32 1.1754944e-38, %v1255
    %v1257 = vsel %vm1254, %v1256, %v1252
    %v1258 = vmul.f32 1.0, %v1257
    %v1259 = vtanh.pop %v1201
    %v1260 = vmul.f32 %v1243, %v1042
    %v1261 = vmul.f32 %v1228, %v1259
    %v1262 = vadd.f32 %v1260, %v1261
    %v1263 = vtanh.pop %v1262
    %v1264 = vmul.f32 %v1258, %v1263
    %s1265 = scalar_lea.vmem [#allocation3], 24
    %1266 = vst [vmem:[%s1265] sm:$0xff] %v1264
    %s1267 = smul.u32 4, 4
    %s1268 = smul.addr %s1267, 8
    %s1269 = scalar_lea.vmem [#allocation2], %s1268
    %v1270 = vld [vmem:[%s1269] sm:$0xff]
    %v1271 = vld [vmem:[%s1269 + $0x8] sm:$0xff]
    %v1272 = vld [vmem:[%s1269 + $0x10] sm:$0xff]
    %v1273 = vld [vmem:[%s1269 + $0x18] sm:$0xff]
    %v1274 = vld [vmem:[#allocation6] sm:$0xff]
    %v1275 = vld [vmem:[#allocation6 + $0x8] sm:$0xff]
    %v1276 = vld [vmem:[#allocation6 + $0x10] sm:$0xff]
    %v1277 = vld [vmem:[#allocation6 + $0x18] sm:$0xff]
    %v1278 = vld [vmem:[#allocation6 + $0x20] sm:$0xff]
    %v1279 = vld [vmem:[#allocation6 + $0x28] sm:$0xff]
    %v1280 = vld [vmem:[#allocation6 + $0x30] sm:$0xff]
    %v1281 = vld [vmem:[#allocation6 + $0x38] sm:$0xff]
    %v1282 = vld [vmem:[#allocation6 + $0x40] sm:$0xff]
    %v1283 = vld [vmem:[#allocation6 + $0x48] sm:$0xff]
    %v1284 = vld [vmem:[#allocation6 + $0x50] sm:$0xff]
    %v1285 = vld [vmem:[#allocation6 + $0x58] sm:$0xff]
    %v1286 = vld [vmem:[#allocation6 + $0x60] sm:$0xff]
    %v1287 = vld [vmem:[#allocation6 + $0x68] sm:$0xff]
    %v1288 = vld [vmem:[#allocation6 + $0x70] sm:$0xff]
    %v1289 = vld [vmem:[#allocation6 + $0x78] sm:$0xff]
    %v1290 = vld [vmem:[#allocation6 + $0x80] sm:$0xff]
    %v1291 = vld [vmem:[#allocation6 + $0x88] sm:$0xff]
    %v1292 = vld [vmem:[#allocation6 + $0x90] sm:$0xff]
    %v1293 = vld [vmem:[#allocation6 + $0x98] sm:$0xff]
    %v1294 = vld [vmem:[#allocation6 + $0xa0] sm:$0xff]
    %v1295 = vld [vmem:[#allocation6 + $0xa8] sm:$0xff]
    %v1296 = vld [vmem:[#allocation6 + $0xb0] sm:$0xff]
    %v1297 = vld [vmem:[#allocation6 + $0xb8] sm:$0xff]
    %v1298 = vld [vmem:[#allocation6 + $0xc0] sm:$0xff]
    %v1299 = vld [vmem:[#allocation6 + $0xc8] sm:$0xff]
    %v1300 = vld [vmem:[#allocation6 + $0xd0] sm:$0xff]
    %v1301 = vld [vmem:[#allocation6 + $0xd8] sm:$0xff]
    %v1302 = vld [vmem:[#allocation6 + $0xe0] sm:$0xff]
    %v1303 = vld [vmem:[#allocation6 + $0xe8] sm:$0xff]
    %v1304 = vld [vmem:[#allocation6 + $0xf0] sm:$0xff]
    %v1305 = vld [vmem:[#allocation6 + $0xf8] sm:$0xff]
    %v1306 = vld [vmem:[#allocation6 + $0x100] sm:$0xff]
    %v1307 = vld [vmem:[#allocation6 + $0x108] sm:$0xff]
    %v1308 = vld [vmem:[#allocation6 + $0x110] sm:$0xff]
    %v1309 = vld [vmem:[#allocation6 + $0x118] sm:$0xff]
    %v1310 = vld [vmem:[#allocation6 + $0x120] sm:$0xff]
    %v1311 = vld [vmem:[#allocation6 + $0x128] sm:$0xff]
    %v1312 = vld [vmem:[#allocation6 + $0x130] sm:$0xff]
    %v1313 = vld [vmem:[#allocation6 + $0x138] sm:$0xff]
    %v1314 = vld [vmem:[#allocation6 + $0x140] sm:$0xff]
    %v1315 = vld [vmem:[#allocation6 + $0x148] sm:$0xff]
    %v1316 = vld [vmem:[#allocation6 + $0x150] sm:$0xff]
    %v1317 = vld [vmem:[#allocation6 + $0x158] sm:$0xff]
    %v1318 = vld [vmem:[#allocation6 + $0x160] sm:$0xff]
    %v1319 = vld [vmem:[#allocation6 + $0x168] sm:$0xff]
    %v1320 = vld [vmem:[#allocation6 + $0x170] sm:$0xff]
    %v1321 = vld [vmem:[#allocation6 + $0x178] sm:$0xff]
    %v1322 = vld [vmem:[#allocation6 + $0x180] sm:$0xff]
    %v1323 = vld [vmem:[#allocation6 + $0x188] sm:$0xff]
    %v1324 = vld [vmem:[#allocation6 + $0x190] sm:$0xff]
    %v1325 = vld [vmem:[#allocation6 + $0x198] sm:$0xff]
    %v1326 = vld [vmem:[#allocation6 + $0x1a0] sm:$0xff]
    %v1327 = vld [vmem:[#allocation6 + $0x1a8] sm:$0xff]
    %v1328 = vld [vmem:[#allocation6 + $0x1b0] sm:$0xff]
    %v1329 = vld [vmem:[#allocation6 + $0x1b8] sm:$0xff]
    %v1330 = vld [vmem:[#allocation6 + $0x1c0] sm:$0xff]
    %v1331 = vld [vmem:[#allocation6 + $0x1c8] sm:$0xff]
    %v1332 = vld [vmem:[#allocation6 + $0x1d0] sm:$0xff]
    %v1333 = vld [vmem:[#allocation6 + $0x1d8] sm:$0xff]
    %v1334 = vld [vmem:[#allocation6 + $0x1e0] sm:$0xff]
    %v1335 = vld [vmem:[#allocation6 + $0x1e8] sm:$0xff]
    %v1336 = vld [vmem:[#allocation6 + $0x1f0] sm:$0xff]
    %v1337 = vld [vmem:[#allocation6 + $0x1f8] sm:$0xff]
    %1338 = vmatpush.msra.mxu0 %v1334
    %1339 = vmatpush.msra.mxu0 %v1330
    %1340 = vmatpush.msra.mxu0 %v1326
    %1341 = vmatpush.msra.mxu0 %v1322
    %1342 = vmatpush.msra.mxu0 %v1318
    %1343 = vmatpush.msra.mxu0 %v1314
    %1344 = vmatpush.msra.mxu0 %v1310
    %1345 = vmatpush.msra.mxu0 %v1306
    %1346 = vmatpush.msra.mxu0 %v1302
    %1347 = vmatpush.msra.mxu0 %v1298
    %1348 = vmatpush.msra.mxu0 %v1294
    %1349 = vmatpush.msra.mxu0 %v1290
    %1350 = vmatpush.msra.mxu0 %v1286
    %1351 = vmatpush.msra.mxu0 %v1282
    %1352 = vmatpush.msra.mxu0 %v1278
    %1353 = vmatpush.msra.mxu0 %v1274
    %1354 = vmatmul.f32.gmra.mxu0 %v1264
    %v1355 = vpop.f32.mrf.mxu0
    %v1356 = vadd.f32 0.0, %v1355
    %1357 = vdwg.mxu0
    %1358 = vmatpush.msra.mxu0 %v1335
    %1359 = vmatpush.msra.mxu0 %v1331
    %1360 = vmatpush.msra.mxu0 %v1327
    %1361 = vmatpush.msra.mxu0 %v1323
    %1362 = vmatpush.msra.mxu0 %v1319
    %1363 = vmatpush.msra.mxu0 %v1315
    %1364 = vmatpush.msra.mxu0 %v1311
    %1365 = vmatpush.msra.mxu0 %v1307
    %1366 = vmatpush.msra.mxu0 %v1303
    %1367 = vmatpush.msra.mxu0 %v1299
    %1368 = vmatpush.msra.mxu0 %v1295
    %1369 = vmatpush.msra.mxu0 %v1291
    %1370 = vmatpush.msra.mxu0 %v1287
    %1371 = vmatpush.msra.mxu0 %v1283
    %1372 = vmatpush.msra.mxu0 %v1279
    %1373 = vmatpush.msra.mxu0 %v1275
    %1374 = vmatmul.f32.gmra.mxu0 %v1264
    %v1375 = vpop.f32.mrf.mxu0
    %v1376 = vadd.f32 0.0, %v1375
    %1377 = vdwg.mxu0
    %1378 = vmatpush.msra.mxu0 %v1336
    %1379 = vmatpush.msra.mxu0 %v1332
    %1380 = vmatpush.msra.mxu0 %v1328
    %1381 = vmatpush.msra.mxu0 %v1324
    %1382 = vmatpush.msra.mxu0 %v1320
    %1383 = vmatpush.msra.mxu0 %v1316
    %1384 = vmatpush.msra.mxu0 %v1312
    %1385 = vmatpush.msra.mxu0 %v1308
    %1386 = vmatpush.msra.mxu0 %v1304
    %1387 = vmatpush.msra.mxu0 %v1300
    %1388 = vmatpush.msra.mxu0 %v1296
    %1389 = vmatpush.msra.mxu0 %v1292
    %1390 = vmatpush.msra.mxu0 %v1288
    %1391 = vmatpush.msra.mxu0 %v1284
    %1392 = vmatpush.msra.mxu0 %v1280
    %1393 = vmatpush.msra.mxu0 %v1276
    %1394 = vmatmul.f32.gmra.mxu0 %v1264
    %v1395 = vpop.f32.mrf.mxu0
    %v1396 = vadd.f32 0.0, %v1395
    %1397 = vdwg.mxu0
    %1398 = vmatpush.msra.mxu0 %v1337
    %1399 = vmatpush.msra.mxu0 %v1333
    %1400 = vmatpush.msra.mxu0 %v1329
    %1401 = vmatpush.msra.mxu0 %v1325
    %1402 = vmatpush.msra.mxu0 %v1321
    %1403 = vmatpush.msra.mxu0 %v1317
    %1404 = vmatpush.msra.mxu0 %v1313
    %1405 = vmatpush.msra.mxu0 %v1309
    %1406 = vmatpush.msra.mxu0 %v1305
    %1407 = vmatpush.msra.mxu0 %v1301
    %1408 = vmatpush.msra.mxu0 %v1297
    %1409 = vmatpush.msra.mxu0 %v1293
    %1410 = vmatpush.msra.mxu0 %v1289
    %1411 = vmatpush.msra.mxu0 %v1285
    %1412 = vmatpush.msra.mxu0 %v1281
    %1413 = vmatpush.msra.mxu0 %v1277
    %1414 = vmatmul.f32.gmra.mxu0 %v1264
    %v1415 = vpop.f32.mrf.mxu0
    %v1416 = vadd.f32 0.0, %v1415
    %1417 = vdwg.mxu0
    %v1418 = vadd.f32 %v1270, %v1356
    %v1419 = vadd.f32 %v1271, %v1376
    %v1420 = vadd.f32 %v1272, %v1396
    %v1421 = vadd.f32 %v1273, %v1416
    %v1422 = vxor.u32 %v1418, 2147483648
    %v1423 = vxor.u32 %v1419, 2147483648
    %v1424 = vxor.u32 %v1420, 2147483648
    %v1425 = vmul.f32 %v1422, 1.442695
    %v1426 = vpow.pop %v1425
    %v1427 = vmul.f32 %v1423, 1.442695
    %v1428 = vpow.pop %v1427
    %v1429 = vmul.f32 %v1424, 1.442695
    %v1430 = vpow.pop %v1429
    %v1431 = vadd.f32 %v1426, 1.0
    %v1432 = vadd.f32 %v1428, 1.0
    %v1433 = vadd.f32 %v1430, 1.0
    %v1434 = vrcp.pop %v1431
    %v1435 = vmul.f32 %v1431, %v1434
    %v1436 = vsub.f32 1.0, %v1435
    %v1437 = vmul.f32 %v1434, %v1436
    %v1438 = vadd.f32 %v1434, %v1437
    %vm1439 = vweird.f32 %v1431
    %vm1440 = vweird.f32 %v1434
    %vm1441 = vmor %vm1439, %vm1440
    %v1442 = vsel %vm1441, %v1434, %v1438
    %v1443 = vand.u32 2147483647, %v1431
    %vm1444 = vcmp.eq.f32.partialorder %v1443, 8.507059e+37
    %v1445 = vand.u32 %v1431, 2147483648
    %v1446 = vor.u32 1.1754944e-38, %v1445
    %v1447 = vsel %vm1444, %v1446, %v1442
    %v1448 = vmul.f32 1.0, %v1447
    %v1449 = vrcp.pop %v1432
    %v1450 = vmul.f32 %v1432, %v1449
    %v1451 = vsub.f32 1.0, %v1450
    %v1452 = vmul.f32 %v1449, %v1451
    %v1453 = vadd.f32 %v1449, %v1452
    %vm1454 = vweird.f32 %v1432
    %vm1455 = vweird.f32 %v1449
    %vm1456 = vmor %vm1454, %vm1455
    %v1457 = vsel %vm1456, %v1449, %v1453
    %v1458 = vand.u32 2147483647, %v1432
    %vm1459 = vcmp.eq.f32.partialorder %v1458, 8.507059e+37
    %v1460 = vand.u32 %v1432, 2147483648
    %v1461 = vor.u32 1.1754944e-38, %v1460
    %v1462 = vsel %vm1459, %v1461, %v1457
    %v1463 = vmul.f32 1.0, %v1462
    %v1464 = vrcp.pop %v1433
    %v1465 = vmul.f32 %v1433, %v1464
    %v1466 = vsub.f32 1.0, %v1465
    %v1467 = vmul.f32 %v1464, %v1466
    %v1468 = vadd.f32 %v1464, %v1467
    %vm1469 = vweird.f32 %v1433
    %vm1470 = vweird.f32 %v1464
    %vm1471 = vmor %vm1469, %vm1470
    %v1472 = vsel %vm1471, %v1464, %v1468
    %v1473 = vand.u32 2147483647, %v1433
    %vm1474 = vcmp.eq.f32.partialorder %v1473, 8.507059e+37
    %v1475 = vand.u32 %v1433, 2147483648
    %v1476 = vor.u32 1.1754944e-38, %v1475
    %v1477 = vsel %vm1474, %v1476, %v1472
    %v1478 = vmul.f32 1.0, %v1477
    %v1479 = vtanh.pop %v1421
    %v1480 = vmul.f32 %v1463, %v1262
    %v1481 = vmul.f32 %v1448, %v1479
    %v1482 = vadd.f32 %v1480, %v1481
    %v1483 = vtanh.pop %v1482
    %v1484 = vmul.f32 %v1478, %v1483
    %s1485 = scalar_lea.vmem [#allocation3], 32
    %1486 = vst [vmem:[%s1485] sm:$0xff] %v1484
    %s1487 = smul.u32 5, 4
    %s1488 = smul.addr %s1487, 8
    %s1489 = scalar_lea.vmem [#allocation2], %s1488
    %v1490 = vld [vmem:[%s1489] sm:$0xff]
    %v1491 = vld [vmem:[%s1489 + $0x8] sm:$0xff]
    %v1492 = vld [vmem:[%s1489 + $0x10] sm:$0xff]
    %v1493 = vld [vmem:[%s1489 + $0x18] sm:$0xff]
    %v1494 = vld [vmem:[#allocation6] sm:$0xff]
    %v1495 = vld [vmem:[#allocation6 + $0x8] sm:$0xff]
    %v1496 = vld [vmem:[#allocation6 + $0x10] sm:$0xff]
    %v1497 = vld [vmem:[#allocation6 + $0x18] sm:$0xff]
    %v1498 = vld [vmem:[#allocation6 + $0x20] sm:$0xff]
    %v1499 = vld [vmem:[#allocation6 + $0x28] sm:$0xff]
    %v1500 = vld [vmem:[#allocation6 + $0x30] sm:$0xff]
    %v1501 = vld [vmem:[#allocation6 + $0x38] sm:$0xff]
    %v1502 = vld [vmem:[#allocation6 + $0x40] sm:$0xff]
    %v1503 = vld [vmem:[#allocation6 + $0x48] sm:$0xff]
    %v1504 = vld [vmem:[#allocation6 + $0x50] sm:$0xff]
    %v1505 = vld [vmem:[#allocation6 + $0x58] sm:$0xff]
    %v1506 = vld [vmem:[#allocation6 + $0x60] sm:$0xff]
    %v1507 = vld [vmem:[#allocation6 + $0x68] sm:$0xff]
    %v1508 = vld [vmem:[#allocation6 + $0x70] sm:$0xff]
    %v1509 = vld [vmem:[#allocation6 + $0x78] sm:$0xff]
    %v1510 = vld [vmem:[#allocation6 + $0x80] sm:$0xff]
    %v1511 = vld [vmem:[#allocation6 + $0x88] sm:$0xff]
    %v1512 = vld [vmem:[#allocation6 + $0x90] sm:$0xff]
    %v1513 = vld [vmem:[#allocation6 + $0x98] sm:$0xff]
    %v1514 = vld [vmem:[#allocation6 + $0xa0] sm:$0xff]
    %v1515 = vld [vmem:[#allocation6 + $0xa8] sm:$0xff]
    %v1516 = vld [vmem:[#allocation6 + $0xb0] sm:$0xff]
    %v1517 = vld [vmem:[#allocation6 + $0xb8] sm:$0xff]
    %v1518 = vld [vmem:[#allocation6 + $0xc0] sm:$0xff]
    %v1519 = vld [vmem:[#allocation6 + $0xc8] sm:$0xff]
    %v1520 = vld [vmem:[#allocation6 + $0xd0] sm:$0xff]
    %v1521 = vld [vmem:[#allocation6 + $0xd8] sm:$0xff]
    %v1522 = vld [vmem:[#allocation6 + $0xe0] sm:$0xff]
    %v1523 = vld [vmem:[#allocation6 + $0xe8] sm:$0xff]
    %v1524 = vld [vmem:[#allocation6 + $0xf0] sm:$0xff]
    %v1525 = vld [vmem:[#allocation6 + $0xf8] sm:$0xff]
    %v1526 = vld [vmem:[#allocation6 + $0x100] sm:$0xff]
    %v1527 = vld [vmem:[#allocation6 + $0x108] sm:$0xff]
    %v1528 = vld [vmem:[#allocation6 + $0x110] sm:$0xff]
    %v1529 = vld [vmem:[#allocation6 + $0x118] sm:$0xff]
    %v1530 = vld [vmem:[#allocation6 + $0x120] sm:$0xff]
    %v1531 = vld [vmem:[#allocation6 + $0x128] sm:$0xff]
    %v1532 = vld [vmem:[#allocation6 + $0x130] sm:$0xff]
    %v1533 = vld [vmem:[#allocation6 + $0x138] sm:$0xff]
    %v1534 = vld [vmem:[#allocation6 + $0x140] sm:$0xff]
    %v1535 = vld [vmem:[#allocation6 + $0x148] sm:$0xff]
    %v1536 = vld [vmem:[#allocation6 + $0x150] sm:$0xff]
    %v1537 = vld [vmem:[#allocation6 + $0x158] sm:$0xff]
    %v1538 = vld [vmem:[#allocation6 + $0x160] sm:$0xff]
    %v1539 = vld [vmem:[#allocation6 + $0x168] sm:$0xff]
    %v1540 = vld [vmem:[#allocation6 + $0x170] sm:$0xff]
    %v1541 = vld [vmem:[#allocation6 + $0x178] sm:$0xff]
    %v1542 = vld [vmem:[#allocation6 + $0x180] sm:$0xff]
    %v1543 = vld [vmem:[#allocation6 + $0x188] sm:$0xff]
    %v1544 = vld [vmem:[#allocation6 + $0x190] sm:$0xff]
    %v1545 = vld [vmem:[#allocation6 + $0x198] sm:$0xff]
    %v1546 = vld [vmem:[#allocation6 + $0x1a0] sm:$0xff]
    %v1547 = vld [vmem:[#allocation6 + $0x1a8] sm:$0xff]
    %v1548 = vld [vmem:[#allocation6 + $0x1b0] sm:$0xff]
    %v1549 = vld [vmem:[#allocation6 + $0x1b8] sm:$0xff]
    %v1550 = vld [vmem:[#allocation6 + $0x1c0] sm:$0xff]
    %v1551 = vld [vmem:[#allocation6 + $0x1c8] sm:$0xff]
    %v1552 = vld [vmem:[#allocation6 + $0x1d0] sm:$0xff]
    %v1553 = vld [vmem:[#allocation6 + $0x1d8] sm:$0xff]
    %v1554 = vld [vmem:[#allocation6 + $0x1e0] sm:$0xff]
    %v1555 = vld [vmem:[#allocation6 + $0x1e8] sm:$0xff]
    %v1556 = vld [vmem:[#allocation6 + $0x1f0] sm:$0xff]
    %v1557 = vld [vmem:[#allocation6 + $0x1f8] sm:$0xff]
    %1558 = vmatpush.msra.mxu0 %v1554
    %1559 = vmatpush.msra.mxu0 %v1550
    %1560 = vmatpush.msra.mxu0 %v1546
    %1561 = vmatpush.msra.mxu0 %v1542
    %1562 = vmatpush.msra.mxu0 %v1538
    %1563 = vmatpush.msra.mxu0 %v1534
    %1564 = vmatpush.msra.mxu0 %v1530
    %1565 = vmatpush.msra.mxu0 %v1526
    %1566 = vmatpush.msra.mxu0 %v1522
    %1567 = vmatpush.msra.mxu0 %v1518
    %1568 = vmatpush.msra.mxu0 %v1514
    %1569 = vmatpush.msra.mxu0 %v1510
    %1570 = vmatpush.msra.mxu0 %v1506
    %1571 = vmatpush.msra.mxu0 %v1502
    %1572 = vmatpush.msra.mxu0 %v1498
    %1573 = vmatpush.msra.mxu0 %v1494
    %1574 = vmatmul.f32.gmra.mxu0 %v1484
    %v1575 = vpop.f32.mrf.mxu0
    %v1576 = vadd.f32 0.0, %v1575
    %1577 = vdwg.mxu0
    %1578 = vmatpush.msra.mxu0 %v1555
    %1579 = vmatpush.msra.mxu0 %v1551
    %1580 = vmatpush.msra.mxu0 %v1547
    %1581 = vmatpush.msra.mxu0 %v1543
    %1582 = vmatpush.msra.mxu0 %v1539
    %1583 = vmatpush.msra.mxu0 %v1535
    %1584 = vmatpush.msra.mxu0 %v1531
    %1585 = vmatpush.msra.mxu0 %v1527
    %1586 = vmatpush.msra.mxu0 %v1523
    %1587 = vmatpush.msra.mxu0 %v1519
    %1588 = vmatpush.msra.mxu0 %v1515
    %1589 = vmatpush.msra.mxu0 %v1511
    %1590 = vmatpush.msra.mxu0 %v1507
    %1591 = vmatpush.msra.mxu0 %v1503
    %1592 = vmatpush.msra.mxu0 %v1499
    %1593 = vmatpush.msra.mxu0 %v1495
    %1594 = vmatmul.f32.gmra.mxu0 %v1484
    %v1595 = vpop.f32.mrf.mxu0
    %v1596 = vadd.f32 0.0, %v1595
    %1597 = vdwg.mxu0
    %1598 = vmatpush.msra.mxu0 %v1556
    %1599 = vmatpush.msra.mxu0 %v1552
    %1600 = vmatpush.msra.mxu0 %v1548
    %1601 = vmatpush.msra.mxu0 %v1544
    %1602 = vmatpush.msra.mxu0 %v1540
    %1603 = vmatpush.msra.mxu0 %v1536
    %1604 = vmatpush.msra.mxu0 %v1532
    %1605 = vmatpush.msra.mxu0 %v1528
    %1606 = vmatpush.msra.mxu0 %v1524
    %1607 = vmatpush.msra.mxu0 %v1520
    %1608 = vmatpush.msra.mxu0 %v1516
    %1609 = vmatpush.msra.mxu0 %v1512
    %1610 = vmatpush.msra.mxu0 %v1508
    %1611 = vmatpush.msra.mxu0 %v1504
    %1612 = vmatpush.msra.mxu0 %v1500
    %1613 = vmatpush.msra.mxu0 %v1496
    %1614 = vmatmul.f32.gmra.mxu0 %v1484
    %v1615 = vpop.f32.mrf.mxu0
    %v1616 = vadd.f32 0.0, %v1615
    %1617 = vdwg.mxu0
    %1618 = vmatpush.msra.mxu0 %v1557
    %1619 = vmatpush.msra.mxu0 %v1553
    %1620 = vmatpush.msra.mxu0 %v1549
    %1621 = vmatpush.msra.mxu0 %v1545
    %1622 = vmatpush.msra.mxu0 %v1541
    %1623 = vmatpush.msra.mxu0 %v1537
    %1624 = vmatpush.msra.mxu0 %v1533
    %1625 = vmatpush.msra.mxu0 %v1529
    %1626 = vmatpush.msra.mxu0 %v1525
    %1627 = vmatpush.msra.mxu0 %v1521
    %1628 = vmatpush.msra.mxu0 %v1517
    %1629 = vmatpush.msra.mxu0 %v1513
    %1630 = vmatpush.msra.mxu0 %v1509
    %1631 = vmatpush.msra.mxu0 %v1505
    %1632 = vmatpush.msra.mxu0 %v1501
    %1633 = vmatpush.msra.mxu0 %v1497
    %1634 = vmatmul.f32.gmra.mxu0 %v1484
    %v1635 = vpop.f32.mrf.mxu0
    %v1636 = vadd.f32 0.0, %v1635
    %1637 = vdwg.mxu0
    %v1638 = vadd.f32 %v1490, %v1576
    %v1639 = vadd.f32 %v1491, %v1596
    %v1640 = vadd.f32 %v1492, %v1616
    %v1641 = vadd.f32 %v1493, %v1636
    %v1642 = vxor.u32 %v1638, 2147483648
    %v1643 = vxor.u32 %v1639, 2147483648
    %v1644 = vxor.u32 %v1640, 2147483648
    %v1645 = vmul.f32 %v1642, 1.442695
    %v1646 = vpow.pop %v1645
    %v1647 = vmul.f32 %v1643, 1.442695
    %v1648 = vpow.pop %v1647
    %v1649 = vmul.f32 %v1644, 1.442695
    %v1650 = vpow.pop %v1649
    %v1651 = vadd.f32 %v1646, 1.0
    %v1652 = vadd.f32 %v1648, 1.0
    %v1653 = vadd.f32 %v1650, 1.0
    %v1654 = vrcp.pop %v1651
    %v1655 = vmul.f32 %v1651, %v1654
    %v1656 = vsub.f32 1.0, %v1655
    %v1657 = vmul.f32 %v1654, %v1656
    %v1658 = vadd.f32 %v1654, %v1657
    %vm1659 = vweird.f32 %v1651
    %vm1660 = vweird.f32 %v1654
    %vm1661 = vmor %vm1659, %vm1660
    %v1662 = vsel %vm1661, %v1654, %v1658
    %v1663 = vand.u32 2147483647, %v1651
    %vm1664 = vcmp.eq.f32.partialorder %v1663, 8.507059e+37
    %v1665 = vand.u32 %v1651, 2147483648
    %v1666 = vor.u32 1.1754944e-38, %v1665
    %v1667 = vsel %vm1664, %v1666, %v1662
    %v1668 = vmul.f32 1.0, %v1667
    %v1669 = vrcp.pop %v1652
    %v1670 = vmul.f32 %v1652, %v1669
    %v1671 = vsub.f32 1.0, %v1670
    %v1672 = vmul.f32 %v1669, %v1671
    %v1673 = vadd.f32 %v1669, %v1672
    %vm1674 = vweird.f32 %v1652
    %vm1675 = vweird.f32 %v1669
    %vm1676 = vmor %vm1674, %vm1675
    %v1677 = vsel %vm1676, %v1669, %v1673
    %v1678 = vand.u32 2147483647, %v1652
    %vm1679 = vcmp.eq.f32.partialorder %v1678, 8.507059e+37
    %v1680 = vand.u32 %v1652, 2147483648
    %v1681 = vor.u32 1.1754944e-38, %v1680
    %v1682 = vsel %vm1679, %v1681, %v1677
    %v1683 = vmul.f32 1.0, %v1682
    %v1684 = vrcp.pop %v1653
    %v1685 = vmul.f32 %v1653, %v1684
    %v1686 = vsub.f32 1.0, %v1685
    %v1687 = vmul.f32 %v1684, %v1686
    %v1688 = vadd.f32 %v1684, %v1687
    %vm1689 = vweird.f32 %v1653
    %vm1690 = vweird.f32 %v1684
    %vm1691 = vmor %vm1689, %vm1690
    %v1692 = vsel %vm1691, %v1684, %v1688
    %v1693 = vand.u32 2147483647, %v1653
    %vm1694 = vcmp.eq.f32.partialorder %v1693, 8.507059e+37
    %v1695 = vand.u32 %v1653, 2147483648
    %v1696 = vor.u32 1.1754944e-38, %v1695
    %v1697 = vsel %vm1694, %v1696, %v1692
    %v1698 = vmul.f32 1.0, %v1697
    %v1699 = vtanh.pop %v1641
    %v1700 = vmul.f32 %v1683, %v1482
    %v1701 = vmul.f32 %v1668, %v1699
    %v1702 = vadd.f32 %v1700, %v1701
    %v1703 = vtanh.pop %v1702
    %v1704 = vmul.f32 %v1698, %v1703
    %s1705 = scalar_lea.vmem [#allocation3], 40
    %1706 = vst [vmem:[%s1705] sm:$0xff] %v1704
    %s1707 = smul.u32 6, 4
    %s1708 = smul.addr %s1707, 8
    %s1709 = scalar_lea.vmem [#allocation2], %s1708
    %v1710 = vld [vmem:[%s1709] sm:$0xff]
    %v1711 = vld [vmem:[%s1709 + $0x8] sm:$0xff]
    %v1712 = vld [vmem:[%s1709 + $0x10] sm:$0xff]
    %v1713 = vld [vmem:[%s1709 + $0x18] sm:$0xff]
    %v1714 = vld [vmem:[#allocation6] sm:$0xff]
    %v1715 = vld [vmem:[#allocation6 + $0x8] sm:$0xff]
    %v1716 = vld [vmem:[#allocation6 + $0x10] sm:$0xff]
    %v1717 = vld [vmem:[#allocation6 + $0x18] sm:$0xff]
    %v1718 = vld [vmem:[#allocation6 + $0x20] sm:$0xff]
    %v1719 = vld [vmem:[#allocation6 + $0x28] sm:$0xff]
    %v1720 = vld [vmem:[#allocation6 + $0x30] sm:$0xff]
    %v1721 = vld [vmem:[#allocation6 + $0x38] sm:$0xff]
    %v1722 = vld [vmem:[#allocation6 + $0x40] sm:$0xff]
    %v1723 = vld [vmem:[#allocation6 + $0x48] sm:$0xff]
    %v1724 = vld [vmem:[#allocation6 + $0x50] sm:$0xff]
    %v1725 = vld [vmem:[#allocation6 + $0x58] sm:$0xff]
    %v1726 = vld [vmem:[#allocation6 + $0x60] sm:$0xff]
    %v1727 = vld [vmem:[#allocation6 + $0x68] sm:$0xff]
    %v1728 = vld [vmem:[#allocation6 + $0x70] sm:$0xff]
    %v1729 = vld [vmem:[#allocation6 + $0x78] sm:$0xff]
    %v1730 = vld [vmem:[#allocation6 + $0x80] sm:$0xff]
    %v1731 = vld [vmem:[#allocation6 + $0x88] sm:$0xff]
    %v1732 = vld [vmem:[#allocation6 + $0x90] sm:$0xff]
    %v1733 = vld [vmem:[#allocation6 + $0x98] sm:$0xff]
    %v1734 = vld [vmem:[#allocation6 + $0xa0] sm:$0xff]
    %v1735 = vld [vmem:[#allocation6 + $0xa8] sm:$0xff]
    %v1736 = vld [vmem:[#allocation6 + $0xb0] sm:$0xff]
    %v1737 = vld [vmem:[#allocation6 + $0xb8] sm:$0xff]
    %v1738 = vld [vmem:[#allocation6 + $0xc0] sm:$0xff]
    %v1739 = vld [vmem:[#allocation6 + $0xc8] sm:$0xff]
    %v1740 = vld [vmem:[#allocation6 + $0xd0] sm:$0xff]
    %v1741 = vld [vmem:[#allocation6 + $0xd8] sm:$0xff]
    %v1742 = vld [vmem:[#allocation6 + $0xe0] sm:$0xff]
    %v1743 = vld [vmem:[#allocation6 + $0xe8] sm:$0xff]
    %v1744 = vld [vmem:[#allocation6 + $0xf0] sm:$0xff]
    %v1745 = vld [vmem:[#allocation6 + $0xf8] sm:$0xff]
    %v1746 = vld [vmem:[#allocation6 + $0x100] sm:$0xff]
    %v1747 = vld [vmem:[#allocation6 + $0x108] sm:$0xff]
    %v1748 = vld [vmem:[#allocation6 + $0x110] sm:$0xff]
    %v1749 = vld [vmem:[#allocation6 + $0x118] sm:$0xff]
    %v1750 = vld [vmem:[#allocation6 + $0x120] sm:$0xff]
    %v1751 = vld [vmem:[#allocation6 + $0x128] sm:$0xff]
    %v1752 = vld [vmem:[#allocation6 + $0x130] sm:$0xff]
    %v1753 = vld [vmem:[#allocation6 + $0x138] sm:$0xff]
    %v1754 = vld [vmem:[#allocation6 + $0x140] sm:$0xff]
    %v1755 = vld [vmem:[#allocation6 + $0x148] sm:$0xff]
    %v1756 = vld [vmem:[#allocation6 + $0x150] sm:$0xff]
    %v1757 = vld [vmem:[#allocation6 + $0x158] sm:$0xff]
    %v1758 = vld [vmem:[#allocation6 + $0x160] sm:$0xff]
    %v1759 = vld [vmem:[#allocation6 + $0x168] sm:$0xff]
    %v1760 = vld [vmem:[#allocation6 + $0x170] sm:$0xff]
    %v1761 = vld [vmem:[#allocation6 + $0x178] sm:$0xff]
    %v1762 = vld [vmem:[#allocation6 + $0x180] sm:$0xff]
    %v1763 = vld [vmem:[#allocation6 + $0x188] sm:$0xff]
    %v1764 = vld [vmem:[#allocation6 + $0x190] sm:$0xff]
    %v1765 = vld [vmem:[#allocation6 + $0x198] sm:$0xff]
    %v1766 = vld [vmem:[#allocation6 + $0x1a0] sm:$0xff]
    %v1767 = vld [vmem:[#allocation6 + $0x1a8] sm:$0xff]
    %v1768 = vld [vmem:[#allocation6 + $0x1b0] sm:$0xff]
    %v1769 = vld [vmem:[#allocation6 + $0x1b8] sm:$0xff]
    %v1770 = vld [vmem:[#allocation6 + $0x1c0] sm:$0xff]
    %v1771 = vld [vmem:[#allocation6 + $0x1c8] sm:$0xff]
    %v1772 = vld [vmem:[#allocation6 + $0x1d0] sm:$0xff]
    %v1773 = vld [vmem:[#allocation6 + $0x1d8] sm:$0xff]
    %v1774 = vld [vmem:[#allocation6 + $0x1e0] sm:$0xff]
    %v1775 = vld [vmem:[#allocation6 + $0x1e8] sm:$0xff]
    %v1776 = vld [vmem:[#allocation6 + $0x1f0] sm:$0xff]
    %v1777 = vld [vmem:[#allocation6 + $0x1f8] sm:$0xff]
    %1778 = vmatpush.msra.mxu0 %v1774
    %1779 = vmatpush.msra.mxu0 %v1770
    %1780 = vmatpush.msra.mxu0 %v1766
    %1781 = vmatpush.msra.mxu0 %v1762
    %1782 = vmatpush.msra.mxu0 %v1758
    %1783 = vmatpush.msra.mxu0 %v1754
    %1784 = vmatpush.msra.mxu0 %v1750
    %1785 = vmatpush.msra.mxu0 %v1746
    %1786 = vmatpush.msra.mxu0 %v1742
    %1787 = vmatpush.msra.mxu0 %v1738
    %1788 = vmatpush.msra.mxu0 %v1734
    %1789 = vmatpush.msra.mxu0 %v1730
    %1790 = vmatpush.msra.mxu0 %v1726
    %1791 = vmatpush.msra.mxu0 %v1722
    %1792 = vmatpush.msra.mxu0 %v1718
    %1793 = vmatpush.msra.mxu0 %v1714
    %1794 = vmatmul.f32.gmra.mxu0 %v1704
    %v1795 = vpop.f32.mrf.mxu0
    %v1796 = vadd.f32 0.0, %v1795
    %1797 = vdwg.mxu0
    %1798 = vmatpush.msra.mxu0 %v1775
    %1799 = vmatpush.msra.mxu0 %v1771
    %1800 = vmatpush.msra.mxu0 %v1767
    %1801 = vmatpush.msra.mxu0 %v1763
    %1802 = vmatpush.msra.mxu0 %v1759
    %1803 = vmatpush.msra.mxu0 %v1755
    %1804 = vmatpush.msra.mxu0 %v1751
    %1805 = vmatpush.msra.mxu0 %v1747
    %1806 = vmatpush.msra.mxu0 %v1743
    %1807 = vmatpush.msra.mxu0 %v1739
    %1808 = vmatpush.msra.mxu0 %v1735
    %1809 = vmatpush.msra.mxu0 %v1731
    %1810 = vmatpush.msra.mxu0 %v1727
    %1811 = vmatpush.msra.mxu0 %v1723
    %1812 = vmatpush.msra.mxu0 %v1719
    %1813 = vmatpush.msra.mxu0 %v1715
    %1814 = vmatmul.f32.gmra.mxu0 %v1704
    %v1815 = vpop.f32.mrf.mxu0
    %v1816 = vadd.f32 0.0, %v1815
    %1817 = vdwg.mxu0
    %1818 = vmatpush.msra.mxu0 %v1776
    %1819 = vmatpush.msra.mxu0 %v1772
    %1820 = vmatpush.msra.mxu0 %v1768
    %1821 = vmatpush.msra.mxu0 %v1764
    %1822 = vmatpush.msra.mxu0 %v1760
    %1823 = vmatpush.msra.mxu0 %v1756
    %1824 = vmatpush.msra.mxu0 %v1752
    %1825 = vmatpush.msra.mxu0 %v1748
    %1826 = vmatpush.msra.mxu0 %v1744
    %1827 = vmatpush.msra.mxu0 %v1740
    %1828 = vmatpush.msra.mxu0 %v1736
    %1829 = vmatpush.msra.mxu0 %v1732
    %1830 = vmatpush.msra.mxu0 %v1728
    %1831 = vmatpush.msra.mxu0 %v1724
    %1832 = vmatpush.msra.mxu0 %v1720
    %1833 = vmatpush.msra.mxu0 %v1716
    %1834 = vmatmul.f32.gmra.mxu0 %v1704
    %v1835 = vpop.f32.mrf.mxu0
    %v1836 = vadd.f32 0.0, %v1835
    %1837 = vdwg.mxu0
    %1838 = vmatpush.msra.mxu0 %v1777
    %1839 = vmatpush.msra.mxu0 %v1773
    %1840 = vmatpush.msra.mxu0 %v1769
    %1841 = vmatpush.msra.mxu0 %v1765
    %1842 = vmatpush.msra.mxu0 %v1761
    %1843 = vmatpush.msra.mxu0 %v1757
    %1844 = vmatpush.msra.mxu0 %v1753
    %1845 = vmatpush.msra.mxu0 %v1749
    %1846 = vmatpush.msra.mxu0 %v1745
    %1847 = vmatpush.msra.mxu0 %v1741
    %1848 = vmatpush.msra.mxu0 %v1737
    %1849 = vmatpush.msra.mxu0 %v1733
    %1850 = vmatpush.msra.mxu0 %v1729
    %1851 = vmatpush.msra.mxu0 %v1725
    %1852 = vmatpush.msra.mxu0 %v1721
    %1853 = vmatpush.msra.mxu0 %v1717
    %1854 = vmatmul.f32.gmra.mxu0 %v1704
    %v1855 = vpop.f32.mrf.mxu0
    %v1856 = vadd.f32 0.0, %v1855
    %1857 = vdwg.mxu0
    %v1858 = vadd.f32 %v1710, %v1796
    %v1859 = vadd.f32 %v1711, %v1816
    %v1860 = vadd.f32 %v1712, %v1836
    %v1861 = vadd.f32 %v1713, %v1856
    %v1862 = vxor.u32 %v1858, 2147483648
    %v1863 = vxor.u32 %v1859, 2147483648
    %v1864 = vxor.u32 %v1860, 2147483648
    %v1865 = vmul.f32 %v1862, 1.442695
    %v1866 = vpow.pop %v1865
    %v1867 = vmul.f32 %v1863, 1.442695
    %v1868 = vpow.pop %v1867
    %v1869 = vmul.f32 %v1864, 1.442695
    %v1870 = vpow.pop %v1869
    %v1871 = vadd.f32 %v1866, 1.0
    %v1872 = vadd.f32 %v1868, 1.0
    %v1873 = vadd.f32 %v1870, 1.0
    %v1874 = vrcp.pop %v1871
    %v1875 = vmul.f32 %v1871, %v1874
    %v1876 = vsub.f32 1.0, %v1875
    %v1877 = vmul.f32 %v1874, %v1876
    %v1878 = vadd.f32 %v1874, %v1877
    %vm1879 = vweird.f32 %v1871
    %vm1880 = vweird.f32 %v1874
    %vm1881 = vmor %vm1879, %vm1880
    %v1882 = vsel %vm1881, %v1874, %v1878
    %v1883 = vand.u32 2147483647, %v1871
    %vm1884 = vcmp.eq.f32.partialorder %v1883, 8.507059e+37
    %v1885 = vand.u32 %v1871, 2147483648
    %v1886 = vor.u32 1.1754944e-38, %v1885
    %v1887 = vsel %vm1884, %v1886, %v1882
    %v1888 = vmul.f32 1.0, %v1887
    %v1889 = vrcp.pop %v1872
    %v1890 = vmul.f32 %v1872, %v1889
    %v1891 = vsub.f32 1.0, %v1890
    %v1892 = vmul.f32 %v1889, %v1891
    %v1893 = vadd.f32 %v1889, %v1892
    %vm1894 = vweird.f32 %v1872
    %vm1895 = vweird.f32 %v1889
    %vm1896 = vmor %vm1894, %vm1895
    %v1897 = vsel %vm1896, %v1889, %v1893
    %v1898 = vand.u32 2147483647, %v1872
    %vm1899 = vcmp.eq.f32.partialorder %v1898, 8.507059e+37
    %v1900 = vand.u32 %v1872, 2147483648
    %v1901 = vor.u32 1.1754944e-38, %v1900
    %v1902 = vsel %vm1899, %v1901, %v1897
    %v1903 = vmul.f32 1.0, %v1902
    %v1904 = vrcp.pop %v1873
    %v1905 = vmul.f32 %v1873, %v1904
    %v1906 = vsub.f32 1.0, %v1905
    %v1907 = vmul.f32 %v1904, %v1906
    %v1908 = vadd.f32 %v1904, %v1907
    %vm1909 = vweird.f32 %v1873
    %vm1910 = vweird.f32 %v1904
    %vm1911 = vmor %vm1909, %vm1910
    %v1912 = vsel %vm1911, %v1904, %v1908
    %v1913 = vand.u32 2147483647, %v1873
    %vm1914 = vcmp.eq.f32.partialorder %v1913, 8.507059e+37
    %v1915 = vand.u32 %v1873, 2147483648
    %v1916 = vor.u32 1.1754944e-38, %v1915
    %v1917 = vsel %vm1914, %v1916, %v1912
    %v1918 = vmul.f32 1.0, %v1917
    %v1919 = vtanh.pop %v1861
    %v1920 = vmul.f32 %v1903, %v1702
    %v1921 = vmul.f32 %v1888, %v1919
    %v1922 = vadd.f32 %v1920, %v1921
    %v1923 = vtanh.pop %v1922
    %v1924 = vmul.f32 %v1918, %v1923
    %s1925 = scalar_lea.vmem [#allocation3], 48
    %1926 = vst [vmem:[%s1925] sm:$0xff] %v1924
    %s1927 = smul.u32 7, 4
    %s1928 = smul.addr %s1927, 8
    %s1929 = scalar_lea.vmem [#allocation2], %s1928
    %v1930 = vld [vmem:[%s1929] sm:$0xff]
    %v1931 = vld [vmem:[%s1929 + $0x8] sm:$0xff]
    %v1932 = vld [vmem:[%s1929 + $0x10] sm:$0xff]
    %v1933 = vld [vmem:[%s1929 + $0x18] sm:$0xff]
    %v1934 = vld [vmem:[#allocation6] sm:$0xff]
    %v1935 = vld [vmem:[#allocation6 + $0x8] sm:$0xff]
    %v1936 = vld [vmem:[#allocation6 + $0x10] sm:$0xff]
    %v1937 = vld [vmem:[#allocation6 + $0x18] sm:$0xff]
    %v1938 = vld [vmem:[#allocation6 + $0x20] sm:$0xff]
    %v1939 = vld [vmem:[#allocation6 + $0x28] sm:$0xff]
    %v1940 = vld [vmem:[#allocation6 + $0x30] sm:$0xff]
    %v1941 = vld [vmem:[#allocation6 + $0x38] sm:$0xff]
    %v1942 = vld [vmem:[#allocation6 + $0x40] sm:$0xff]
    %v1943 = vld [vmem:[#allocation6 + $0x48] sm:$0xff]
    %v1944 = vld [vmem:[#allocation6 + $0x50] sm:$0xff]
    %v1945 = vld [vmem:[#allocation6 + $0x58] sm:$0xff]
    %v1946 = vld [vmem:[#allocation6 + $0x60] sm:$0xff]
    %v1947 = vld [vmem:[#allocation6 + $0x68] sm:$0xff]
    %v1948 = vld [vmem:[#allocation6 + $0x70] sm:$0xff]
    %v1949 = vld [vmem:[#allocation6 + $0x78] sm:$0xff]
    %v1950 = vld [vmem:[#allocation6 + $0x80] sm:$0xff]
    %v1951 = vld [vmem:[#allocation6 + $0x88] sm:$0xff]
    %v1952 = vld [vmem:[#allocation6 + $0x90] sm:$0xff]
    %v1953 = vld [vmem:[#allocation6 + $0x98] sm:$0xff]
    %v1954 = vld [vmem:[#allocation6 + $0xa0] sm:$0xff]
    %v1955 = vld [vmem:[#allocation6 + $0xa8] sm:$0xff]
    %v1956 = vld [vmem:[#allocation6 + $0xb0] sm:$0xff]
    %v1957 = vld [vmem:[#allocation6 + $0xb8] sm:$0xff]
    %v1958 = vld [vmem:[#allocation6 + $0xc0] sm:$0xff]
    %v1959 = vld [vmem:[#allocation6 + $0xc8] sm:$0xff]
    %v1960 = vld [vmem:[#allocation6 + $0xd0] sm:$0xff]
    %v1961 = vld [vmem:[#allocation6 + $0xd8] sm:$0xff]
    %v1962 = vld [vmem:[#allocation6 + $0xe0] sm:$0xff]
    %v1963 = vld [vmem:[#allocation6 + $0xe8] sm:$0xff]
    %v1964 = vld [vmem:[#allocation6 + $0xf0] sm:$0xff]
    %v1965 = vld [vmem:[#allocation6 + $0xf8] sm:$0xff]
    %v1966 = vld [vmem:[#allocation6 + $0x100] sm:$0xff]
    %v1967 = vld [vmem:[#allocation6 + $0x108] sm:$0xff]
    %v1968 = vld [vmem:[#allocation6 + $0x110] sm:$0xff]
    %v1969 = vld [vmem:[#allocation6 + $0x118] sm:$0xff]
    %v1970 = vld [vmem:[#allocation6 + $0x120] sm:$0xff]
    %v1971 = vld [vmem:[#allocation6 + $0x128] sm:$0xff]
    %v1972 = vld [vmem:[#allocation6 + $0x130] sm:$0xff]
    %v1973 = vld [vmem:[#allocation6 + $0x138] sm:$0xff]
    %v1974 = vld [vmem:[#allocation6 + $0x140] sm:$0xff]
    %v1975 = vld [vmem:[#allocation6 + $0x148] sm:$0xff]
    %v1976 = vld [vmem:[#allocation6 + $0x150] sm:$0xff]
    %v1977 = vld [vmem:[#allocation6 + $0x158] sm:$0xff]
    %v1978 = vld [vmem:[#allocation6 + $0x160] sm:$0xff]
    %v1979 = vld [vmem:[#allocation6 + $0x168] sm:$0xff]
    %v1980 = vld [vmem:[#allocation6 + $0x170] sm:$0xff]
    %v1981 = vld [vmem:[#allocation6 + $0x178] sm:$0xff]
    %v1982 = vld [vmem:[#allocation6 + $0x180] sm:$0xff]
    %v1983 = vld [vmem:[#allocation6 + $0x188] sm:$0xff]
    %v1984 = vld [vmem:[#allocation6 + $0x190] sm:$0xff]
    %v1985 = vld [vmem:[#allocation6 + $0x198] sm:$0xff]
    %v1986 = vld [vmem:[#allocation6 + $0x1a0] sm:$0xff]
    %v1987 = vld [vmem:[#allocation6 + $0x1a8] sm:$0xff]
    %v1988 = vld [vmem:[#allocation6 + $0x1b0] sm:$0xff]
    %v1989 = vld [vmem:[#allocation6 + $0x1b8] sm:$0xff]
    %v1990 = vld [vmem:[#allocation6 + $0x1c0] sm:$0xff]
    %v1991 = vld [vmem:[#allocation6 + $0x1c8] sm:$0xff]
    %v1992 = vld [vmem:[#allocation6 + $0x1d0] sm:$0xff]
    %v1993 = vld [vmem:[#allocation6 + $0x1d8] sm:$0xff]
    %v1994 = vld [vmem:[#allocation6 + $0x1e0] sm:$0xff]
    %v1995 = vld [vmem:[#allocation6 + $0x1e8] sm:$0xff]
    %v1996 = vld [vmem:[#allocation6 + $0x1f0] sm:$0xff]
    %v1997 = vld [vmem:[#allocation6 + $0x1f8] sm:$0xff]
    %1998 = vmatpush.msra.mxu0 %v1994
    %1999 = vmatpush.msra.mxu0 %v1990
    %2000 = vmatpush.msra.mxu0 %v1986
    %2001 = vmatpush.msra.mxu0 %v1982
    %2002 = vmatpush.msra.mxu0 %v1978
    %2003 = vmatpush.msra.mxu0 %v1974
    %2004 = vmatpush.msra.mxu0 %v1970
    %2005 = vmatpush.msra.mxu0 %v1966
    %2006 = vmatpush.msra.mxu0 %v1962
    %2007 = vmatpush.msra.mxu0 %v1958
    %2008 = vmatpush.msra.mxu0 %v1954
    %2009 = vmatpush.msra.mxu0 %v1950
    %2010 = vmatpush.msra.mxu0 %v1946
    %2011 = vmatpush.msra.mxu0 %v1942
    %2012 = vmatpush.msra.mxu0 %v1938
    %2013 = vmatpush.msra.mxu0 %v1934
    %2014 = vmatmul.f32.gmra.mxu0 %v1924
    %v2015 = vpop.f32.mrf.mxu0
    %v2016 = vadd.f32 0.0, %v2015
    %2017 = vdwg.mxu0
    %2018 = vmatpush.msra.mxu0 %v1995
    %2019 = vmatpush.msra.mxu0 %v1991
    %2020 = vmatpush.msra.mxu0 %v1987
    %2021 = vmatpush.msra.mxu0 %v1983
    %2022 = vmatpush.msra.mxu0 %v1979
    %2023 = vmatpush.msra.mxu0 %v1975
    %2024 = vmatpush.msra.mxu0 %v1971
    %2025 = vmatpush.msra.mxu0 %v1967
    %2026 = vmatpush.msra.mxu0 %v1963
    %2027 = vmatpush.msra.mxu0 %v1959
    %2028 = vmatpush.msra.mxu0 %v1955
    %2029 = vmatpush.msra.mxu0 %v1951
    %2030 = vmatpush.msra.mxu0 %v1947
    %2031 = vmatpush.msra.mxu0 %v1943
    %2032 = vmatpush.msra.mxu0 %v1939
    %2033 = vmatpush.msra.mxu0 %v1935
    %2034 = vmatmul.f32.gmra.mxu0 %v1924
    %v2035 = vpop.f32.mrf.mxu0
    %v2036 = vadd.f32 0.0, %v2035
    %2037 = vdwg.mxu0
    %2038 = vmatpush.msra.mxu0 %v1996
    %2039 = vmatpush.msra.mxu0 %v1992
    %2040 = vmatpush.msra.mxu0 %v1988
    %2041 = vmatpush.msra.mxu0 %v1984
    %2042 = vmatpush.msra.mxu0 %v1980
    %2043 = vmatpush.msra.mxu0 %v1976
    %2044 = vmatpush.msra.mxu0 %v1972
    %2045 = vmatpush.msra.mxu0 %v1968
    %2046 = vmatpush.msra.mxu0 %v1964
    %2047 = vmatpush.msra.mxu0 %v1960
    %2048 = vmatpush.msra.mxu0 %v1956
    %2049 = vmatpush.msra.mxu0 %v1952
    %2050 = vmatpush.msra.mxu0 %v1948
    %2051 = vmatpush.msra.mxu0 %v1944
    %2052 = vmatpush.msra.mxu0 %v1940
    %2053 = vmatpush.msra.mxu0 %v1936
    %2054 = vmatmul.f32.gmra.mxu0 %v1924
    %v2055 = vpop.f32.mrf.mxu0
    %v2056 = vadd.f32 0.0, %v2055
    %2057 = vdwg.mxu0
    %2058 = vmatpush.msra.mxu0 %v1997
    %2059 = vmatpush.msra.mxu0 %v1993
    %2060 = vmatpush.msra.mxu0 %v1989
    %2061 = vmatpush.msra.mxu0 %v1985
    %2062 = vmatpush.msra.mxu0 %v1981
    %2063 = vmatpush.msra.mxu0 %v1977
    %2064 = vmatpush.msra.mxu0 %v1973
    %2065 = vmatpush.msra.mxu0 %v1969
    %2066 = vmatpush.msra.mxu0 %v1965
    %2067 = vmatpush.msra.mxu0 %v1961
    %2068 = vmatpush.msra.mxu0 %v1957
    %2069 = vmatpush.msra.mxu0 %v1953
    %2070 = vmatpush.msra.mxu0 %v1949
    %2071 = vmatpush.msra.mxu0 %v1945
    %2072 = vmatpush.msra.mxu0 %v1941
    %2073 = vmatpush.msra.mxu0 %v1937
    %2074 = vmatmul.f32.gmra.mxu0 %v1924
    %v2075 = vpop.f32.mrf.mxu0
    %v2076 = vadd.f32 0.0, %v2075
    %2077 = vdwg.mxu0
    %v2078 = vadd.f32 %v1930, %v2016
    %v2079 = vadd.f32 %v1931, %v2036
    %v2080 = vadd.f32 %v1932, %v2056
    %v2081 = vadd.f32 %v1933, %v2076
    %v2082 = vxor.u32 %v2078, 2147483648
    %v2083 = vxor.u32 %v2079, 2147483648
    %v2084 = vxor.u32 %v2080, 2147483648
    %v2085 = vmul.f32 %v2082, 1.442695
    %v2086 = vpow.pop %v2085
    %v2087 = vmul.f32 %v2083, 1.442695
    %v2088 = vpow.pop %v2087
    %v2089 = vmul.f32 %v2084, 1.442695
    %v2090 = vpow.pop %v2089
    %v2091 = vadd.f32 %v2086, 1.0
    %v2092 = vadd.f32 %v2088, 1.0
    %v2093 = vadd.f32 %v2090, 1.0
    %v2094 = vrcp.pop %v2091
    %v2095 = vmul.f32 %v2091, %v2094
    %v2096 = vsub.f32 1.0, %v2095
    %v2097 = vmul.f32 %v2094, %v2096
    %v2098 = vadd.f32 %v2094, %v2097
    %vm2099 = vweird.f32 %v2091
    %vm2100 = vweird.f32 %v2094
    %vm2101 = vmor %vm2099, %vm2100
    %v2102 = vsel %vm2101, %v2094, %v2098
    %v2103 = vand.u32 2147483647, %v2091
    %vm2104 = vcmp.eq.f32.partialorder %v2103, 8.507059e+37
    %v2105 = vand.u32 %v2091, 2147483648
    %v2106 = vor.u32 1.1754944e-38, %v2105
    %v2107 = vsel %vm2104, %v2106, %v2102
    %v2108 = vmul.f32 1.0, %v2107
    %v2109 = vrcp.pop %v2092
    %v2110 = vmul.f32 %v2092, %v2109
    %v2111 = vsub.f32 1.0, %v2110
    %v2112 = vmul.f32 %v2109, %v2111
    %v2113 = vadd.f32 %v2109, %v2112
    %vm2114 = vweird.f32 %v2092
    %vm2115 = vweird.f32 %v2109
    %vm2116 = vmor %vm2114, %vm2115
    %v2117 = vsel %vm2116, %v2109, %v2113
    %v2118 = vand.u32 2147483647, %v2092
    %vm2119 = vcmp.eq.f32.partialorder %v2118, 8.507059e+37
    %v2120 = vand.u32 %v2092, 2147483648
    %v2121 = vor.u32 1.1754944e-38, %v2120
    %v2122 = vsel %vm2119, %v2121, %v2117
    %v2123 = vmul.f32 1.0, %v2122
    %v2124 = vrcp.pop %v2093
    %v2125 = vmul.f32 %v2093, %v2124
    %v2126 = vsub.f32 1.0, %v2125
    %v2127 = vmul.f32 %v2124, %v2126
    %v2128 = vadd.f32 %v2124, %v2127
    %vm2129 = vweird.f32 %v2093
    %vm2130 = vweird.f32 %v2124
    %vm2131 = vmor %vm2129, %vm2130
    %v2132 = vsel %vm2131, %v2124, %v2128
    %v2133 = vand.u32 2147483647, %v2093
    %vm2134 = vcmp.eq.f32.partialorder %v2133, 8.507059e+37
    %v2135 = vand.u32 %v2093, 2147483648
    %v2136 = vor.u32 1.1754944e-38, %v2135
    %v2137 = vsel %vm2134, %v2136, %v2132
    %v2138 = vmul.f32 1.0, %v2137
    %v2139 = vtanh.pop %v2081
    %v2140 = vmul.f32 %v2123, %v1922
    %v2141 = vmul.f32 %v2108, %v2139
    %v2142 = vadd.f32 %v2140, %v2141
    %v2143 = vtanh.pop %v2142
    %v2144 = vmul.f32 %v2138, %v2143
    %s2145 = scalar_lea.vmem [#allocation3], 56
    %2146 = vst [vmem:[%s2145] sm:$0xff] %v2144
    %v2147 = vld [vmem:[#allocation3] sm:$0xff]
    %v2148 = vld [vmem:[#allocation3 + $0x8] sm:$0xff]
    %v2149 = vld [vmem:[#allocation3 + $0x10] sm:$0xff]
    %v2150 = vld [vmem:[#allocation3 + $0x18] sm:$0xff]
    %v2151 = vld [vmem:[#allocation3 + $0x20] sm:$0xff]
    %v2152 = vld [vmem:[#allocation3 + $0x28] sm:$0xff]
    %v2153 = vld [vmem:[#allocation3 + $0x30] sm:$0xff]
    %v2154 = vld [vmem:[#allocation3 + $0x38] sm:$0xff]
    %v2155 = vld [vmem:[#allocation8] sm:$0xff]
    %v2156 = vld [vmem:[#allocation8 + $0x8] sm:$0xff]
    %v2157 = vld [vmem:[#allocation8 + $0x10] sm:$0xff]
    %v2158 = vld [vmem:[#allocation8 + $0x18] sm:$0xff]
    %v2159 = vld [vmem:[#allocation8 + $0x20] sm:$0xff]
    %v2160 = vld [vmem:[#allocation8 + $0x28] sm:$0xff]
    %v2161 = vld [vmem:[#allocation8 + $0x30] sm:$0xff]
    %v2162 = vld [vmem:[#allocation8 + $0x38] sm:$0xff]
    %v2163 = vld [vmem:[#allocation8 + $0x40] sm:$0xff]
    %v2164 = vld [vmem:[#allocation8 + $0x48] sm:$0xff]
    %v2165 = vld [vmem:[#allocation8 + $0x50] sm:$0xff]
    %v2166 = vld [vmem:[#allocation8 + $0x58] sm:$0xff]
    %v2167 = vld [vmem:[#allocation8 + $0x60] sm:$0xff]
    %v2168 = vld [vmem:[#allocation8 + $0x68] sm:$0xff]
    %v2169 = vld [vmem:[#allocation8 + $0x70] sm:$0xff]
    %v2170 = vld [vmem:[#allocation8 + $0x78] sm:$0xff]
    %v2171 = vld [vmem:[#allocation8 + $0x80] sm:$0xff]
    %v2172 = vld [vmem:[#allocation8 + $0x88] sm:$0xff]
    %v2173 = vld [vmem:[#allocation8 + $0x90] sm:$0xff]
    %v2174 = vld [vmem:[#allocation8 + $0x98] sm:$0xff]
    %v2175 = vld [vmem:[#allocation8 + $0xa0] sm:$0xff]
    %v2176 = vld [vmem:[#allocation8 + $0xa8] sm:$0xff]
    %v2177 = vld [vmem:[#allocation8 + $0xb0] sm:$0xff]
    %v2178 = vld [vmem:[#allocation8 + $0xb8] sm:$0xff]
    %v2179 = vld [vmem:[#allocation8 + $0xc0] sm:$0xff]
    %v2180 = vld [vmem:[#allocation8 + $0xc8] sm:$0xff]
    %v2181 = vld [vmem:[#allocation8 + $0xd0] sm:$0xff]
    %v2182 = vld [vmem:[#allocation8 + $0xd8] sm:$0xff]
    %v2183 = vld [vmem:[#allocation8 + $0xe0] sm:$0xff]
    %v2184 = vld [vmem:[#allocation8 + $0xe8] sm:$0xff]
    %v2185 = vld [vmem:[#allocation8 + $0xf0] sm:$0xff]
    %v2186 = vld [vmem:[#allocation8 + $0xf8] sm:$0xff]
    %v2187 = vld [vmem:[#allocation8 + $0x100] sm:$0xff]
    %v2188 = vld [vmem:[#allocation8 + $0x108] sm:$0xff]
    %v2189 = vld [vmem:[#allocation8 + $0x110] sm:$0xff]
    %v2190 = vld [vmem:[#allocation8 + $0x118] sm:$0xff]
    %v2191 = vld [vmem:[#allocation8 + $0x120] sm:$0xff]
    %v2192 = vld [vmem:[#allocation8 + $0x128] sm:$0xff]
    %v2193 = vld [vmem:[#allocation8 + $0x130] sm:$0xff]
    %v2194 = vld [vmem:[#allocation8 + $0x138] sm:$0xff]
    %v2195 = vld [vmem:[#allocation8 + $0x140] sm:$0xff]
    %v2196 = vld [vmem:[#allocation8 + $0x148] sm:$0xff]
    %v2197 = vld [vmem:[#allocation8 + $0x150] sm:$0xff]
    %v2198 = vld [vmem:[#allocation8 + $0x158] sm:$0xff]
    %v2199 = vld [vmem:[#allocation8 + $0x160] sm:$0xff]
    %v2200 = vld [vmem:[#allocation8 + $0x168] sm:$0xff]
    %v2201 = vld [vmem:[#allocation8 + $0x170] sm:$0xff]
    %v2202 = vld [vmem:[#allocation8 + $0x178] sm:$0xff]
    %v2203 = vld [vmem:[#allocation8 + $0x180] sm:$0xff]
    %v2204 = vld [vmem:[#allocation8 + $0x188] sm:$0xff]
    %v2205 = vld [vmem:[#allocation8 + $0x190] sm:$0xff]
    %v2206 = vld [vmem:[#allocation8 + $0x198] sm:$0xff]
    %v2207 = vld [vmem:[#allocation8 + $0x1a0] sm:$0xff]
    %v2208 = vld [vmem:[#allocation8 + $0x1a8] sm:$0xff]
    %v2209 = vld [vmem:[#allocation8 + $0x1b0] sm:$0xff]
    %v2210 = vld [vmem:[#allocation8 + $0x1b8] sm:$0xff]
    %v2211 = vld [vmem:[#allocation8 + $0x1c0] sm:$0xff]
    %v2212 = vld [vmem:[#allocation8 + $0x1c8] sm:$0xff]
    %v2213 = vld [vmem:[#allocation8 + $0x1d0] sm:$0xff]
    %v2214 = vld [vmem:[#allocation8 + $0x1d8] sm:$0xff]
    %v2215 = vld [vmem:[#allocation8 + $0x1e0] sm:$0xff]
    %v2216 = vld [vmem:[#allocation8 + $0x1e8] sm:$0xff]
    %v2217 = vld [vmem:[#allocation8 + $0x1f0] sm:$0xff]
    %v2218 = vld [vmem:[#allocation8 + $0x1f8] sm:$0xff]
    %v2219 = vld [vmem:[%s6] sm:$0xf]
    %v2221 = vperm.slane %v2219, 0
    %v2222 = vperm.slane %v2219, 1
    %v2223 = vperm.slane %v2219, 2
    %v2224 = vperm.slane %v2219, 3
    %2229 = vmatpush.msra.mxu0 %v2215
    %2230 = vmatpush.msra.mxu0 %v2211
    %2231 = vmatpush.msra.mxu0 %v2207
    %2232 = vmatpush.msra.mxu0 %v2203
    %2233 = vmatpush.msra.mxu0 %v2199
    %2234 = vmatpush.msra.mxu0 %v2195
    %2235 = vmatpush.msra.mxu0 %v2191
    %2236 = vmatpush.msra.mxu0 %v2187
    %2237 = vmatpush.msra.mxu0 %v2183
    %2238 = vmatpush.msra.mxu0 %v2179
    %2239 = vmatpush.msra.mxu0 %v2175
    %2240 = vmatpush.msra.mxu0 %v2171
    %2241 = vmatpush.msra.mxu0 %v2167
    %2242 = vmatpush.msra.mxu0 %v2163
    %2243 = vmatpush.msra.mxu0 %v2159
    %2244 = vmatpush.msra.mxu0 %v2155
    %2245 = vmatmul.f32.gmra.mxu0 %v2147
    %v2246 = vpop.f32.mrf.mxu0
    %v2247 = vadd.f32 %v2221, %v2246
    %2248 = vmatmul.f32.gmra.mxu0 %v2148
    %v2249 = vpop.f32.mrf.mxu0
    %v2250 = vadd.f32 %v2221, %v2249
    %2251 = vmatmul.f32.gmra.mxu0 %v2149
    %v2252 = vpop.f32.mrf.mxu0
    %v2253 = vadd.f32 %v2221, %v2252
    %2254 = vmatmul.f32.gmra.mxu0 %v2150
    %v2255 = vpop.f32.mrf.mxu0
    %v2256 = vadd.f32 %v2221, %v2255
    %2257 = vmatmul.f32.gmra.mxu0 %v2151
    %v2258 = vpop.f32.mrf.mxu0
    %v2259 = vadd.f32 %v2221, %v2258
    %2260 = vmatmul.f32.gmra.mxu0 %v2152
    %v2261 = vpop.f32.mrf.mxu0
    %v2262 = vadd.f32 %v2221, %v2261
    %2263 = vmatmul.f32.gmra.mxu0 %v2153
    %v2264 = vpop.f32.mrf.mxu0
    %v2265 = vadd.f32 %v2221, %v2264
    %2266 = vmatmul.f32.gmra.mxu0 %v2154
    %v2267 = vpop.f32.mrf.mxu0
    %v2268 = vadd.f32 %v2221, %v2267
    %2269 = vdwg.mxu0
    %2270 = vmatpush.msra.mxu0 %v2216
    %2271 = vmatpush.msra.mxu0 %v2212
    %2272 = vmatpush.msra.mxu0 %v2208
    %2273 = vmatpush.msra.mxu0 %v2204
    %2274 = vmatpush.msra.mxu0 %v2200
    %2275 = vmatpush.msra.mxu0 %v2196
    %2276 = vmatpush.msra.mxu0 %v2192
    %2277 = vmatpush.msra.mxu0 %v2188
    %2278 = vmatpush.msra.mxu0 %v2184
    %2279 = vmatpush.msra.mxu0 %v2180
    %2280 = vmatpush.msra.mxu0 %v2176
    %2281 = vmatpush.msra.mxu0 %v2172
    %2282 = vmatpush.msra.mxu0 %v2168
    %2283 = vmatpush.msra.mxu0 %v2164
    %2284 = vmatpush.msra.mxu0 %v2160
    %2285 = vmatpush.msra.mxu0 %v2156
    %2286 = vmatmul.f32.gmra.mxu0 %v2147
    %v2287 = vpop.f32.mrf.mxu0
    %v2288 = vadd.f32 %v2222, %v2287
    %2289 = vmatmul.f32.gmra.mxu0 %v2148
    %v2290 = vpop.f32.mrf.mxu0
    %v2291 = vadd.f32 %v2222, %v2290
    %2292 = vmatmul.f32.gmra.mxu0 %v2149
    %v2293 = vpop.f32.mrf.mxu0
    %v2294 = vadd.f32 %v2222, %v2293
    %2295 = vmatmul.f32.gmra.mxu0 %v2150
    %v2296 = vpop.f32.mrf.mxu0
    %v2297 = vadd.f32 %v2222, %v2296
    %2298 = vmatmul.f32.gmra.mxu0 %v2151
    %v2299 = vpop.f32.mrf.mxu0
    %v2300 = vadd.f32 %v2222, %v2299
    %2301 = vmatmul.f32.gmra.mxu0 %v2152
    %v2302 = vpop.f32.mrf.mxu0
    %v2303 = vadd.f32 %v2222, %v2302
    %2304 = vmatmul.f32.gmra.mxu0 %v2153
    %v2305 = vpop.f32.mrf.mxu0
    %v2306 = vadd.f32 %v2222, %v2305
    %2307 = vmatmul.f32.gmra.mxu0 %v2154
    %v2308 = vpop.f32.mrf.mxu0
    %v2309 = vadd.f32 %v2222, %v2308
    %2310 = vdwg.mxu0
    %2311 = vmatpush.msra.mxu0 %v2217
    %2312 = vmatpush.msra.mxu0 %v2213
    %2313 = vmatpush.msra.mxu0 %v2209
    %2314 = vmatpush.msra.mxu0 %v2205
    %2315 = vmatpush.msra.mxu0 %v2201
    %2316 = vmatpush.msra.mxu0 %v2197
    %2317 = vmatpush.msra.mxu0 %v2193
    %2318 = vmatpush.msra.mxu0 %v2189
    %2319 = vmatpush.msra.mxu0 %v2185
    %2320 = vmatpush.msra.mxu0 %v2181
    %2321 = vmatpush.msra.mxu0 %v2177
    %2322 = vmatpush.msra.mxu0 %v2173
    %2323 = vmatpush.msra.mxu0 %v2169
    %2324 = vmatpush.msra.mxu0 %v2165
    %2325 = vmatpush.msra.mxu0 %v2161
    %2326 = vmatpush.msra.mxu0 %v2157
    %2327 = vmatmul.f32.gmra.mxu0 %v2147
    %v2328 = vpop.f32.mrf.mxu0
    %v2329 = vadd.f32 %v2223, %v2328
    %2330 = vmatmul.f32.gmra.mxu0 %v2148
    %v2331 = vpop.f32.mrf.mxu0
    %v2332 = vadd.f32 %v2223, %v2331
    %2333 = vmatmul.f32.gmra.mxu0 %v2149
    %v2334 = vpop.f32.mrf.mxu0
    %v2335 = vadd.f32 %v2223, %v2334
    %2336 = vmatmul.f32.gmra.mxu0 %v2150
    %v2337 = vpop.f32.mrf.mxu0
    %v2338 = vadd.f32 %v2223, %v2337
    %2339 = vmatmul.f32.gmra.mxu0 %v2151
    %v2340 = vpop.f32.mrf.mxu0
    %v2341 = vadd.f32 %v2223, %v2340
    %2342 = vmatmul.f32.gmra.mxu0 %v2152
    %v2343 = vpop.f32.mrf.mxu0
    %v2344 = vadd.f32 %v2223, %v2343
    %2345 = vmatmul.f32.gmra.mxu0 %v2153
    %v2346 = vpop.f32.mrf.mxu0
    %v2347 = vadd.f32 %v2223, %v2346
    %2348 = vmatmul.f32.gmra.mxu0 %v2154
    %v2349 = vpop.f32.mrf.mxu0
    %v2350 = vadd.f32 %v2223, %v2349
    %2351 = vdwg.mxu0
    %2352 = vmatpush.msra.mxu0 %v2218
    %2353 = vmatpush.msra.mxu0 %v2214
    %2354 = vmatpush.msra.mxu0 %v2210
    %2355 = vmatpush.msra.mxu0 %v2206
    %2356 = vmatpush.msra.mxu0 %v2202
    %2357 = vmatpush.msra.mxu0 %v2198
    %2358 = vmatpush.msra.mxu0 %v2194
    %2359 = vmatpush.msra.mxu0 %v2190
    %2360 = vmatpush.msra.mxu0 %v2186
    %2361 = vmatpush.msra.mxu0 %v2182
    %2362 = vmatpush.msra.mxu0 %v2178
    %2363 = vmatpush.msra.mxu0 %v2174
    %2364 = vmatpush.msra.mxu0 %v2170
    %2365 = vmatpush.msra.mxu0 %v2166
    %2366 = vmatpush.msra.mxu0 %v2162
    %2367 = vmatpush.msra.mxu0 %v2158
    %2368 = vmatmul.f32.gmra.mxu0 %v2147
    %v2369 = vpop.f32.mrf.mxu0
    %v2370 = vadd.f32 %v2224, %v2369
    %2371 = vmatmul.f32.gmra.mxu0 %v2148
    %v2372 = vpop.f32.mrf.mxu0
    %v2373 = vadd.f32 %v2224, %v2372
    %2374 = vmatmul.f32.gmra.mxu0 %v2149
    %v2375 = vpop.f32.mrf.mxu0
    %v2376 = vadd.f32 %v2224, %v2375
    %2377 = vmatmul.f32.gmra.mxu0 %v2150
    %v2378 = vpop.f32.mrf.mxu0
    %v2379 = vadd.f32 %v2224, %v2378
    %2380 = vmatmul.f32.gmra.mxu0 %v2151
    %v2381 = vpop.f32.mrf.mxu0
    %v2382 = vadd.f32 %v2224, %v2381
    %2383 = vmatmul.f32.gmra.mxu0 %v2152
    %v2384 = vpop.f32.mrf.mxu0
    %v2385 = vadd.f32 %v2224, %v2384
    %2386 = vmatmul.f32.gmra.mxu0 %v2153
    %v2387 = vpop.f32.mrf.mxu0
    %v2388 = vadd.f32 %v2224, %v2387
    %2389 = vmatmul.f32.gmra.mxu0 %v2154
    %v2390 = vpop.f32.mrf.mxu0
    %v2391 = vadd.f32 %v2224, %v2390
    %2392 = vdwg.mxu0
    %2393 = vst [vmem:[#allocation2] sm:$0xff] %v2247
    %2394 = vst [vmem:[#allocation2 + $0x8] sm:$0xff] %v2288
    %2395 = vst [vmem:[#allocation2 + $0x10] sm:$0xff] %v2329
    %2396 = vst [vmem:[#allocation2 + $0x18] sm:$0xff] %v2370
    %2397 = vst [vmem:[#allocation2 + $0x20] sm:$0xff] %v2250
    %2398 = vst [vmem:[#allocation2 + $0x28] sm:$0xff] %v2291
    %2399 = vst [vmem:[#allocation2 + $0x30] sm:$0xff] %v2332
    %2400 = vst [vmem:[#allocation2 + $0x38] sm:$0xff] %v2373
    %2401 = vst [vmem:[#allocation2 + $0x40] sm:$0xff] %v2253
    %2402 = vst [vmem:[#allocation2 + $0x48] sm:$0xff] %v2294
    %2403 = vst [vmem:[#allocation2 + $0x50] sm:$0xff] %v2335
    %2404 = vst [vmem:[#allocation2 + $0x58] sm:$0xff] %v2376
    %2405 = vst [vmem:[#allocation2 + $0x60] sm:$0xff] %v2256
    %2406 = vst [vmem:[#allocation2 + $0x68] sm:$0xff] %v2297
    %2407 = vst [vmem:[#allocation2 + $0x70] sm:$0xff] %v2338
    %2408 = vst [vmem:[#allocation2 + $0x78] sm:$0xff] %v2379
    %2409 = vst [vmem:[#allocation2 + $0x80] sm:$0xff] %v2259
    %2410 = vst [vmem:[#allocation2 + $0x88] sm:$0xff] %v2300
    %2411 = vst [vmem:[#allocation2 + $0x90] sm:$0xff] %v2341
    %2412 = vst [vmem:[#allocation2 + $0x98] sm:$0xff] %v2382
    %2413 = vst [vmem:[#allocation2 + $0xa0] sm:$0xff] %v2262
    %2414 = vst [vmem:[#allocation2 + $0xa8] sm:$0xff] %v2303
    %2415 = vst [vmem:[#allocation2 + $0xb0] sm:$0xff] %v2344
    %2416 = vst [vmem:[#allocation2 + $0xb8] sm:$0xff] %v2385
    %2417 = vst [vmem:[#allocation2 + $0xc0] sm:$0xff] %v2265
    %2418 = vst [vmem:[#allocation2 + $0xc8] sm:$0xff] %v2306
    %2419 = vst [vmem:[#allocation2 + $0xd0] sm:$0xff] %v2347
    %2420 = vst [vmem:[#allocation2 + $0xd8] sm:$0xff] %v2388
    %2421 = vst [vmem:[#allocation2 + $0xe0] sm:$0xff] %v2268
    %2422 = vst [vmem:[#allocation2 + $0xe8] sm:$0xff] %v2309
    %2423 = vst [vmem:[#allocation2 + $0xf0] sm:$0xff] %v2350
    %2424 = vst [vmem:[#allocation2 + $0xf8] sm:$0xff] %v2391
    %v2425 = vld [vmem:[%s390] sm:$0xff]
    %v2426 = vld [vmem:[%s390 + $0x8] sm:$0xff]
    %v2427 = vld [vmem:[%s390 + $0x10] sm:$0xff]
    %v2428 = vld [vmem:[%s390 + $0x18] sm:$0xff]
    %v2429 = vld [vmem:[#allocation9] sm:$0xff]
    %v2430 = vld [vmem:[#allocation9 + $0x8] sm:$0xff]
    %v2431 = vld [vmem:[#allocation9 + $0x10] sm:$0xff]
    %v2432 = vld [vmem:[#allocation9 + $0x18] sm:$0xff]
    %v2433 = vld [vmem:[#allocation9 + $0x20] sm:$0xff]
    %v2434 = vld [vmem:[#allocation9 + $0x28] sm:$0xff]
    %v2435 = vld [vmem:[#allocation9 + $0x30] sm:$0xff]
    %v2436 = vld [vmem:[#allocation9 + $0x38] sm:$0xff]
    %v2437 = vld [vmem:[#allocation9 + $0x40] sm:$0xff]
    %v2438 = vld [vmem:[#allocation9 + $0x48] sm:$0xff]
    %v2439 = vld [vmem:[#allocation9 + $0x50] sm:$0xff]
    %v2440 = vld [vmem:[#allocation9 + $0x58] sm:$0xff]
    %v2441 = vld [vmem:[#allocation9 + $0x60] sm:$0xff]
    %v2442 = vld [vmem:[#allocation9 + $0x68] sm:$0xff]
    %v2443 = vld [vmem:[#allocation9 + $0x70] sm:$0xff]
    %v2444 = vld [vmem:[#allocation9 + $0x78] sm:$0xff]
    %v2445 = vld [vmem:[#allocation9 + $0x80] sm:$0xff]
    %v2446 = vld [vmem:[#allocation9 + $0x88] sm:$0xff]
    %v2447 = vld [vmem:[#allocation9 + $0x90] sm:$0xff]
    %v2448 = vld [vmem:[#allocation9 + $0x98] sm:$0xff]
    %v2449 = vld [vmem:[#allocation9 + $0xa0] sm:$0xff]
    %v2450 = vld [vmem:[#allocation9 + $0xa8] sm:$0xff]
    %v2451 = vld [vmem:[#allocation9 + $0xb0] sm:$0xff]
    %v2452 = vld [vmem:[#allocation9 + $0xb8] sm:$0xff]
    %v2453 = vld [vmem:[#allocation9 + $0xc0] sm:$0xff]
    %v2454 = vld [vmem:[#allocation9 + $0xc8] sm:$0xff]
    %v2455 = vld [vmem:[#allocation9 + $0xd0] sm:$0xff]
    %v2456 = vld [vmem:[#allocation9 + $0xd8] sm:$0xff]
    %v2457 = vld [vmem:[#allocation9 + $0xe0] sm:$0xff]
    %v2458 = vld [vmem:[#allocation9 + $0xe8] sm:$0xff]
    %v2459 = vld [vmem:[#allocation9 + $0xf0] sm:$0xff]
    %v2460 = vld [vmem:[#allocation9 + $0xf8] sm:$0xff]
    %v2461 = vld [vmem:[#allocation9 + $0x100] sm:$0xff]
    %v2462 = vld [vmem:[#allocation9 + $0x108] sm:$0xff]
    %v2463 = vld [vmem:[#allocation9 + $0x110] sm:$0xff]
    %v2464 = vld [vmem:[#allocation9 + $0x118] sm:$0xff]
    %v2465 = vld [vmem:[#allocation9 + $0x120] sm:$0xff]
    %v2466 = vld [vmem:[#allocation9 + $0x128] sm:$0xff]
    %v2467 = vld [vmem:[#allocation9 + $0x130] sm:$0xff]
    %v2468 = vld [vmem:[#allocation9 + $0x138] sm:$0xff]
    %v2469 = vld [vmem:[#allocation9 + $0x140] sm:$0xff]
    %v2470 = vld [vmem:[#allocation9 + $0x148] sm:$0xff]
    %v2471 = vld [vmem:[#allocation9 + $0x150] sm:$0xff]
    %v2472 = vld [vmem:[#allocation9 + $0x158] sm:$0xff]
    %v2473 = vld [vmem:[#allocation9 + $0x160] sm:$0xff]
    %v2474 = vld [vmem:[#allocation9 + $0x168] sm:$0xff]
    %v2475 = vld [vmem:[#allocation9 + $0x170] sm:$0xff]
    %v2476 = vld [vmem:[#allocation9 + $0x178] sm:$0xff]
    %v2477 = vld [vmem:[#allocation9 + $0x180] sm:$0xff]
    %v2478 = vld [vmem:[#allocation9 + $0x188] sm:$0xff]
    %v2479 = vld [vmem:[#allocation9 + $0x190] sm:$0xff]
    %v2480 = vld [vmem:[#allocation9 + $0x198] sm:$0xff]
    %v2481 = vld [vmem:[#allocation9 + $0x1a0] sm:$0xff]
    %v2482 = vld [vmem:[#allocation9 + $0x1a8] sm:$0xff]
    %v2483 = vld [vmem:[#allocation9 + $0x1b0] sm:$0xff]
    %v2484 = vld [vmem:[#allocation9 + $0x1b8] sm:$0xff]
    %v2485 = vld [vmem:[#allocation9 + $0x1c0] sm:$0xff]
    %v2486 = vld [vmem:[#allocation9 + $0x1c8] sm:$0xff]
    %v2487 = vld [vmem:[#allocation9 + $0x1d0] sm:$0xff]
    %v2488 = vld [vmem:[#allocation9 + $0x1d8] sm:$0xff]
    %v2489 = vld [vmem:[#allocation9 + $0x1e0] sm:$0xff]
    %v2490 = vld [vmem:[#allocation9 + $0x1e8] sm:$0xff]
    %v2491 = vld [vmem:[#allocation9 + $0x1f0] sm:$0xff]
    %v2492 = vld [vmem:[#allocation9 + $0x1f8] sm:$0xff]
    %2493 = vmatpush.msra.mxu0 %v2489
    %2494 = vmatpush.msra.mxu0 %v2485
    %2495 = vmatpush.msra.mxu0 %v2481
    %2496 = vmatpush.msra.mxu0 %v2477
    %2497 = vmatpush.msra.mxu0 %v2473
    %2498 = vmatpush.msra.mxu0 %v2469
    %2499 = vmatpush.msra.mxu0 %v2465
    %2500 = vmatpush.msra.mxu0 %v2461
    %2501 = vmatpush.msra.mxu0 %v2457
    %2502 = vmatpush.msra.mxu0 %v2453
    %2503 = vmatpush.msra.mxu0 %v2449
    %2504 = vmatpush.msra.mxu0 %v2445
    %2505 = vmatpush.msra.mxu0 %v2441
    %2506 = vmatpush.msra.mxu0 %v2437
    %2507 = vmatpush.msra.mxu0 %v2433
    %2508 = vmatpush.msra.mxu0 %v2429
    %2509 = vmatmul.f32.gmra.mxu0 0.0
    %v2510 = vpop.f32.mrf.mxu0
    %v2511 = vadd.f32 0.0, %v2510
    %2512 = vdwg.mxu0
    %2513 = vmatpush.msra.mxu0 %v2490
    %2514 = vmatpush.msra.mxu0 %v2486
    %2515 = vmatpush.msra.mxu0 %v2482
    %2516 = vmatpush.msra.mxu0 %v2478
    %2517 = vmatpush.msra.mxu0 %v2474
    %2518 = vmatpush.msra.mxu0 %v2470
    %2519 = vmatpush.msra.mxu0 %v2466
    %2520 = vmatpush.msra.mxu0 %v2462
    %2521 = vmatpush.msra.mxu0 %v2458
    %2522 = vmatpush.msra.mxu0 %v2454
    %2523 = vmatpush.msra.mxu0 %v2450
    %2524 = vmatpush.msra.mxu0 %v2446
    %2525 = vmatpush.msra.mxu0 %v2442
    %2526 = vmatpush.msra.mxu0 %v2438
    %2527 = vmatpush.msra.mxu0 %v2434
    %2528 = vmatpush.msra.mxu0 %v2430
    %2529 = vmatmul.f32.gmra.mxu0 0.0
    %v2530 = vpop.f32.mrf.mxu0
    %v2531 = vadd.f32 0.0, %v2530
    %2532 = vdwg.mxu0
    %2533 = vmatpush.msra.mxu0 %v2491
    %2534 = vmatpush.msra.mxu0 %v2487
    %2535 = vmatpush.msra.mxu0 %v2483
    %2536 = vmatpush.msra.mxu0 %v2479
    %2537 = vmatpush.msra.mxu0 %v2475
    %2538 = vmatpush.msra.mxu0 %v2471
    %2539 = vmatpush.msra.mxu0 %v2467
    %2540 = vmatpush.msra.mxu0 %v2463
    %2541 = vmatpush.msra.mxu0 %v2459
    %2542 = vmatpush.msra.mxu0 %v2455
    %2543 = vmatpush.msra.mxu0 %v2451
    %2544 = vmatpush.msra.mxu0 %v2447
    %2545 = vmatpush.msra.mxu0 %v2443
    %2546 = vmatpush.msra.mxu0 %v2439
    %2547 = vmatpush.msra.mxu0 %v2435
    %2548 = vmatpush.msra.mxu0 %v2431
    %2549 = vmatmul.f32.gmra.mxu0 0.0
    %v2550 = vpop.f32.mrf.mxu0
    %v2551 = vadd.f32 0.0, %v2550
    %2552 = vdwg.mxu0
    %2553 = vmatpush.msra.mxu0 %v2492
    %2554 = vmatpush.msra.mxu0 %v2488
    %2555 = vmatpush.msra.mxu0 %v2484
    %2556 = vmatpush.msra.mxu0 %v2480
    %2557 = vmatpush.msra.mxu0 %v2476
    %2558 = vmatpush.msra.mxu0 %v2472
    %2559 = vmatpush.msra.mxu0 %v2468
    %2560 = vmatpush.msra.mxu0 %v2464
    %2561 = vmatpush.msra.mxu0 %v2460
    %2562 = vmatpush.msra.mxu0 %v2456
    %2563 = vmatpush.msra.mxu0 %v2452
    %2564 = vmatpush.msra.mxu0 %v2448
    %2565 = vmatpush.msra.mxu0 %v2444
    %2566 = vmatpush.msra.mxu0 %v2440
    %2567 = vmatpush.msra.mxu0 %v2436
    %2568 = vmatpush.msra.mxu0 %v2432
    %2569 = vmatmul.f32.gmra.mxu0 0.0
    %v2570 = vpop.f32.mrf.mxu0
    %v2571 = vadd.f32 0.0, %v2570
    %2572 = vdwg.mxu0
    %v2573 = vadd.f32 %v2425, %v2511
    %v2574 = vadd.f32 %v2426, %v2531
    %v2575 = vadd.f32 %v2427, %v2551
    %v2576 = vadd.f32 %v2428, %v2571
    %v2577 = vxor.u32 %v2573, 2147483648
    %v2578 = vxor.u32 %v2574, 2147483648
    %v2579 = vxor.u32 %v2575, 2147483648
    %v2580 = vmul.f32 %v2577, 1.442695
    %v2581 = vpow.pop %v2580
    %v2582 = vmul.f32 %v2578, 1.442695
    %v2583 = vpow.pop %v2582
    %v2584 = vmul.f32 %v2579, 1.442695
    %v2585 = vpow.pop %v2584
    %v2586 = vadd.f32 %v2581, 1.0
    %v2587 = vadd.f32 %v2583, 1.0
    %v2588 = vadd.f32 %v2585, 1.0
    %v2589 = vrcp.pop %v2586
    %v2590 = vmul.f32 %v2586, %v2589
    %v2591 = vsub.f32 1.0, %v2590
    %v2592 = vmul.f32 %v2589, %v2591
    %v2593 = vadd.f32 %v2589, %v2592
    %vm2594 = vweird.f32 %v2586
    %vm2595 = vweird.f32 %v2589
    %vm2596 = vmor %vm2594, %vm2595
    %v2597 = vsel %vm2596, %v2589, %v2593
    %v2598 = vand.u32 2147483647, %v2586
    %vm2599 = vcmp.eq.f32.partialorder %v2598, 8.507059e+37
    %v2600 = vand.u32 %v2586, 2147483648
    %v2601 = vor.u32 1.1754944e-38, %v2600
    %v2602 = vsel %vm2599, %v2601, %v2597
    %v2603 = vmul.f32 1.0, %v2602
    %v2604 = vrcp.pop %v2587
    %v2605 = vmul.f32 %v2587, %v2604
    %v2606 = vsub.f32 1.0, %v2605
    %v2607 = vmul.f32 %v2604, %v2606
    %v2608 = vadd.f32 %v2604, %v2607
    %vm2609 = vweird.f32 %v2587
    %vm2610 = vweird.f32 %v2604
    %vm2611 = vmor %vm2609, %vm2610
    %v2612 = vsel %vm2611, %v2604, %v2608
    %v2613 = vand.u32 2147483647, %v2587
    %vm2614 = vcmp.eq.f32.partialorder %v2613, 8.507059e+37
    %v2615 = vand.u32 %v2587, 2147483648
    %v2616 = vor.u32 1.1754944e-38, %v2615
    %v2617 = vsel %vm2614, %v2616, %v2612
    %v2618 = vmul.f32 1.0, %v2617
    %v2619 = vrcp.pop %v2588
    %v2620 = vmul.f32 %v2588, %v2619
    %v2621 = vsub.f32 1.0, %v2620
    %v2622 = vmul.f32 %v2619, %v2621
    %v2623 = vadd.f32 %v2619, %v2622
    %vm2624 = vweird.f32 %v2588
    %vm2625 = vweird.f32 %v2619
    %vm2626 = vmor %vm2624, %vm2625
    %v2627 = vsel %vm2626, %v2619, %v2623
    %v2628 = vand.u32 2147483647, %v2588
    %vm2629 = vcmp.eq.f32.partialorder %v2628, 8.507059e+37
    %v2630 = vand.u32 %v2588, 2147483648
    %v2631 = vor.u32 1.1754944e-38, %v2630
    %v2632 = vsel %vm2629, %v2631, %v2627
    %v2633 = vmul.f32 1.0, %v2632
    %v2634 = vtanh.pop %v2576
    %v2635 = vmul.f32 %v2618, 0.0
    %v2636 = vmul.f32 %v2603, %v2634
    %v2637 = vadd.f32 %v2635, %v2636
    %v2638 = vtanh.pop %v2637
    %v2639 = vmul.f32 %v2633, %v2638
    %v2640 = vld [vmem:[%s609] sm:$0xff]
    %v2641 = vld [vmem:[%s609 + $0x8] sm:$0xff]
    %v2642 = vld [vmem:[%s609 + $0x10] sm:$0xff]
    %v2643 = vld [vmem:[%s609 + $0x18] sm:$0xff]
    %2644 = vmatpush.msra.mxu0 %v2489
    %2645 = vmatpush.msra.mxu0 %v2485
    %2646 = vmatpush.msra.mxu0 %v2481
    %2647 = vmatpush.msra.mxu0 %v2477
    %2648 = vmatpush.msra.mxu0 %v2473
    %2649 = vmatpush.msra.mxu0 %v2469
    %2650 = vmatpush.msra.mxu0 %v2465
    %2651 = vmatpush.msra.mxu0 %v2461
    %2652 = vmatpush.msra.mxu0 %v2457
    %2653 = vmatpush.msra.mxu0 %v2453
    %2654 = vmatpush.msra.mxu0 %v2449
    %2655 = vmatpush.msra.mxu0 %v2445
    %2656 = vmatpush.msra.mxu0 %v2441
    %2657 = vmatpush.msra.mxu0 %v2437
    %2658 = vmatpush.msra.mxu0 %v2433
    %2659 = vmatpush.msra.mxu0 %v2429
    %2660 = vmatmul.f32.gmra.mxu0 %v2639
    %v2661 = vpop.f32.mrf.mxu0
    %v2662 = vadd.f32 0.0, %v2661
    %2663 = vdwg.mxu0
    %2664 = vmatpush.msra.mxu0 %v2490
    %2665 = vmatpush.msra.mxu0 %v2486
    %2666 = vmatpush.msra.mxu0 %v2482
    %2667 = vmatpush.msra.mxu0 %v2478
    %2668 = vmatpush.msra.mxu0 %v2474
    %2669 = vmatpush.msra.mxu0 %v2470
    %2670 = vmatpush.msra.mxu0 %v2466
    %2671 = vmatpush.msra.mxu0 %v2462
    %2672 = vmatpush.msra.mxu0 %v2458
    %2673 = vmatpush.msra.mxu0 %v2454
    %2674 = vmatpush.msra.mxu0 %v2450
    %2675 = vmatpush.msra.mxu0 %v2446
    %2676 = vmatpush.msra.mxu0 %v2442
    %2677 = vmatpush.msra.mxu0 %v2438
    %2678 = vmatpush.msra.mxu0 %v2434
    %2679 = vmatpush.msra.mxu0 %v2430
    %2680 = vmatmul.f32.gmra.mxu0 %v2639
    %v2681 = vpop.f32.mrf.mxu0
    %v2682 = vadd.f32 0.0, %v2681
    %2683 = vdwg.mxu0
    %2684 = vmatpush.msra.mxu0 %v2491
    %2685 = vmatpush.msra.mxu0 %v2487
    %2686 = vmatpush.msra.mxu0 %v2483
    %2687 = vmatpush.msra.mxu0 %v2479
    %2688 = vmatpush.msra.mxu0 %v2475
    %2689 = vmatpush.msra.mxu0 %v2471
    %2690 = vmatpush.msra.mxu0 %v2467
    %2691 = vmatpush.msra.mxu0 %v2463
    %2692 = vmatpush.msra.mxu0 %v2459
    %2693 = vmatpush.msra.mxu0 %v2455
    %2694 = vmatpush.msra.mxu0 %v2451
    %2695 = vmatpush.msra.mxu0 %v2447
    %2696 = vmatpush.msra.mxu0 %v2443
    %2697 = vmatpush.msra.mxu0 %v2439
    %2698 = vmatpush.msra.mxu0 %v2435
    %2699 = vmatpush.msra.mxu0 %v2431
    %2700 = vmatmul.f32.gmra.mxu0 %v2639
    %v2701 = vpop.f32.mrf.mxu0
    %v2702 = vadd.f32 0.0, %v2701
    %2703 = vdwg.mxu0
    %2704 = vmatpush.msra.mxu0 %v2492
    %2705 = vmatpush.msra.mxu0 %v2488
    %2706 = vmatpush.msra.mxu0 %v2484
    %2707 = vmatpush.msra.mxu0 %v2480
    %2708 = vmatpush.msra.mxu0 %v2476
    %2709 = vmatpush.msra.mxu0 %v2472
    %2710 = vmatpush.msra.mxu0 %v2468
    %2711 = vmatpush.msra.mxu0 %v2464
    %2712 = vmatpush.msra.mxu0 %v2460
    %2713 = vmatpush.msra.mxu0 %v2456
    %2714 = vmatpush.msra.mxu0 %v2452
    %2715 = vmatpush.msra.mxu0 %v2448
    %2716 = vmatpush.msra.mxu0 %v2444
    %2717 = vmatpush.msra.mxu0 %v2440
    %2718 = vmatpush.msra.mxu0 %v2436
    %2719 = vmatpush.msra.mxu0 %v2432
    %2720 = vmatmul.f32.gmra.mxu0 %v2639
    %v2721 = vpop.f32.mrf.mxu0
    %v2722 = vadd.f32 0.0, %v2721
    %2723 = vdwg.mxu0
    %v2724 = vadd.f32 %v2640, %v2662
    %v2725 = vadd.f32 %v2641, %v2682
    %v2726 = vadd.f32 %v2642, %v2702
    %v2727 = vadd.f32 %v2643, %v2722
    %v2728 = vxor.u32 %v2724, 2147483648
    %v2729 = vxor.u32 %v2725, 2147483648
    %v2730 = vxor.u32 %v2726, 2147483648
    %v2731 = vmul.f32 %v2728, 1.442695
    %v2732 = vpow.pop %v2731
    %v2733 = vmul.f32 %v2729, 1.442695
    %v2734 = vpow.pop %v2733
    %v2735 = vmul.f32 %v2730, 1.442695
    %v2736 = vpow.pop %v2735
    %v2737 = vadd.f32 %v2732, 1.0
    %v2738 = vadd.f32 %v2734, 1.0
    %v2739 = vadd.f32 %v2736, 1.0
    %v2740 = vrcp.pop %v2737
    %v2741 = vmul.f32 %v2737, %v2740
    %v2742 = vsub.f32 1.0, %v2741
    %v2743 = vmul.f32 %v2740, %v2742
    %v2744 = vadd.f32 %v2740, %v2743
    %vm2745 = vweird.f32 %v2737
    %vm2746 = vweird.f32 %v2740
    %vm2747 = vmor %vm2745, %vm2746
    %v2748 = vsel %vm2747, %v2740, %v2744
    %v2749 = vand.u32 2147483647, %v2737
    %vm2750 = vcmp.eq.f32.partialorder %v2749, 8.507059e+37
    %v2751 = vand.u32 %v2737, 2147483648
    %v2752 = vor.u32 1.1754944e-38, %v2751
    %v2753 = vsel %vm2750, %v2752, %v2748
    %v2754 = vmul.f32 1.0, %v2753
    %v2755 = vrcp.pop %v2738
    %v2756 = vmul.f32 %v2738, %v2755
    %v2757 = vsub.f32 1.0, %v2756
    %v2758 = vmul.f32 %v2755, %v2757
    %v2759 = vadd.f32 %v2755, %v2758
    %vm2760 = vweird.f32 %v2738
    %vm2761 = vweird.f32 %v2755
    %vm2762 = vmor %vm2760, %vm2761
    %v2763 = vsel %vm2762, %v2755, %v2759
    %v2764 = vand.u32 2147483647, %v2738
    %vm2765 = vcmp.eq.f32.partialorder %v2764, 8.507059e+37
    %v2766 = vand.u32 %v2738, 2147483648
    %v2767 = vor.u32 1.1754944e-38, %v2766
    %v2768 = vsel %vm2765, %v2767, %v2763
    %v2769 = vmul.f32 1.0, %v2768
    %v2770 = vrcp.pop %v2739
    %v2771 = vmul.f32 %v2739, %v2770
    %v2772 = vsub.f32 1.0, %v2771
    %v2773 = vmul.f32 %v2770, %v2772
    %v2774 = vadd.f32 %v2770, %v2773
    %vm2775 = vweird.f32 %v2739
    %vm2776 = vweird.f32 %v2770
    %vm2777 = vmor %vm2775, %vm2776
    %v2778 = vsel %vm2777, %v2770, %v2774
    %v2779 = vand.u32 2147483647, %v2739
    %vm2780 = vcmp.eq.f32.partialorder %v2779, 8.507059e+37
    %v2781 = vand.u32 %v2739, 2147483648
    %v2782 = vor.u32 1.1754944e-38, %v2781
    %v2783 = vsel %vm2780, %v2782, %v2778
    %v2784 = vmul.f32 1.0, %v2783
    %v2785 = vtanh.pop %v2727
    %v2786 = vmul.f32 %v2769, %v2637
    %v2787 = vmul.f32 %v2754, %v2785
    %v2788 = vadd.f32 %v2786, %v2787
    %v2789 = vtanh.pop %v2788
    %v2790 = vmul.f32 %v2784, %v2789
    %v2791 = vld [vmem:[%s829] sm:$0xff]
    %v2792 = vld [vmem:[%s829 + $0x8] sm:$0xff]
    %v2793 = vld [vmem:[%s829 + $0x10] sm:$0xff]
    %v2794 = vld [vmem:[%s829 + $0x18] sm:$0xff]
    %2795 = vmatpush.msra.mxu0 %v2489
    %2796 = vmatpush.msra.mxu0 %v2485
    %2797 = vmatpush.msra.mxu0 %v2481
    %2798 = vmatpush.msra.mxu0 %v2477
    %2799 = vmatpush.msra.mxu0 %v2473
    %2800 = vmatpush.msra.mxu0 %v2469
    %2801 = vmatpush.msra.mxu0 %v2465
    %2802 = vmatpush.msra.mxu0 %v2461
    %2803 = vmatpush.msra.mxu0 %v2457
    %2804 = vmatpush.msra.mxu0 %v2453
    %2805 = vmatpush.msra.mxu0 %v2449
    %2806 = vmatpush.msra.mxu0 %v2445
    %2807 = vmatpush.msra.mxu0 %v2441
    %2808 = vmatpush.msra.mxu0 %v2437
    %2809 = vmatpush.msra.mxu0 %v2433
    %2810 = vmatpush.msra.mxu0 %v2429
    %2811 = vmatmul.f32.gmra.mxu0 %v2790
    %v2812 = vpop.f32.mrf.mxu0
    %v2813 = vadd.f32 0.0, %v2812
    %2814 = vdwg.mxu0
    %2815 = vmatpush.msra.mxu0 %v2490
    %2816 = vmatpush.msra.mxu0 %v2486
    %2817 = vmatpush.msra.mxu0 %v2482
    %2818 = vmatpush.msra.mxu0 %v2478
    %2819 = vmatpush.msra.mxu0 %v2474
    %2820 = vmatpush.msra.mxu0 %v2470
    %2821 = vmatpush.msra.mxu0 %v2466
    %2822 = vmatpush.msra.mxu0 %v2462
    %2823 = vmatpush.msra.mxu0 %v2458
    %2824 = vmatpush.msra.mxu0 %v2454
    %2825 = vmatpush.msra.mxu0 %v2450
    %2826 = vmatpush.msra.mxu0 %v2446
    %2827 = vmatpush.msra.mxu0 %v2442
    %2828 = vmatpush.msra.mxu0 %v2438
    %2829 = vmatpush.msra.mxu0 %v2434
    %2830 = vmatpush.msra.mxu0 %v2430
    %2831 = vmatmul.f32.gmra.mxu0 %v2790
    %v2832 = vpop.f32.mrf.mxu0
    %v2833 = vadd.f32 0.0, %v2832
    %2834 = vdwg.mxu0
    %2835 = vmatpush.msra.mxu0 %v2491
    %2836 = vmatpush.msra.mxu0 %v2487
    %2837 = vmatpush.msra.mxu0 %v2483
    %2838 = vmatpush.msra.mxu0 %v2479
    %2839 = vmatpush.msra.mxu0 %v2475
    %2840 = vmatpush.msra.mxu0 %v2471
    %2841 = vmatpush.msra.mxu0 %v2467
    %2842 = vmatpush.msra.mxu0 %v2463
    %2843 = vmatpush.msra.mxu0 %v2459
    %2844 = vmatpush.msra.mxu0 %v2455
    %2845 = vmatpush.msra.mxu0 %v2451
    %2846 = vmatpush.msra.mxu0 %v2447
    %2847 = vmatpush.msra.mxu0 %v2443
    %2848 = vmatpush.msra.mxu0 %v2439
    %2849 = vmatpush.msra.mxu0 %v2435
    %2850 = vmatpush.msra.mxu0 %v2431
    %2851 = vmatmul.f32.gmra.mxu0 %v2790
    %v2852 = vpop.f32.mrf.mxu0
    %v2853 = vadd.f32 0.0, %v2852
    %2854 = vdwg.mxu0
    %2855 = vmatpush.msra.mxu0 %v2492
    %2856 = vmatpush.msra.mxu0 %v2488
    %2857 = vmatpush.msra.mxu0 %v2484
    %2858 = vmatpush.msra.mxu0 %v2480
    %2859 = vmatpush.msra.mxu0 %v2476
    %2860 = vmatpush.msra.mxu0 %v2472
    %2861 = vmatpush.msra.mxu0 %v2468
    %2862 = vmatpush.msra.mxu0 %v2464
    %2863 = vmatpush.msra.mxu0 %v2460
    %2864 = vmatpush.msra.mxu0 %v2456
    %2865 = vmatpush.msra.mxu0 %v2452
    %2866 = vmatpush.msra.mxu0 %v2448
    %2867 = vmatpush.msra.mxu0 %v2444
    %2868 = vmatpush.msra.mxu0 %v2440
    %2869 = vmatpush.msra.mxu0 %v2436
    %2870 = vmatpush.msra.mxu0 %v2432
    %2871 = vmatmul.f32.gmra.mxu0 %v2790
    %v2872 = vpop.f32.mrf.mxu0
    %v2873 = vadd.f32 0.0, %v2872
    %2874 = vdwg.mxu0
    %v2875 = vadd.f32 %v2791, %v2813
    %v2876 = vadd.f32 %v2792, %v2833
    %v2877 = vadd.f32 %v2793, %v2853
    %v2878 = vadd.f32 %v2794, %v2873
    %v2879 = vxor.u32 %v2875, 2147483648
    %v2880 = vxor.u32 %v2876, 2147483648
    %v2881 = vxor.u32 %v2877, 2147483648
    %v2882 = vmul.f32 %v2879, 1.442695
    %v2883 = vpow.pop %v2882
    %v2884 = vmul.f32 %v2880, 1.442695
    %v2885 = vpow.pop %v2884
    %v2886 = vmul.f32 %v2881, 1.442695
    %v2887 = vpow.pop %v2886
    %v2888 = vadd.f32 %v2883, 1.0
    %v2889 = vadd.f32 %v2885, 1.0
    %v2890 = vadd.f32 %v2887, 1.0
    %v2891 = vrcp.pop %v2888
    %v2892 = vmul.f32 %v2888, %v2891
    %v2893 = vsub.f32 1.0, %v2892
    %v2894 = vmul.f32 %v2891, %v2893
    %v2895 = vadd.f32 %v2891, %v2894
    %vm2896 = vweird.f32 %v2888
    %vm2897 = vweird.f32 %v2891
    %vm2898 = vmor %vm2896, %vm2897
    %v2899 = vsel %vm2898, %v2891, %v2895
    %v2900 = vand.u32 2147483647, %v2888
    %vm2901 = vcmp.eq.f32.partialorder %v2900, 8.507059e+37
    %v2902 = vand.u32 %v2888, 2147483648
    %v2903 = vor.u32 1.1754944e-38, %v2902
    %v2904 = vsel %vm2901, %v2903, %v2899
    %v2905 = vmul.f32 1.0, %v2904
    %v2906 = vrcp.pop %v2889
    %v2907 = vmul.f32 %v2889, %v2906
    %v2908 = vsub.f32 1.0, %v2907
    %v2909 = vmul.f32 %v2906, %v2908
    %v2910 = vadd.f32 %v2906, %v2909
    %vm2911 = vweird.f32 %v2889
    %vm2912 = vweird.f32 %v2906
    %vm2913 = vmor %vm2911, %vm2912
    %v2914 = vsel %vm2913, %v2906, %v2910
    %v2915 = vand.u32 2147483647, %v2889
    %vm2916 = vcmp.eq.f32.partialorder %v2915, 8.507059e+37
    %v2917 = vand.u32 %v2889, 2147483648
    %v2918 = vor.u32 1.1754944e-38, %v2917
    %v2919 = vsel %vm2916, %v2918, %v2914
    %v2920 = vmul.f32 1.0, %v2919
    %v2921 = vrcp.pop %v2890
    %v2922 = vmul.f32 %v2890, %v2921
    %v2923 = vsub.f32 1.0, %v2922
    %v2924 = vmul.f32 %v2921, %v2923
    %v2925 = vadd.f32 %v2921, %v2924
    %vm2926 = vweird.f32 %v2890
    %vm2927 = vweird.f32 %v2921
    %vm2928 = vmor %vm2926, %vm2927
    %v2929 = vsel %vm2928, %v2921, %v2925
    %v2930 = vand.u32 2147483647, %v2890
    %vm2931 = vcmp.eq.f32.partialorder %v2930, 8.507059e+37
    %v2932 = vand.u32 %v2890, 2147483648
    %v2933 = vor.u32 1.1754944e-38, %v2932
    %v2934 = vsel %vm2931, %v2933, %v2929
    %v2935 = vmul.f32 1.0, %v2934
    %v2936 = vtanh.pop %v2878
    %v2937 = vmul.f32 %v2920, %v2788
    %v2938 = vmul.f32 %v2905, %v2936
    %v2939 = vadd.f32 %v2937, %v2938
    %v2940 = vtanh.pop %v2939
    %v2941 = vmul.f32 %v2935, %v2940
    %v2942 = vld [vmem:[%s1049] sm:$0xff]
    %v2943 = vld [vmem:[%s1049 + $0x8] sm:$0xff]
    %v2944 = vld [vmem:[%s1049 + $0x10] sm:$0xff]
    %v2945 = vld [vmem:[%s1049 + $0x18] sm:$0xff]
    %2946 = vmatpush.msra.mxu0 %v2489
    %2947 = vmatpush.msra.mxu0 %v2485
    %2948 = vmatpush.msra.mxu0 %v2481
    %2949 = vmatpush.msra.mxu0 %v2477
    %2950 = vmatpush.msra.mxu0 %v2473
    %2951 = vmatpush.msra.mxu0 %v2469
    %2952 = vmatpush.msra.mxu0 %v2465
    %2953 = vmatpush.msra.mxu0 %v2461
    %2954 = vmatpush.msra.mxu0 %v2457
    %2955 = vmatpush.msra.mxu0 %v2453
    %2956 = vmatpush.msra.mxu0 %v2449
    %2957 = vmatpush.msra.mxu0 %v2445
    %2958 = vmatpush.msra.mxu0 %v2441
    %2959 = vmatpush.msra.mxu0 %v2437
    %2960 = vmatpush.msra.mxu0 %v2433
    %2961 = vmatpush.msra.mxu0 %v2429
    %2962 = vmatmul.f32.gmra.mxu0 %v2941
    %v2963 = vpop.f32.mrf.mxu0
    %v2964 = vadd.f32 0.0, %v2963
    %2965 = vdwg.mxu0
    %2966 = vmatpush.msra.mxu0 %v2490
    %2967 = vmatpush.msra.mxu0 %v2486
    %2968 = vmatpush.msra.mxu0 %v2482
    %2969 = vmatpush.msra.mxu0 %v2478
    %2970 = vmatpush.msra.mxu0 %v2474
    %2971 = vmatpush.msra.mxu0 %v2470
    %2972 = vmatpush.msra.mxu0 %v2466
    %2973 = vmatpush.msra.mxu0 %v2462
    %2974 = vmatpush.msra.mxu0 %v2458
    %2975 = vmatpush.msra.mxu0 %v2454
    %2976 = vmatpush.msra.mxu0 %v2450
    %2977 = vmatpush.msra.mxu0 %v2446
    %2978 = vmatpush.msra.mxu0 %v2442
    %2979 = vmatpush.msra.mxu0 %v2438
    %2980 = vmatpush.msra.mxu0 %v2434
    %2981 = vmatpush.msra.mxu0 %v2430
    %2982 = vmatmul.f32.gmra.mxu0 %v2941
    %v2983 = vpop.f32.mrf.mxu0
    %v2984 = vadd.f32 0.0, %v2983
    %2985 = vdwg.mxu0
    %2986 = vmatpush.msra.mxu0 %v2491
    %2987 = vmatpush.msra.mxu0 %v2487
    %2988 = vmatpush.msra.mxu0 %v2483
    %2989 = vmatpush.msra.mxu0 %v2479
    %2990 = vmatpush.msra.mxu0 %v2475
    %2991 = vmatpush.msra.mxu0 %v2471
    %2992 = vmatpush.msra.mxu0 %v2467
    %2993 = vmatpush.msra.mxu0 %v2463
    %2994 = vmatpush.msra.mxu0 %v2459
    %2995 = vmatpush.msra.mxu0 %v2455
    %2996 = vmatpush.msra.mxu0 %v2451
    %2997 = vmatpush.msra.mxu0 %v2447
    %2998 = vmatpush.msra.mxu0 %v2443
    %2999 = vmatpush.msra.mxu0 %v2439
    %3000 = vmatpush.msra.mxu0 %v2435
    %3001 = vmatpush.msra.mxu0 %v2431
    %3002 = vmatmul.f32.gmra.mxu0 %v2941
    %v3003 = vpop.f32.mrf.mxu0
    %v3004 = vadd.f32 0.0, %v3003
    %3005 = vdwg.mxu0
    %3006 = vmatpush.msra.mxu0 %v2492
    %3007 = vmatpush.msra.mxu0 %v2488
    %3008 = vmatpush.msra.mxu0 %v2484
    %3009 = vmatpush.msra.mxu0 %v2480
    %3010 = vmatpush.msra.mxu0 %v2476
    %3011 = vmatpush.msra.mxu0 %v2472
    %3012 = vmatpush.msra.mxu0 %v2468
    %3013 = vmatpush.msra.mxu0 %v2464
    %3014 = vmatpush.msra.mxu0 %v2460
    %3015 = vmatpush.msra.mxu0 %v2456
    %3016 = vmatpush.msra.mxu0 %v2452
    %3017 = vmatpush.msra.mxu0 %v2448
    %3018 = vmatpush.msra.mxu0 %v2444
    %3019 = vmatpush.msra.mxu0 %v2440
    %3020 = vmatpush.msra.mxu0 %v2436
    %3021 = vmatpush.msra.mxu0 %v2432
    %3022 = vmatmul.f32.gmra.mxu0 %v2941
    %v3023 = vpop.f32.mrf.mxu0
    %v3024 = vadd.f32 0.0, %v3023
    %3025 = vdwg.mxu0
    %v3026 = vadd.f32 %v2942, %v2964
    %v3027 = vadd.f32 %v2943, %v2984
    %v3028 = vadd.f32 %v2944, %v3004
    %v3029 = vadd.f32 %v2945, %v3024
    %v3030 = vxor.u32 %v3026, 2147483648
    %v3031 = vxor.u32 %v3027, 2147483648
    %v3032 = vxor.u32 %v3028, 2147483648
    %v3033 = vmul.f32 %v3030, 1.442695
    %v3034 = vpow.pop %v3033
    %v3035 = vmul.f32 %v3031, 1.442695
    %v3036 = vpow.pop %v3035
    %v3037 = vmul.f32 %v3032, 1.442695
    %v3038 = vpow.pop %v3037
    %v3039 = vadd.f32 %v3034, 1.0
    %v3040 = vadd.f32 %v3036, 1.0
    %v3041 = vadd.f32 %v3038, 1.0
    %v3042 = vrcp.pop %v3039
    %v3043 = vmul.f32 %v3039, %v3042
    %v3044 = vsub.f32 1.0, %v3043
    %v3045 = vmul.f32 %v3042, %v3044
    %v3046 = vadd.f32 %v3042, %v3045
    %vm3047 = vweird.f32 %v3039
    %vm3048 = vweird.f32 %v3042
    %vm3049 = vmor %vm3047, %vm3048
    %v3050 = vsel %vm3049, %v3042, %v3046
    %v3051 = vand.u32 2147483647, %v3039
    %vm3052 = vcmp.eq.f32.partialorder %v3051, 8.507059e+37
    %v3053 = vand.u32 %v3039, 2147483648
    %v3054 = vor.u32 1.1754944e-38, %v3053
    %v3055 = vsel %vm3052, %v3054, %v3050
    %v3056 = vmul.f32 1.0, %v3055
    %v3057 = vrcp.pop %v3040
    %v3058 = vmul.f32 %v3040, %v3057
    %v3059 = vsub.f32 1.0, %v3058
    %v3060 = vmul.f32 %v3057, %v3059
    %v3061 = vadd.f32 %v3057, %v3060
    %vm3062 = vweird.f32 %v3040
    %vm3063 = vweird.f32 %v3057
    %vm3064 = vmor %vm3062, %vm3063
    %v3065 = vsel %vm3064, %v3057, %v3061
    %v3066 = vand.u32 2147483647, %v3040
    %vm3067 = vcmp.eq.f32.partialorder %v3066, 8.507059e+37
    %v3068 = vand.u32 %v3040, 2147483648
    %v3069 = vor.u32 1.1754944e-38, %v3068
    %v3070 = vsel %vm3067, %v3069, %v3065
    %v3071 = vmul.f32 1.0, %v3070
    %v3072 = vrcp.pop %v3041
    %v3073 = vmul.f32 %v3041, %v3072
    %v3074 = vsub.f32 1.0, %v3073
    %v3075 = vmul.f32 %v3072, %v3074
    %v3076 = vadd.f32 %v3072, %v3075
    %vm3077 = vweird.f32 %v3041
    %vm3078 = vweird.f32 %v3072
    %vm3079 = vmor %vm3077, %vm3078
    %v3080 = vsel %vm3079, %v3072, %v3076
    %v3081 = vand.u32 2147483647, %v3041
    %vm3082 = vcmp.eq.f32.partialorder %v3081, 8.507059e+37
    %v3083 = vand.u32 %v3041, 2147483648
    %v3084 = vor.u32 1.1754944e-38, %v3083
    %v3085 = vsel %vm3082, %v3084, %v3080
    %v3086 = vmul.f32 1.0, %v3085
    %v3087 = vtanh.pop %v3029
    %v3088 = vmul.f32 %v3071, %v2939
    %v3089 = vmul.f32 %v3056, %v3087
    %v3090 = vadd.f32 %v3088, %v3089
    %v3091 = vtanh.pop %v3090
    %v3092 = vmul.f32 %v3086, %v3091
    %v3093 = vld [vmem:[%s1269] sm:$0xff]
    %v3094 = vld [vmem:[%s1269 + $0x8] sm:$0xff]
    %v3095 = vld [vmem:[%s1269 + $0x10] sm:$0xff]
    %v3096 = vld [vmem:[%s1269 + $0x18] sm:$0xff]
    %3097 = vmatpush.msra.mxu0 %v2489
    %3098 = vmatpush.msra.mxu0 %v2485
    %3099 = vmatpush.msra.mxu0 %v2481
    %3100 = vmatpush.msra.mxu0 %v2477
    %3101 = vmatpush.msra.mxu0 %v2473
    %3102 = vmatpush.msra.mxu0 %v2469
    %3103 = vmatpush.msra.mxu0 %v2465
    %3104 = vmatpush.msra.mxu0 %v2461
    %3105 = vmatpush.msra.mxu0 %v2457
    %3106 = vmatpush.msra.mxu0 %v2453
    %3107 = vmatpush.msra.mxu0 %v2449
    %3108 = vmatpush.msra.mxu0 %v2445
    %3109 = vmatpush.msra.mxu0 %v2441
    %3110 = vmatpush.msra.mxu0 %v2437
    %3111 = vmatpush.msra.mxu0 %v2433
    %3112 = vmatpush.msra.mxu0 %v2429
    %3113 = vmatmul.f32.gmra.mxu0 %v3092
    %v3114 = vpop.f32.mrf.mxu0
    %v3115 = vadd.f32 0.0, %v3114
    %3116 = vdwg.mxu0
    %3117 = vmatpush.msra.mxu0 %v2490
    %3118 = vmatpush.msra.mxu0 %v2486
    %3119 = vmatpush.msra.mxu0 %v2482
    %3120 = vmatpush.msra.mxu0 %v2478
    %3121 = vmatpush.msra.mxu0 %v2474
    %3122 = vmatpush.msra.mxu0 %v2470
    %3123 = vmatpush.msra.mxu0 %v2466
    %3124 = vmatpush.msra.mxu0 %v2462
    %3125 = vmatpush.msra.mxu0 %v2458
    %3126 = vmatpush.msra.mxu0 %v2454
    %3127 = vmatpush.msra.mxu0 %v2450
    %3128 = vmatpush.msra.mxu0 %v2446
    %3129 = vmatpush.msra.mxu0 %v2442
    %3130 = vmatpush.msra.mxu0 %v2438
    %3131 = vmatpush.msra.mxu0 %v2434
    %3132 = vmatpush.msra.mxu0 %v2430
    %3133 = vmatmul.f32.gmra.mxu0 %v3092
    %v3134 = vpop.f32.mrf.mxu0
    %v3135 = vadd.f32 0.0, %v3134
    %3136 = vdwg.mxu0
    %3137 = vmatpush.msra.mxu0 %v2491
    %3138 = vmatpush.msra.mxu0 %v2487
    %3139 = vmatpush.msra.mxu0 %v2483
    %3140 = vmatpush.msra.mxu0 %v2479
    %3141 = vmatpush.msra.mxu0 %v2475
    %3142 = vmatpush.msra.mxu0 %v2471
    %3143 = vmatpush.msra.mxu0 %v2467
    %3144 = vmatpush.msra.mxu0 %v2463
    %3145 = vmatpush.msra.mxu0 %v2459
    %3146 = vmatpush.msra.mxu0 %v2455
    %3147 = vmatpush.msra.mxu0 %v2451
    %3148 = vmatpush.msra.mxu0 %v2447
    %3149 = vmatpush.msra.mxu0 %v2443
    %3150 = vmatpush.msra.mxu0 %v2439
    %3151 = vmatpush.msra.mxu0 %v2435
    %3152 = vmatpush.msra.mxu0 %v2431
    %3153 = vmatmul.f32.gmra.mxu0 %v3092
    %v3154 = vpop.f32.mrf.mxu0
    %v3155 = vadd.f32 0.0, %v3154
    %3156 = vdwg.mxu0
    %3157 = vmatpush.msra.mxu0 %v2492
    %3158 = vmatpush.msra.mxu0 %v2488
    %3159 = vmatpush.msra.mxu0 %v2484
    %3160 = vmatpush.msra.mxu0 %v2480
    %3161 = vmatpush.msra.mxu0 %v2476
    %3162 = vmatpush.msra.mxu0 %v2472
    %3163 = vmatpush.msra.mxu0 %v2468
    %3164 = vmatpush.msra.mxu0 %v2464
    %3165 = vmatpush.msra.mxu0 %v2460
    %3166 = vmatpush.msra.mxu0 %v2456
    %3167 = vmatpush.msra.mxu0 %v2452
    %3168 = vmatpush.msra.mxu0 %v2448
    %3169 = vmatpush.msra.mxu0 %v2444
    %3170 = vmatpush.msra.mxu0 %v2440
    %3171 = vmatpush.msra.mxu0 %v2436
    %3172 = vmatpush.msra.mxu0 %v2432
    %3173 = vmatmul.f32.gmra.mxu0 %v3092
    %v3174 = vpop.f32.mrf.mxu0
    %v3175 = vadd.f32 0.0, %v3174
    %3176 = vdwg.mxu0
    %v3177 = vadd.f32 %v3093, %v3115
    %v3178 = vadd.f32 %v3094, %v3135
    %v3179 = vadd.f32 %v3095, %v3155
    %v3180 = vadd.f32 %v3096, %v3175
    %v3181 = vxor.u32 %v3177, 2147483648
    %v3182 = vxor.u32 %v3178, 2147483648
    %v3183 = vxor.u32 %v3179, 2147483648
    %v3184 = vmul.f32 %v3181, 1.442695
    %v3185 = vpow.pop %v3184
    %v3186 = vmul.f32 %v3182, 1.442695
    %v3187 = vpow.pop %v3186
    %v3188 = vmul.f32 %v3183, 1.442695
    %v3189 = vpow.pop %v3188
    %v3190 = vadd.f32 %v3185, 1.0
    %v3191 = vadd.f32 %v3187, 1.0
    %v3192 = vadd.f32 %v3189, 1.0
    %v3193 = vrcp.pop %v3190
    %v3194 = vmul.f32 %v3190, %v3193
    %v3195 = vsub.f32 1.0, %v3194
    %v3196 = vmul.f32 %v3193, %v3195
    %v3197 = vadd.f32 %v3193, %v3196
    %vm3198 = vweird.f32 %v3190
    %vm3199 = vweird.f32 %v3193
    %vm3200 = vmor %vm3198, %vm3199
    %v3201 = vsel %vm3200, %v3193, %v3197
    %v3202 = vand.u32 2147483647, %v3190
    %vm3203 = vcmp.eq.f32.partialorder %v3202, 8.507059e+37
    %v3204 = vand.u32 %v3190, 2147483648
    %v3205 = vor.u32 1.1754944e-38, %v3204
    %v3206 = vsel %vm3203, %v3205, %v3201
    %v3207 = vmul.f32 1.0, %v3206
    %v3208 = vrcp.pop %v3191
    %v3209 = vmul.f32 %v3191, %v3208
    %v3210 = vsub.f32 1.0, %v3209
    %v3211 = vmul.f32 %v3208, %v3210
    %v3212 = vadd.f32 %v3208, %v3211
    %vm3213 = vweird.f32 %v3191
    %vm3214 = vweird.f32 %v3208
    %vm3215 = vmor %vm3213, %vm3214
    %v3216 = vsel %vm3215, %v3208, %v3212
    %v3217 = vand.u32 2147483647, %v3191
    %vm3218 = vcmp.eq.f32.partialorder %v3217, 8.507059e+37
    %v3219 = vand.u32 %v3191, 2147483648
    %v3220 = vor.u32 1.1754944e-38, %v3219
    %v3221 = vsel %vm3218, %v3220, %v3216
    %v3222 = vmul.f32 1.0, %v3221
    %v3223 = vrcp.pop %v3192
    %v3224 = vmul.f32 %v3192, %v3223
    %v3225 = vsub.f32 1.0, %v3224
    %v3226 = vmul.f32 %v3223, %v3225
    %v3227 = vadd.f32 %v3223, %v3226
    %vm3228 = vweird.f32 %v3192
    %vm3229 = vweird.f32 %v3223
    %vm3230 = vmor %vm3228, %vm3229
    %v3231 = vsel %vm3230, %v3223, %v3227
    %v3232 = vand.u32 2147483647, %v3192
    %vm3233 = vcmp.eq.f32.partialorder %v3232, 8.507059e+37
    %v3234 = vand.u32 %v3192, 2147483648
    %v3235 = vor.u32 1.1754944e-38, %v3234
    %v3236 = vsel %vm3233, %v3235, %v3231
    %v3237 = vmul.f32 1.0, %v3236
    %v3238 = vtanh.pop %v3180
    %v3239 = vmul.f32 %v3222, %v3090
    %v3240 = vmul.f32 %v3207, %v3238
    %v3241 = vadd.f32 %v3239, %v3240
    %v3242 = vtanh.pop %v3241
    %v3243 = vmul.f32 %v3237, %v3242
    %v3244 = vld [vmem:[%s1489] sm:$0xff]
    %v3245 = vld [vmem:[%s1489 + $0x8] sm:$0xff]
    %v3246 = vld [vmem:[%s1489 + $0x10] sm:$0xff]
    %v3247 = vld [vmem:[%s1489 + $0x18] sm:$0xff]
    %3248 = vmatpush.msra.mxu0 %v2489
    %3249 = vmatpush.msra.mxu0 %v2485
    %3250 = vmatpush.msra.mxu0 %v2481
    %3251 = vmatpush.msra.mxu0 %v2477
    %3252 = vmatpush.msra.mxu0 %v2473
    %3253 = vmatpush.msra.mxu0 %v2469
    %3254 = vmatpush.msra.mxu0 %v2465
    %3255 = vmatpush.msra.mxu0 %v2461
    %3256 = vmatpush.msra.mxu0 %v2457
    %3257 = vmatpush.msra.mxu0 %v2453
    %3258 = vmatpush.msra.mxu0 %v2449
    %3259 = vmatpush.msra.mxu0 %v2445
    %3260 = vmatpush.msra.mxu0 %v2441
    %3261 = vmatpush.msra.mxu0 %v2437
    %3262 = vmatpush.msra.mxu0 %v2433
    %3263 = vmatpush.msra.mxu0 %v2429
    %3264 = vmatmul.f32.gmra.mxu0 %v3243
    %v3265 = vpop.f32.mrf.mxu0
    %v3266 = vadd.f32 0.0, %v3265
    %3267 = vdwg.mxu0
    %3268 = vmatpush.msra.mxu0 %v2490
    %3269 = vmatpush.msra.mxu0 %v2486
    %3270 = vmatpush.msra.mxu0 %v2482
    %3271 = vmatpush.msra.mxu0 %v2478
    %3272 = vmatpush.msra.mxu0 %v2474
    %3273 = vmatpush.msra.mxu0 %v2470
    %3274 = vmatpush.msra.mxu0 %v2466
    %3275 = vmatpush.msra.mxu0 %v2462
    %3276 = vmatpush.msra.mxu0 %v2458
    %3277 = vmatpush.msra.mxu0 %v2454
    %3278 = vmatpush.msra.mxu0 %v2450
    %3279 = vmatpush.msra.mxu0 %v2446
    %3280 = vmatpush.msra.mxu0 %v2442
    %3281 = vmatpush.msra.mxu0 %v2438
    %3282 = vmatpush.msra.mxu0 %v2434
    %3283 = vmatpush.msra.mxu0 %v2430
    %3284 = vmatmul.f32.gmra.mxu0 %v3243
    %v3285 = vpop.f32.mrf.mxu0
    %v3286 = vadd.f32 0.0, %v3285
    %3287 = vdwg.mxu0
    %3288 = vmatpush.msra.mxu0 %v2491
    %3289 = vmatpush.msra.mxu0 %v2487
    %3290 = vmatpush.msra.mxu0 %v2483
    %3291 = vmatpush.msra.mxu0 %v2479
    %3292 = vmatpush.msra.mxu0 %v2475
    %3293 = vmatpush.msra.mxu0 %v2471
    %3294 = vmatpush.msra.mxu0 %v2467
    %3295 = vmatpush.msra.mxu0 %v2463
    %3296 = vmatpush.msra.mxu0 %v2459
    %3297 = vmatpush.msra.mxu0 %v2455
    %3298 = vmatpush.msra.mxu0 %v2451
    %3299 = vmatpush.msra.mxu0 %v2447
    %3300 = vmatpush.msra.mxu0 %v2443
    %3301 = vmatpush.msra.mxu0 %v2439
    %3302 = vmatpush.msra.mxu0 %v2435
    %3303 = vmatpush.msra.mxu0 %v2431
    %3304 = vmatmul.f32.gmra.mxu0 %v3243
    %v3305 = vpop.f32.mrf.mxu0
    %v3306 = vadd.f32 0.0, %v3305
    %3307 = vdwg.mxu0
    %3308 = vmatpush.msra.mxu0 %v2492
    %3309 = vmatpush.msra.mxu0 %v2488
    %3310 = vmatpush.msra.mxu0 %v2484
    %3311 = vmatpush.msra.mxu0 %v2480
    %3312 = vmatpush.msra.mxu0 %v2476
    %3313 = vmatpush.msra.mxu0 %v2472
    %3314 = vmatpush.msra.mxu0 %v2468
    %3315 = vmatpush.msra.mxu0 %v2464
    %3316 = vmatpush.msra.mxu0 %v2460
    %3317 = vmatpush.msra.mxu0 %v2456
    %3318 = vmatpush.msra.mxu0 %v2452
    %3319 = vmatpush.msra.mxu0 %v2448
    %3320 = vmatpush.msra.mxu0 %v2444
    %3321 = vmatpush.msra.mxu0 %v2440
    %3322 = vmatpush.msra.mxu0 %v2436
    %3323 = vmatpush.msra.mxu0 %v2432
    %3324 = vmatmul.f32.gmra.mxu0 %v3243
    %v3325 = vpop.f32.mrf.mxu0
    %v3326 = vadd.f32 0.0, %v3325
    %3327 = vdwg.mxu0
    %v3328 = vadd.f32 %v3244, %v3266
    %v3329 = vadd.f32 %v3245, %v3286
    %v3330 = vadd.f32 %v3246, %v3306
    %v3331 = vadd.f32 %v3247, %v3326
    %v3332 = vxor.u32 %v3328, 2147483648
    %v3333 = vxor.u32 %v3329, 2147483648
    %v3334 = vxor.u32 %v3330, 2147483648
    %v3335 = vmul.f32 %v3332, 1.442695
    %v3336 = vpow.pop %v3335
    %v3337 = vmul.f32 %v3333, 1.442695
    %v3338 = vpow.pop %v3337
    %v3339 = vmul.f32 %v3334, 1.442695
    %v3340 = vpow.pop %v3339
    %v3341 = vadd.f32 %v3336, 1.0
    %v3342 = vadd.f32 %v3338, 1.0
    %v3343 = vadd.f32 %v3340, 1.0
    %v3344 = vrcp.pop %v3341
    %v3345 = vmul.f32 %v3341, %v3344
    %v3346 = vsub.f32 1.0, %v3345
    %v3347 = vmul.f32 %v3344, %v3346
    %v3348 = vadd.f32 %v3344, %v3347
    %vm3349 = vweird.f32 %v3341
    %vm3350 = vweird.f32 %v3344
    %vm3351 = vmor %vm3349, %vm3350
    %v3352 = vsel %vm3351, %v3344, %v3348
    %v3353 = vand.u32 2147483647, %v3341
    %vm3354 = vcmp.eq.f32.partialorder %v3353, 8.507059e+37
    %v3355 = vand.u32 %v3341, 2147483648
    %v3356 = vor.u32 1.1754944e-38, %v3355
    %v3357 = vsel %vm3354, %v3356, %v3352
    %v3358 = vmul.f32 1.0, %v3357
    %v3359 = vrcp.pop %v3342
    %v3360 = vmul.f32 %v3342, %v3359
    %v3361 = vsub.f32 1.0, %v3360
    %v3362 = vmul.f32 %v3359, %v3361
    %v3363 = vadd.f32 %v3359, %v3362
    %vm3364 = vweird.f32 %v3342
    %vm3365 = vweird.f32 %v3359
    %vm3366 = vmor %vm3364, %vm3365
    %v3367 = vsel %vm3366, %v3359, %v3363
    %v3368 = vand.u32 2147483647, %v3342
    %vm3369 = vcmp.eq.f32.partialorder %v3368, 8.507059e+37
    %v3370 = vand.u32 %v3342, 2147483648
    %v3371 = vor.u32 1.1754944e-38, %v3370
    %v3372 = vsel %vm3369, %v3371, %v3367
    %v3373 = vmul.f32 1.0, %v3372
    %v3374 = vrcp.pop %v3343
    %v3375 = vmul.f32 %v3343, %v3374
    %v3376 = vsub.f32 1.0, %v3375
    %v3377 = vmul.f32 %v3374, %v3376
    %v3378 = vadd.f32 %v3374, %v3377
    %vm3379 = vweird.f32 %v3343
    %vm3380 = vweird.f32 %v3374
    %vm3381 = vmor %vm3379, %vm3380
    %v3382 = vsel %vm3381, %v3374, %v3378
    %v3383 = vand.u32 2147483647, %v3343
    %vm3384 = vcmp.eq.f32.partialorder %v3383, 8.507059e+37
    %v3385 = vand.u32 %v3343, 2147483648
    %v3386 = vor.u32 1.1754944e-38, %v3385
    %v3387 = vsel %vm3384, %v3386, %v3382
    %v3388 = vmul.f32 1.0, %v3387
    %v3389 = vtanh.pop %v3331
    %v3390 = vmul.f32 %v3373, %v3241
    %v3391 = vmul.f32 %v3358, %v3389
    %v3392 = vadd.f32 %v3390, %v3391
    %v3393 = vtanh.pop %v3392
    %v3394 = vmul.f32 %v3388, %v3393
    %v3395 = vld [vmem:[%s1709] sm:$0xff]
    %v3396 = vld [vmem:[%s1709 + $0x8] sm:$0xff]
    %v3397 = vld [vmem:[%s1709 + $0x10] sm:$0xff]
    %v3398 = vld [vmem:[%s1709 + $0x18] sm:$0xff]
    %3399 = vmatpush.msra.mxu0 %v2489
    %3400 = vmatpush.msra.mxu0 %v2485
    %3401 = vmatpush.msra.mxu0 %v2481
    %3402 = vmatpush.msra.mxu0 %v2477
    %3403 = vmatpush.msra.mxu0 %v2473
    %3404 = vmatpush.msra.mxu0 %v2469
    %3405 = vmatpush.msra.mxu0 %v2465
    %3406 = vmatpush.msra.mxu0 %v2461
    %3407 = vmatpush.msra.mxu0 %v2457
    %3408 = vmatpush.msra.mxu0 %v2453
    %3409 = vmatpush.msra.mxu0 %v2449
    %3410 = vmatpush.msra.mxu0 %v2445
    %3411 = vmatpush.msra.mxu0 %v2441
    %3412 = vmatpush.msra.mxu0 %v2437
    %3413 = vmatpush.msra.mxu0 %v2433
    %3414 = vmatpush.msra.mxu0 %v2429
    %3415 = vmatmul.f32.gmra.mxu0 %v3394
    %v3416 = vpop.f32.mrf.mxu0
    %v3417 = vadd.f32 0.0, %v3416
    %3418 = vdwg.mxu0
    %3419 = vmatpush.msra.mxu0 %v2490
    %3420 = vmatpush.msra.mxu0 %v2486
    %3421 = vmatpush.msra.mxu0 %v2482
    %3422 = vmatpush.msra.mxu0 %v2478
    %3423 = vmatpush.msra.mxu0 %v2474
    %3424 = vmatpush.msra.mxu0 %v2470
    %3425 = vmatpush.msra.mxu0 %v2466
    %3426 = vmatpush.msra.mxu0 %v2462
    %3427 = vmatpush.msra.mxu0 %v2458
    %3428 = vmatpush.msra.mxu0 %v2454
    %3429 = vmatpush.msra.mxu0 %v2450
    %3430 = vmatpush.msra.mxu0 %v2446
    %3431 = vmatpush.msra.mxu0 %v2442
    %3432 = vmatpush.msra.mxu0 %v2438
    %3433 = vmatpush.msra.mxu0 %v2434
    %3434 = vmatpush.msra.mxu0 %v2430
    %3435 = vmatmul.f32.gmra.mxu0 %v3394
    %v3436 = vpop.f32.mrf.mxu0
    %v3437 = vadd.f32 0.0, %v3436
    %3438 = vdwg.mxu0
    %3439 = vmatpush.msra.mxu0 %v2491
    %3440 = vmatpush.msra.mxu0 %v2487
    %3441 = vmatpush.msra.mxu0 %v2483
    %3442 = vmatpush.msra.mxu0 %v2479
    %3443 = vmatpush.msra.mxu0 %v2475
    %3444 = vmatpush.msra.mxu0 %v2471
    %3445 = vmatpush.msra.mxu0 %v2467
    %3446 = vmatpush.msra.mxu0 %v2463
    %3447 = vmatpush.msra.mxu0 %v2459
    %3448 = vmatpush.msra.mxu0 %v2455
    %3449 = vmatpush.msra.mxu0 %v2451
    %3450 = vmatpush.msra.mxu0 %v2447
    %3451 = vmatpush.msra.mxu0 %v2443
    %3452 = vmatpush.msra.mxu0 %v2439
    %3453 = vmatpush.msra.mxu0 %v2435
    %3454 = vmatpush.msra.mxu0 %v2431
    %3455 = vmatmul.f32.gmra.mxu0 %v3394
    %v3456 = vpop.f32.mrf.mxu0
    %v3457 = vadd.f32 0.0, %v3456
    %3458 = vdwg.mxu0
    %3459 = vmatpush.msra.mxu0 %v2492
    %3460 = vmatpush.msra.mxu0 %v2488
    %3461 = vmatpush.msra.mxu0 %v2484
    %3462 = vmatpush.msra.mxu0 %v2480
    %3463 = vmatpush.msra.mxu0 %v2476
    %3464 = vmatpush.msra.mxu0 %v2472
    %3465 = vmatpush.msra.mxu0 %v2468
    %3466 = vmatpush.msra.mxu0 %v2464
    %3467 = vmatpush.msra.mxu0 %v2460
    %3468 = vmatpush.msra.mxu0 %v2456
    %3469 = vmatpush.msra.mxu0 %v2452
    %3470 = vmatpush.msra.mxu0 %v2448
    %3471 = vmatpush.msra.mxu0 %v2444
    %3472 = vmatpush.msra.mxu0 %v2440
    %3473 = vmatpush.msra.mxu0 %v2436
    %3474 = vmatpush.msra.mxu0 %v2432
    %3475 = vmatmul.f32.gmra.mxu0 %v3394
    %v3476 = vpop.f32.mrf.mxu0
    %v3477 = vadd.f32 0.0, %v3476
    %3478 = vdwg.mxu0
    %v3479 = vadd.f32 %v3395, %v3417
    %v3480 = vadd.f32 %v3396, %v3437
    %v3481 = vadd.f32 %v3397, %v3457
    %v3482 = vadd.f32 %v3398, %v3477
    %v3483 = vxor.u32 %v3479, 2147483648
    %v3484 = vxor.u32 %v3480, 2147483648
    %v3485 = vxor.u32 %v3481, 2147483648
    %v3486 = vmul.f32 %v3483, 1.442695
    %v3487 = vpow.pop %v3486
    %v3488 = vmul.f32 %v3484, 1.442695
    %v3489 = vpow.pop %v3488
    %v3490 = vmul.f32 %v3485, 1.442695
    %v3491 = vpow.pop %v3490
    %v3492 = vadd.f32 %v3487, 1.0
    %v3493 = vadd.f32 %v3489, 1.0
    %v3494 = vadd.f32 %v3491, 1.0
    %v3495 = vrcp.pop %v3492
    %v3496 = vmul.f32 %v3492, %v3495
    %v3497 = vsub.f32 1.0, %v3496
    %v3498 = vmul.f32 %v3495, %v3497
    %v3499 = vadd.f32 %v3495, %v3498
    %vm3500 = vweird.f32 %v3492
    %vm3501 = vweird.f32 %v3495
    %vm3502 = vmor %vm3500, %vm3501
    %v3503 = vsel %vm3502, %v3495, %v3499
    %v3504 = vand.u32 2147483647, %v3492
    %vm3505 = vcmp.eq.f32.partialorder %v3504, 8.507059e+37
    %v3506 = vand.u32 %v3492, 2147483648
    %v3507 = vor.u32 1.1754944e-38, %v3506
    %v3508 = vsel %vm3505, %v3507, %v3503
    %v3509 = vmul.f32 1.0, %v3508
    %v3510 = vrcp.pop %v3493
    %v3511 = vmul.f32 %v3493, %v3510
    %v3512 = vsub.f32 1.0, %v3511
    %v3513 = vmul.f32 %v3510, %v3512
    %v3514 = vadd.f32 %v3510, %v3513
    %vm3515 = vweird.f32 %v3493
    %vm3516 = vweird.f32 %v3510
    %vm3517 = vmor %vm3515, %vm3516
    %v3518 = vsel %vm3517, %v3510, %v3514
    %v3519 = vand.u32 2147483647, %v3493
    %vm3520 = vcmp.eq.f32.partialorder %v3519, 8.507059e+37
    %v3521 = vand.u32 %v3493, 2147483648
    %v3522 = vor.u32 1.1754944e-38, %v3521
    %v3523 = vsel %vm3520, %v3522, %v3518
    %v3524 = vmul.f32 1.0, %v3523
    %v3525 = vrcp.pop %v3494
    %v3526 = vmul.f32 %v3494, %v3525
    %v3527 = vsub.f32 1.0, %v3526
    %v3528 = vmul.f32 %v3525, %v3527
    %v3529 = vadd.f32 %v3525, %v3528
    %vm3530 = vweird.f32 %v3494
    %vm3531 = vweird.f32 %v3525
    %vm3532 = vmor %vm3530, %vm3531
    %v3533 = vsel %vm3532, %v3525, %v3529
    %v3534 = vand.u32 2147483647, %v3494
    %vm3535 = vcmp.eq.f32.partialorder %v3534, 8.507059e+37
    %v3536 = vand.u32 %v3494, 2147483648
    %v3537 = vor.u32 1.1754944e-38, %v3536
    %v3538 = vsel %vm3535, %v3537, %v3533
    %v3539 = vmul.f32 1.0, %v3538
    %v3540 = vtanh.pop %v3482
    %v3541 = vmul.f32 %v3524, %v3392
    %v3542 = vmul.f32 %v3509, %v3540
    %v3543 = vadd.f32 %v3541, %v3542
    %v3544 = vtanh.pop %v3543
    %v3545 = vmul.f32 %v3539, %v3544
    %v3546 = vld [vmem:[%s1929] sm:$0xff]
    %v3547 = vld [vmem:[%s1929 + $0x8] sm:$0xff]
    %v3548 = vld [vmem:[%s1929 + $0x10] sm:$0xff]
    %v3549 = vld [vmem:[%s1929 + $0x18] sm:$0xff]
    %3550 = vmatpush.msra.mxu0 %v2489
    %3551 = vmatpush.msra.mxu0 %v2485
    %3552 = vmatpush.msra.mxu0 %v2481
    %3553 = vmatpush.msra.mxu0 %v2477
    %3554 = vmatpush.msra.mxu0 %v2473
    %3555 = vmatpush.msra.mxu0 %v2469
    %3556 = vmatpush.msra.mxu0 %v2465
    %3557 = vmatpush.msra.mxu0 %v2461
    %3558 = vmatpush.msra.mxu0 %v2457
    %3559 = vmatpush.msra.mxu0 %v2453
    %3560 = vmatpush.msra.mxu0 %v2449
    %3561 = vmatpush.msra.mxu0 %v2445
    %3562 = vmatpush.msra.mxu0 %v2441
    %3563 = vmatpush.msra.mxu0 %v2437
    %3564 = vmatpush.msra.mxu0 %v2433
    %3565 = vmatpush.msra.mxu0 %v2429
    %3566 = vmatmul.f32.gmra.mxu0 %v3545
    %v3567 = vpop.f32.mrf.mxu0
    %v3568 = vadd.f32 0.0, %v3567
    %3569 = vdwg.mxu0
    %3570 = vmatpush.msra.mxu0 %v2490
    %3571 = vmatpush.msra.mxu0 %v2486
    %3572 = vmatpush.msra.mxu0 %v2482
    %3573 = vmatpush.msra.mxu0 %v2478
    %3574 = vmatpush.msra.mxu0 %v2474
    %3575 = vmatpush.msra.mxu0 %v2470
    %3576 = vmatpush.msra.mxu0 %v2466
    %3577 = vmatpush.msra.mxu0 %v2462
    %3578 = vmatpush.msra.mxu0 %v2458
    %3579 = vmatpush.msra.mxu0 %v2454
    %3580 = vmatpush.msra.mxu0 %v2450
    %3581 = vmatpush.msra.mxu0 %v2446
    %3582 = vmatpush.msra.mxu0 %v2442
    %3583 = vmatpush.msra.mxu0 %v2438
    %3584 = vmatpush.msra.mxu0 %v2434
    %3585 = vmatpush.msra.mxu0 %v2430
    %3586 = vmatmul.f32.gmra.mxu0 %v3545
    %v3587 = vpop.f32.mrf.mxu0
    %v3588 = vadd.f32 0.0, %v3587
    %3589 = vdwg.mxu0
    %3590 = vmatpush.msra.mxu0 %v2491
    %3591 = vmatpush.msra.mxu0 %v2487
    %3592 = vmatpush.msra.mxu0 %v2483
    %3593 = vmatpush.msra.mxu0 %v2479
    %3594 = vmatpush.msra.mxu0 %v2475
    %3595 = vmatpush.msra.mxu0 %v2471
    %3596 = vmatpush.msra.mxu0 %v2467
    %3597 = vmatpush.msra.mxu0 %v2463
    %3598 = vmatpush.msra.mxu0 %v2459
    %3599 = vmatpush.msra.mxu0 %v2455
    %3600 = vmatpush.msra.mxu0 %v2451
    %3601 = vmatpush.msra.mxu0 %v2447
    %3602 = vmatpush.msra.mxu0 %v2443
    %3603 = vmatpush.msra.mxu0 %v2439
    %3604 = vmatpush.msra.mxu0 %v2435
    %3605 = vmatpush.msra.mxu0 %v2431
    %3606 = vmatmul.f32.gmra.mxu0 %v3545
    %v3607 = vpop.f32.mrf.mxu0
    %v3608 = vadd.f32 0.0, %v3607
    %3609 = vdwg.mxu0
    %3610 = vmatpush.msra.mxu0 %v2492
    %3611 = vmatpush.msra.mxu0 %v2488
    %3612 = vmatpush.msra.mxu0 %v2484
    %3613 = vmatpush.msra.mxu0 %v2480
    %3614 = vmatpush.msra.mxu0 %v2476
    %3615 = vmatpush.msra.mxu0 %v2472
    %3616 = vmatpush.msra.mxu0 %v2468
    %3617 = vmatpush.msra.mxu0 %v2464
    %3618 = vmatpush.msra.mxu0 %v2460
    %3619 = vmatpush.msra.mxu0 %v2456
    %3620 = vmatpush.msra.mxu0 %v2452
    %3621 = vmatpush.msra.mxu0 %v2448
    %3622 = vmatpush.msra.mxu0 %v2444
    %3623 = vmatpush.msra.mxu0 %v2440
    %3624 = vmatpush.msra.mxu0 %v2436
    %3625 = vmatpush.msra.mxu0 %v2432
    %3626 = vmatmul.f32.gmra.mxu0 %v3545
    %v3627 = vpop.f32.mrf.mxu0
    %v3628 = vadd.f32 0.0, %v3627
    %3629 = vdwg.mxu0
    %v3630 = vadd.f32 %v3546, %v3568
    %v3631 = vadd.f32 %v3547, %v3588
    %v3632 = vadd.f32 %v3548, %v3608
    %v3633 = vadd.f32 %v3549, %v3628
    %v3634 = vxor.u32 %v3630, 2147483648
    %v3635 = vxor.u32 %v3631, 2147483648
    %v3636 = vxor.u32 %v3632, 2147483648
    %v3637 = vmul.f32 %v3634, 1.442695
    %v3638 = vpow.pop %v3637
    %v3639 = vmul.f32 %v3635, 1.442695
    %v3640 = vpow.pop %v3639
    %v3641 = vmul.f32 %v3636, 1.442695
    %v3642 = vpow.pop %v3641
    %v3643 = vadd.f32 %v3638, 1.0
    %v3644 = vadd.f32 %v3640, 1.0
    %v3645 = vadd.f32 %v3642, 1.0
    %v3646 = vrcp.pop %v3643
    %v3647 = vmul.f32 %v3643, %v3646
    %v3648 = vsub.f32 1.0, %v3647
    %v3649 = vmul.f32 %v3646, %v3648
    %v3650 = vadd.f32 %v3646, %v3649
    %vm3651 = vweird.f32 %v3643
    %vm3652 = vweird.f32 %v3646
    %vm3653 = vmor %vm3651, %vm3652
    %v3654 = vsel %vm3653, %v3646, %v3650
    %v3655 = vand.u32 2147483647, %v3643
    %vm3656 = vcmp.eq.f32.partialorder %v3655, 8.507059e+37
    %v3657 = vand.u32 %v3643, 2147483648
    %v3658 = vor.u32 1.1754944e-38, %v3657
    %v3659 = vsel %vm3656, %v3658, %v3654
    %v3660 = vmul.f32 1.0, %v3659
    %v3661 = vrcp.pop %v3644
    %v3662 = vmul.f32 %v3644, %v3661
    %v3663 = vsub.f32 1.0, %v3662
    %v3664 = vmul.f32 %v3661, %v3663
    %v3665 = vadd.f32 %v3661, %v3664
    %vm3666 = vweird.f32 %v3644
    %vm3667 = vweird.f32 %v3661
    %vm3668 = vmor %vm3666, %vm3667
    %v3669 = vsel %vm3668, %v3661, %v3665
    %v3670 = vand.u32 2147483647, %v3644
    %vm3671 = vcmp.eq.f32.partialorder %v3670, 8.507059e+37
    %v3672 = vand.u32 %v3644, 2147483648
    %v3673 = vor.u32 1.1754944e-38, %v3672
    %v3674 = vsel %vm3671, %v3673, %v3669
    %v3675 = vmul.f32 1.0, %v3674
    %v3676 = vrcp.pop %v3645
    %v3677 = vmul.f32 %v3645, %v3676
    %v3678 = vsub.f32 1.0, %v3677
    %v3679 = vmul.f32 %v3676, %v3678
    %v3680 = vadd.f32 %v3676, %v3679
    %vm3681 = vweird.f32 %v3645
    %vm3682 = vweird.f32 %v3676
    %vm3683 = vmor %vm3681, %vm3682
    %v3684 = vsel %vm3683, %v3676, %v3680
    %v3685 = vand.u32 2147483647, %v3645
    %vm3686 = vcmp.eq.f32.partialorder %v3685, 8.507059e+37
    %v3687 = vand.u32 %v3645, 2147483648
    %v3688 = vor.u32 1.1754944e-38, %v3687
    %v3689 = vsel %vm3686, %v3688, %v3684
    %v3690 = vmul.f32 1.0, %v3689
    %v3691 = vtanh.pop %v3633
    %v3692 = vmul.f32 %v3675, %v3543
    %v3693 = vmul.f32 %v3660, %v3691
    %v3694 = vadd.f32 %v3692, %v3693
    %v3695 = vtanh.pop %v3694
    %v3696 = vmul.f32 %v3690, %v3695
    %v3697 = vld [vmem:[#allocation11] sm:$0xff]
    %v3698 = vld [vmem:[#allocation11 + $0x8] sm:$0xff]
    %v3699 = vld [vmem:[#allocation11 + $0x10] sm:$0xff]
    %v3700 = vld [vmem:[#allocation11 + $0x18] sm:$0xff]
    %v3701 = vld [vmem:[#allocation11 + $0x20] sm:$0xff]
    %v3702 = vld [vmem:[#allocation11 + $0x28] sm:$0xff]
    %v3703 = vld [vmem:[#allocation11 + $0x30] sm:$0xff]
    %v3704 = vld [vmem:[#allocation11 + $0x38] sm:$0xff]
    %v3705 = vld [vmem:[#allocation11 + $0x40] sm:$0xff]
    %v3706 = vld [vmem:[#allocation11 + $0x48] sm:$0xff]
    %v3707 = vld [vmem:[#allocation11 + $0x50] sm:$0xff]
    %v3708 = vld [vmem:[#allocation11 + $0x58] sm:$0xff]
    %v3709 = vld [vmem:[#allocation11 + $0x60] sm:$0xff]
    %v3710 = vld [vmem:[#allocation11 + $0x68] sm:$0xff]
    %v3711 = vld [vmem:[#allocation11 + $0x70] sm:$0xff]
    %v3712 = vld [vmem:[#allocation11 + $0x78] sm:$0xff]
    %v3713 = vld [vmem:[%s8] sm:$0x1]
    %v3715 = vperm.slane %v3713, 0
    %3717 = vmatpush.msra.mxu0 %v3712
    %3718 = vmatpush.msra.mxu0 %v3711
    %3719 = vmatpush.msra.mxu0 %v3710
    %3720 = vmatpush.msra.mxu0 %v3709
    %3721 = vmatpush.msra.mxu0 %v3708
    %3722 = vmatpush.msra.mxu0 %v3707
    %3723 = vmatpush.msra.mxu0 %v3706
    %3724 = vmatpush.msra.mxu0 %v3705
    %3725 = vmatpush.msra.mxu0 %v3704
    %3726 = vmatpush.msra.mxu0 %v3703
    %3727 = vmatpush.msra.mxu0 %v3702
    %3728 = vmatpush.msra.mxu0 %v3701
    %3729 = vmatpush.msra.mxu0 %v3700
    %3730 = vmatpush.msra.mxu0 %v3699
    %3731 = vmatpush.msra.mxu0 %v3698
    %3732 = vmatpush.msra.mxu0 %v3697
    %3733 = vmatmul.f32.gmra.mxu0 %v3696
    %v3734 = vpop.f32.mrf.mxu0
    %v3735 = vadd.f32 %v3715, %v3734
    %3736 = vdwg.mxu0
    %3737 = vst [vmem:[%s9] sm:$0xff] %v3735
    // Predicated region
    $region58: #{lstm_forward.1} parent=1 // pred_check
      _
    $region59: #{lstm_forward.1} parent=1 // pred_check_branch
      %3739 = sbr.rel (0) target = $region61
    $region60: #{lstm_forward.1} parent=1 // pred_region
      _
    $region61: #{lstm_forward.1} parent=1 // pred_fallthru
      _
    // Predicated region
    $region62: #{lstm_forward.1} parent=1 // pred_check
      _
    $region63: #{lstm_forward.1} parent=1 // pred_check_branch
      %3741 = sbr.rel (0) target = $region65
    $region64: #{lstm_forward.1} parent=1 // pred_region
      _
    $region65: #{lstm_forward.1} parent=1 // pred_fallthru
      _
    %3742 = vsyncpa [#allocation5], 1
    %3743 = vsyncpa [#allocation7], 1
    %3744 = vsyncpa [#allocation10], 1

</llo_original>
